<compile_context>
chip_gen: v5e
topology: v5e:2x2
jax: 0.10.0
libtpu: 0.0.40
codegen_flags: <defaults>
</compile_context>

<pallas_src>
import functools

import jax
import jax.numpy as jnp
from jax import lax
from jax.experimental import pallas as pl
from jax.experimental.pallas import tpu as pltpu


# ----------------------------- Pallas kernel ------------------------------- #
def _prelu_conv_kernel(alpha_ref, x_ref, w_ref, b_ref, o_ref, xa_ref, acc_ref, *,
                       kh, kw, stride, tr, ow, dot_dtype):
    """One grid step: a (tr, ow, OCp) tile of Conv2d(PReLU(x)) for the current sample.

    alpha_ref: SMEM (1,) f32          -- PReLU slope (single-parameter PReLU)
    x_ref:     VMEM (Hp, Wp, C)       -- zero-padded NHWC image of the current sample
    w_ref:     VMEM (KH*KW, C, OCp)   -- weight-normalized conv weight, OC padded to 128
    b_ref:     VMEM (1, OCp)          -- conv bias (OC padded)
    o_ref:     VMEM (tr, ow, OCp)     -- output tile (lane-dense last dim)
    xa_ref:    VMEM (rg, Wp, C)       -- scratch: PReLU'd input-row region for this tile
    acc_ref:   VMEM (tr*ow, OCp) f32  -- scratch accumulator
    """
    alpha = alpha_ref[0]
    r = pl.program_id(1)
    row0 = pl.multiple_of(r * (tr * stride), tr * stride)
    m = tr * ow
    ocp = acc_ref.shape[-1]
    rg = xa_ref.shape[0]            # = (tr - 1) * stride + kh input rows for this tile

    # PReLU once over the input-row region this tile reads (VPU, f32), stored in the
    # matmul dtype.  PReLU(0) == 0, so the zero-padding border stays exact.
    xv = x_ref[pl.ds(row0, rg), :, :].astype(jnp.float32)
    xa_ref[...] = jnp.where(xv >= 0, xv, alpha * xv).astype(dot_dtype)

    # Initialize the accumulator with the bias (broadcast over output positions).
    acc_ref[...] = jnp.broadcast_to(b_ref[...], (m, ocp))

    # KH*KW shifted slabs of the activated region; each contributes one MXU matmul
    # with f32 accumulation.  Slice starts are static -> cheap VMEM views.
    for i in range(kh):
        for j in range(kw):
            if stride == 1:
                slab = xa_ref[pl.ds(i, tr), pl.ds(j, ow), :]
            else:
                slab = xa_ref[pl.ds(i, tr, stride), pl.ds(j, ow, stride), :]
            slab = slab.reshape(m, slab.shape[-1])
            acc_ref[...] += jnp.dot(slab, w_ref[i * kw + j],
                                    preferred_element_type=jnp.float32)   # MXU

    o_ref[...] = acc_ref[...].reshape(o_ref.shape).astype(o_ref.dtype)


# ------------------------------- wrapper ------------------------------------ #
def _choose_row_tile(oh, ow, max_positions=2048):
    """Largest divisor of `oh` keeping the M tile (tr*ow output positions) <= target."""
    best = 1
    for tr in range(1, oh + 1):
        if oh % tr == 0 and tr * ow <= max(max_positions, ow):
            best = tr
    return best


@functools.partial(jax.jit, static_argnames=("stride", "padding", "dot_dtype"))
def basic_conv2d(x_nchw, conv_v, conv_g, conv_b, prelu_alpha, *,
                 stride, padding, dot_dtype=jnp.float32):
    """Forward of BasicConv2d: y = weight_norm(Conv2d)(PReLU(x)).

    x_nchw:      (N, C, H, W)      float32
    conv_v:      (OC, C, KH, KW)   weight_norm direction parameter v
    conv_g:      (OC,)             weight_norm magnitude parameter g
    conv_b:      (OC,)             conv bias
    prelu_alpha: (1,)              PReLU slope
    returns:     (N, OC, OH, OW)   float32
    """
    n, c, h, w_in = x_nchw.shape
    oc, _, kh, kw = conv_v.shape

    # weight_norm reparameterization (parameter setup, not the hot path):
    #   w = g * v / ||v||_2, norm per output channel over (C, KH, KW).
    v32 = conv_v.astype(jnp.float32)
    v_norm = jnp.sqrt(jnp.sum(v32 ** 2, axis=(1, 2, 3)))
    v_norm = jnp.maximum(v_norm, 1e-12)                    # guard all-zero filters
    wgt = v32 * (conv_g.astype(jnp.float32) / v_norm)[:, None, None, None]

    # Lane-dense output channels: pad OC up to a multiple of 128.
    ocp = ((oc + 127) // 128) * 128
    w_mat = jnp.transpose(wgt, (2, 3, 1, 0)).reshape(kh * kw, c, oc)   # (KH*KW, C, OC)
    w_mat = jnp.pad(w_mat, ((0, 0), (0, 0), (0, ocp - oc))).astype(dot_dtype)
    b_pad = jnp.pad(conv_b.astype(jnp.float32), (0, ocp - oc)).reshape(1, ocp)

    hp, wp = h + 2 * padding, w_in + 2 * padding
    oh = (h + 2 * padding - kh) // stride + 1
    ow = (w_in + 2 * padding - kw) // stride + 1

    # NCHW -> NHWC + spatial zero-padding (PReLU itself happens inside the kernel).
    in_dtype = jnp.bfloat16 if dot_dtype == jnp.bfloat16 else jnp.float32
    x_nhwc = jnp.transpose(x_nchw, (0, 2, 3, 1)).astype(in_dtype)
    xp = jnp.pad(x_nhwc, ((0, 0), (padding, padding), (padding, padding), (0, 0)))

    tr = _choose_row_tile(oh, ow)
    rg = (tr - 1) * stride + kh                           # input rows a tile touches
    grid = (n, oh // tr)

    kernel = functools.partial(_prelu_conv_kernel, kh=kh, kw=kw, stride=stride,
                               tr=tr, ow=ow, dot_dtype=dot_dtype)

    out = pl.pallas_call(
        kernel,
        out_shape=jax.ShapeDtypeStruct((n, oh, ow, ocp), jnp.float32),
        grid_spec=pltpu.PrefetchScalarGridSpec(
            num_scalar_prefetch=0,
            grid=grid,
            in_specs=[
                pl.BlockSpec(memory_space=pltpu.MemorySpace.SMEM),             # alpha
                # Whole padded image of the current sample; block index only depends
                # on the sample axis, so it stays in VMEM across the row-tile axis.
                pl.BlockSpec((None, hp, wp, c), lambda b, r: (b, 0, 0, 0)),
                # Grid-invariant weight / bias (index_map constant -> loaded once).
                pl.BlockSpec((kh * kw, c, ocp), lambda b, r: (0, 0, 0)),
                pl.BlockSpec((1, ocp), lambda b, r: (0, 0)),
            ],
            out_specs=pl.BlockSpec((None, tr, ow, ocp), lambda b, r: (b, r, 0, 0)),
            scratch_shapes=[
                pltpu.VMEM((rg, wp, c), dot_dtype),        # PReLU'd row region
                pltpu.VMEM((tr * ow, ocp), jnp.float32),   # f32 accumulator
            ],
        ),
        compiler_params=pltpu.CompilerParams(
            dimension_semantics=("parallel", "parallel"),
            vmem_limit_bytes=32 * 1024 * 1024,
        ),
    )(prelu_alpha.astype(jnp.float32), xp, w_mat, b_pad)

    out = out[..., :oc]                               # drop OC lane padding
    return jnp.transpose(out, (0, 3, 1, 2))           # NHWC -> NCHW


# ------------------------------- reference --------------------------------- #
def _reference(x_nchw, conv_v, conv_g, conv_b, prelu_alpha, *, stride, padding):
    v_norm = jnp.sqrt(jnp.sum(conv_v ** 2, axis=(1, 2, 3)))
    w = conv_v * (conv_g / v_norm)[:, None, None, None]
    a = prelu_alpha[0]
    xr = jnp.where(x_nchw >= 0, x_nchw, a * x_nchw)
    y = lax.conv_general_dilated(
        xr, w,
        window_strides=(stride, stride),
        padding=((padding, padding), (padding, padding)),
        dimension_numbers=("NCHW", "OIHW", "NCHW"),
    )
    return y + conv_b[None, :, None, None]


# --------------------------------- main ------------------------------------ #
if __name__ == "__main__":
    key = jax.random.PRNGKey(0)
    k1, k2, k3 = jax.random.split(key, 3)

    # Module hyperparameters (deterministic, synthetic init).
    in_planes, out_planes = 4, 8
    kernel_size, stride, padding = 3, 1, 1
    N, H, W = 2, 16, 16

    x = jax.random.normal(k1, (N, in_planes, H, W), dtype=jnp.float32)

    # Conv2d weight init (v), weight_norm magnitude g = ||v|| (PyTorch init), bias.
    conv_v = jax.random.normal(
        k2, (out_planes, in_planes, kernel_size, kernel_size), dtype=jnp.float32
    ) * 0.1
    conv_g = jnp.sqrt(jnp.sum(conv_v ** 2, axis=(1, 2, 3)))
    conv_b = jax.random.normal(k3, (out_planes,), dtype=jnp.float32) * 0.1
    prelu_alpha = jnp.array([0.25], dtype=jnp.float32)  # nn.PReLU() default

    y_ref = _reference(x, conv_v, conv_g, conv_b, prelu_alpha,
                       stride=stride, padding=padding)

    # f32 MXU path (default) — tight tolerance.
    y = basic_conv2d(x, conv_v, conv_g, conv_b, prelu_alpha,
                     stride=stride, padding=padding)
    y = jax.block_until_ready(y)
    assert y.shape == (N, out_planes, H, W), y.shape
    assert jnp.allclose(y, y_ref, atol=1e-4, rtol=1e-4), float(
        jnp.max(jnp.abs(y - y_ref))
    )

    # bf16 operand path (halves HBM traffic of the streamed activations; PReLU/bias
    # and accumulation stay f32) — bf16 rounding tolerance.
    y_bf = basic_conv2d(x, conv_v, conv_g, conv_b, prelu_alpha,
                        stride=stride, padding=padding, dot_dtype=jnp.bfloat16)
    y_bf = jax.block_until_ready(y_bf)
    assert jnp.allclose(y_bf, y_ref, atol=5e-2, rtol=5e-2), float(
        jnp.max(jnp.abs(y_bf - y_ref))
    )

    print("KERNEL_OK")
</pallas_src>

<mosaic_0001>
module attributes {stable_mosaic.version = 11 : i64} {
  func.func @_prelu_conv_kernel(%arg0: i32, %arg1: i32, %arg2: memref<1xf32, #tpu.memory_space<smem>>, %arg3: memref<1x18x18x4xf32, #tpu.memory_space<vmem>>, %arg4: memref<9x4x128xf32, #tpu.memory_space<vmem>>, %arg5: memref<1x128xf32, #tpu.memory_space<vmem>>, %arg6: memref<1x16x16x128xf32, #tpu.memory_space<vmem>>, %arg7: memref<18x18x4xf32, #tpu.memory_space<vmem>>, %arg8: memref<256x128xf32, #tpu.memory_space<vmem>>) attributes {dimension_semantics = [#tpu.dimension_semantics<parallel>, #tpu.dimension_semantics<parallel>], iteration_bounds = array<i64: 2, 1>, scalar_prefetch = 0 : i64, scratch_operands = 2 : i64, tpu.core_type = #tpu.core_type<tc>, window_params = [{transform_indices = @transform_0, window_bounds = array<i64: 1>}, {transform_indices = @transform_1, window_bounds = array<i64: 1, 18, 18, 4>}, {pipeline_mode = #tpu.pipeline_mode<synchronous>, transform_indices = @transform_2, window_bounds = array<i64: 9, 4, 128>}, {pipeline_mode = #tpu.pipeline_mode<synchronous>, transform_indices = @transform_3, window_bounds = array<i64: 1, 128>}, {transform_indices = @transform_4, window_bounds = array<i64: 1, 16, 16, 128>}]} {
    %c0 = arith.constant 0 : index
    %0 = memref.load %arg2[%c0] : memref<1xf32, #tpu.memory_space<smem>>
    %c16_i32 = arith.constant 16 : i32
    %1 = arith.muli %arg1, %c16_i32 : i32
    %2 = tpu.assume_multiple %1, 16 : i32
    %c0_0 = arith.constant 0 : index
    %3 = arith.index_cast %2 : i32 to index
    %c0_1 = arith.constant 0 : index
    %c0_2 = arith.constant 0 : index
    %4 = vector.load %arg3[%c0_0, %3, %c0_1, %c0_2] : memref<1x18x18x4xf32, #tpu.memory_space<vmem>>, vector<1x18x18x4xf32>
    %5 = vector.shape_cast %4 : vector<1x18x18x4xf32> to vector<18x18x4xf32>
    %cst = arith.constant 0.000000e+00 : f32
    %6 = vector.broadcast %cst : f32 to vector<18x18x4xf32>
    %7 = arith.cmpf oge, %5, %6 : vector<18x18x4xf32>
    %8 = vector.broadcast %0 : f32 to vector<18x18x4xf32>
    %9 = arith.mulf %8, %5 : vector<18x18x4xf32>
    %10 = arith.select %7, %5, %9 : vector<18x18x4xi1>, vector<18x18x4xf32>
    %c0_3 = arith.constant 0 : index
    %c0_4 = arith.constant 0 : index
    %c0_5 = arith.constant 0 : index
    %11 = vector.load %arg7[%c0_3, %c0_4, %c0_5] : memref<18x18x4xf32, #tpu.memory_space<vmem>>, vector<18x18x4xf32>
    tpu.vector_store %arg7[%c0_3, %c0_4, %c0_5], %10 {strides = array<i32>} : memref<18x18x4xf32, #tpu.memory_space<vmem>>, vector<18x18x4xf32>,
    %c0_6 = arith.constant 0 : index
    %c0_7 = arith.constant 0 : index
    %12 = vector.load %arg5[%c0_6, %c0_7] : memref<1x128xf32, #tpu.memory_space<vmem>>, vector<1x128xf32>
    %13 = vector.shape_cast %12 : vector<1x128xf32> to vector<1x128xf32>
    %14 = vector.broadcast %13 : vector<1x128xf32> to vector<256x128xf32>
    %c0_8 = arith.constant 0 : index
    %c0_9 = arith.constant 0 : index
    %15 = vector.load %arg8[%c0_8, %c0_9] : memref<256x128xf32, #tpu.memory_space<vmem>>, vector<256x128xf32>
    tpu.vector_store %arg8[%c0_8, %c0_9], %14 {strides = array<i32>} : memref<256x128xf32, #tpu.memory_space<vmem>>, vector<256x128xf32>,
    %c0_10 = arith.constant 0 : index
    %c0_11 = arith.constant 0 : index
    %c0_12 = arith.constant 0 : index
    %16 = vector.load %arg7[%c0_10, %c0_11, %c0_12] : memref<18x18x4xf32, #tpu.memory_space<vmem>>, vector<16x16x4xf32>
    %17 = vector.shape_cast %16 : vector<16x16x4xf32> to vector<256x4xf32>
    %c0_13 = arith.constant 0 : index
    %c0_14 = arith.constant 0 : index
    %18 = vector.load %arg8[%c0_13, %c0_14] : memref<256x128xf32, #tpu.memory_space<vmem>>, vector<256x128xf32>
    %c0_15 = arith.constant 0 : index
    %c0_16 = arith.constant 0 : index
    %c0_17 = arith.constant 0 : index
    %19 = vector.load %arg4[%c0_15, %c0_16, %c0_17] : memref<9x4x128xf32, #tpu.memory_space<vmem>>, vector<1x4x128xf32>
    %20 = vector.shape_cast %19 : vector<1x4x128xf32> to vector<4x128xf32>
    %cst_18 = arith.constant dense<0.000000e+00> : vector<256x128xf32>
    %21 = tpu.matmul %17, %20, %cst_18 {dimension_numbers = #tpu.dot_dimension_numbers<[1], [0], [0], [1], [0, 0, 1, 1], [], []>} : vector<256x4xf32>, vector<4x128xf32>, vector<256x128xf32> -> vector<256x128xf32>
    %22 = arith.addf %18, %21 : vector<256x128xf32>
    %c0_19 = arith.constant 0 : index
    %c0_20 = arith.constant 0 : index
    %23 = vector.load %arg8[%c0_19, %c0_20] : memref<256x128xf32, #tpu.memory_space<vmem>>, vector<256x128xf32>
    tpu.vector_store %arg8[%c0_19, %c0_20], %22 {strides = array<i32>} : memref<256x128xf32, #tpu.memory_space<vmem>>, vector<256x128xf32>,
    %c0_21 = arith.constant 0 : index
    %c1 = arith.constant 1 : index
    %c0_22 = arith.constant 0 : index
    %24 = vector.load %arg7[%c0_21, %c1, %c0_22] : memref<18x18x4xf32, #tpu.memory_space<vmem>>, vector<16x16x4xf32>
    %25 = vector.shape_cast %24 : vector<16x16x4xf32> to vector<256x4xf32>
    %c0_23 = arith.constant 0 : index
    %c0_24 = arith.constant 0 : index
    %26 = vector.load %arg8[%c0_23, %c0_24] : memref<256x128xf32, #tpu.memory_space<vmem>>, vector<256x128xf32>
    %c1_25 = arith.constant 1 : index
    %c0_26 = arith.constant 0 : index
    %c0_27 = arith.constant 0 : index
    %27 = vector.load %arg4[%c1_25, %c0_26, %c0_27] : memref<9x4x128xf32, #tpu.memory_space<vmem>>, vector<1x4x128xf32>
    %28 = vector.shape_cast %27 : vector<1x4x128xf32> to vector<4x128xf32>
    %cst_28 = arith.constant dense<0.000000e+00> : vector<256x128xf32>
    %29 = tpu.matmul %25, %28, %cst_28 {dimension_numbers = #tpu.dot_dimension_numbers<[1], [0], [0], [1], [0, 0, 1, 1], [], []>} : vector<256x4xf32>, vector<4x128xf32>, vector<256x128xf32> -> vector<256x128xf32>
    %30 = arith.addf %26, %29 : vector<256x128xf32>
    %c0_29 = arith.constant 0 : index
    %c0_30 = arith.constant 0 : index
    %31 = vector.load %arg8[%c0_29, %c0_30] : memref<256x128xf32, #tpu.memory_space<vmem>>, vector<256x128xf32>
    tpu.vector_store %arg8[%c0_29, %c0_30], %30 {strides = array<i32>} : memref<256x128xf32, #tpu.memory_space<vmem>>, vector<256x128xf32>,
    %c0_31 = arith.constant 0 : index
    %c2 = arith.constant 2 : index
    %c0_32 = arith.constant 0 : index
    %32 = vector.load %arg7[%c0_31, %c2, %c0_32] : memref<18x18x4xf32, #tpu.memory_space<vmem>>, vector<16x16x4xf32>
    %33 = vector.shape_cast %32 : vector<16x16x4xf32> to vector<256x4xf32>
    %c0_33 = arith.constant 0 : index
    %c0_34 = arith.constant 0 : index
    %34 = vector.load %arg8[%c0_33, %c0_34] : memref<256x128xf32, #tpu.memory_space<vmem>>, vector<256x128xf32>
    %c2_35 = arith.constant 2 : index
    %c0_36 = arith.constant 0 : index
    %c0_37 = arith.constant 0 : index
    %35 = vector.load %arg4[%c2_35, %c0_36, %c0_37] : memref<9x4x128xf32, #tpu.memory_space<vmem>>, vector<1x4x128xf32>
    %36 = vector.shape_cast %35 : vector<1x4x128xf32> to vector<4x128xf32>
    %cst_38 = arith.constant dense<0.000000e+00> : vector<256x128xf32>
    %37 = tpu.matmul %33, %36, %cst_38 {dimension_numbers = #tpu.dot_dimension_numbers<[1], [0], [0], [1], [0, 0, 1, 1], [], []>} : vector<256x4xf32>, vector<4x128xf32>, vector<256x128xf32> -> vector<256x128xf32>
    %38 = arith.addf %34, %37 : vector<256x128xf32>
    %c0_39 = arith.constant 0 : index
    %c0_40 = arith.constant 0 : index
    %39 = vector.load %arg8[%c0_39, %c0_40] : memref<256x128xf32, #tpu.memory_space<vmem>>, vector<256x128xf32>
    tpu.vector_store %arg8[%c0_39, %c0_40], %38 {strides = array<i32>} : memref<256x128xf32, #tpu.memory_space<vmem>>, vector<256x128xf32>,
    %c1_41 = arith.constant 1 : index
    %c0_42 = arith.constant 0 : index
    %c0_43 = arith.constant 0 : index
    %40 = vector.load %arg7[%c1_41, %c0_42, %c0_43] : memref<18x18x4xf32, #tpu.memory_space<vmem>>, vector<16x16x4xf32>
    %41 = vector.shape_cast %40 : vector<16x16x4xf32> to vector<256x4xf32>
    %c0_44 = arith.constant 0 : index
    %c0_45 = arith.constant 0 : index
    %42 = vector.load %arg8[%c0_44, %c0_45] : memref<256x128xf32, #tpu.memory_space<vmem>>, vector<256x128xf32>
    %c3 = arith.constant 3 : index
    %c0_46 = arith.constant 0 : index
    %c0_47 = arith.constant 0 : index
    %43 = vector.load %arg4[%c3, %c0_46, %c0_47] : memref<9x4x128xf32, #tpu.memory_space<vmem>>, vector<1x4x128xf32>
    %44 = vector.shape_cast %43 : vector<1x4x128xf32> to vector<4x128xf32>
    %cst_48 = arith.constant dense<0.000000e+00> : vector<256x128xf32>
    %45 = tpu.matmul %41, %44, %cst_48 {dimension_numbers = #tpu.dot_dimension_numbers<[1], [0], [0], [1], [0, 0, 1, 1], [], []>} : vector<256x4xf32>, vector<4x128xf32>, vector<256x128xf32> -> vector<256x128xf32>
    %46 = arith.addf %42, %45 : vector<256x128xf32>
    %c0_49 = arith.constant 0 : index
    %c0_50 = arith.constant 0 : index
    %47 = vector.load %arg8[%c0_49, %c0_50] : memref<256x128xf32, #tpu.memory_space<vmem>>, vector<256x128xf32>
    tpu.vector_store %arg8[%c0_49, %c0_50], %46 {strides = array<i32>} : memref<256x128xf32, #tpu.memory_space<vmem>>, vector<256x128xf32>,
    %c1_51 = arith.constant 1 : index
    %c1_52 = arith.constant 1 : index
    %c0_53 = arith.constant 0 : index
    %48 = vector.load %arg7[%c1_51, %c1_52, %c0_53] : memref<18x18x4xf32, #tpu.memory_space<vmem>>, vector<16x16x4xf32>
    %49 = vector.shape_cast %48 : vector<16x16x4xf32> to vector<256x4xf32>
    %c0_54 = arith.constant 0 : index
    %c0_55 = arith.constant 0 : index
    %50 = vector.load %arg8[%c0_54, %c0_55] : memref<256x128xf32, #tpu.memory_space<vmem>>, vector<256x128xf32>
    %c4 = arith.constant 4 : index
    %c0_56 = arith.constant 0 : index
    %c0_57 = arith.constant 0 : index
    %51 = vector.load %arg4[%c4, %c0_56, %c0_57] : memref<9x4x128xf32, #tpu.memory_space<vmem>>, vector<1x4x128xf32>
    %52 = vector.shape_cast %51 : vector<1x4x128xf32> to vector<4x128xf32>
    %cst_58 = arith.constant dense<0.000000e+00> : vector<256x128xf32>
    %53 = tpu.matmul %49, %52, %cst_58 {dimension_numbers = #tpu.dot_dimension_numbers<[1], [0], [0], [1], [0, 0, 1, 1], [], []>} : vector<256x4xf32>, vector<4x128xf32>, vector<256x128xf32> -> vector<256x128xf32>
    %54 = arith.addf %50, %53 : vector<256x128xf32>
    %c0_59 = arith.constant 0 : index
    %c0_60 = arith.constant 0 : index
    %55 = vector.load %arg8[%c0_59, %c0_60] : memref<256x128xf32, #tpu.memory_space<vmem>>, vector<256x128xf32>
    tpu.vector_store %arg8[%c0_59, %c0_60], %54 {strides = array<i32>} : memref<256x128xf32, #tpu.memory_space<vmem>>, vector<256x128xf32>,
    %c1_61 = arith.constant 1 : index
    %c2_62 = arith.constant 2 : index
    %c0_63 = arith.constant 0 : index
    %56 = vector.load %arg7[%c1_61, %c2_62, %c0_63] : memref<18x18x4xf32, #tpu.memory_space<vmem>>, vector<16x16x4xf32>
    %57 = vector.shape_cast %56 : vector<16x16x4xf32> to vector<256x4xf32>
    %c0_64 = arith.constant 0 : index
    %c0_65 = arith.constant 0 : index
    %58 = vector.load %arg8[%c0_64, %c0_65] : memref<256x128xf32, #tpu.memory_space<vmem>>, vector<256x128xf32>
    %c5 = arith.constant 5 : index
    %c0_66 = arith.constant 0 : index
    %c0_67 = arith.constant 0 : index
    %59 = vector.load %arg4[%c5, %c0_66, %c0_67] : memref<9x4x128xf32, #tpu.memory_space<vmem>>, vector<1x4x128xf32>
    %60 = vector.shape_cast %59 : vector<1x4x128xf32> to vector<4x128xf32>
    %cst_68 = arith.constant dense<0.000000e+00> : vector<256x128xf32>
    %61 = tpu.matmul %57, %60, %cst_68 {dimension_numbers = #tpu.dot_dimension_numbers<[1], [0], [0], [1], [0, 0, 1, 1], [], []>} : vector<256x4xf32>, vector<4x128xf32>, vector<256x128xf32> -> vector<256x128xf32>
    %62 = arith.addf %58, %61 : vector<256x128xf32>
    %c0_69 = arith.constant 0 : index
    %c0_70 = arith.constant 0 : index
    %63 = vector.load %arg8[%c0_69, %c0_70] : memref<256x128xf32, #tpu.memory_space<vmem>>, vector<256x128xf32>
    tpu.vector_store %arg8[%c0_69, %c0_70], %62 {strides = array<i32>} : memref<256x128xf32, #tpu.memory_space<vmem>>, vector<256x128xf32>,
    %c2_71 = arith.constant 2 : index
    %c0_72 = arith.constant 0 : index
    %c0_73 = arith.constant 0 : index
    %64 = vector.load %arg7[%c2_71, %c0_72, %c0_73] : memref<18x18x4xf32, #tpu.memory_space<vmem>>, vector<16x16x4xf32>
    %65 = vector.shape_cast %64 : vector<16x16x4xf32> to vector<256x4xf32>
    %c0_74 = arith.constant 0 : index
    %c0_75 = arith.constant 0 : index
    %66 = vector.load %arg8[%c0_74, %c0_75] : memref<256x128xf32, #tpu.memory_space<vmem>>, vector<256x128xf32>
    %c6 = arith.constant 6 : index
    %c0_76 = arith.constant 0 : index
    %c0_77 = arith.constant 0 : index
    %67 = vector.load %arg4[%c6, %c0_76, %c0_77] : memref<9x4x128xf32, #tpu.memory_space<vmem>>, vector<1x4x128xf32>
    %68 = vector.shape_cast %67 : vector<1x4x128xf32> to vector<4x128xf32>
    %cst_78 = arith.constant dense<0.000000e+00> : vector<256x128xf32>
    %69 = tpu.matmul %65, %68, %cst_78 {dimension_numbers = #tpu.dot_dimension_numbers<[1], [0], [0], [1], [0, 0, 1, 1], [], []>} : vector<256x4xf32>, vector<4x128xf32>, vector<256x128xf32> -> vector<256x128xf32>
    %70 = arith.addf %66, %69 : vector<256x128xf32>
    %c0_79 = arith.constant 0 : index
    %c0_80 = arith.constant 0 : index
    %71 = vector.load %arg8[%c0_79, %c0_80] : memref<256x128xf32, #tpu.memory_space<vmem>>, vector<256x128xf32>
    tpu.vector_store %arg8[%c0_79, %c0_80], %70 {strides = array<i32>} : memref<256x128xf32, #tpu.memory_space<vmem>>, vector<256x128xf32>,
    %c2_81 = arith.constant 2 : index
    %c1_82 = arith.constant 1 : index
    %c0_83 = arith.constant 0 : index
    %72 = vector.load %arg7[%c2_81, %c1_82, %c0_83] : memref<18x18x4xf32, #tpu.memory_space<vmem>>, vector<16x16x4xf32>
    %73 = vector.shape_cast %72 : vector<16x16x4xf32> to vector<256x4xf32>
    %c0_84 = arith.constant 0 : index
    %c0_85 = arith.constant 0 : index
    %74 = vector.load %arg8[%c0_84, %c0_85] : memref<256x128xf32, #tpu.memory_space<vmem>>, vector<256x128xf32>
    %c7 = arith.constant 7 : index
    %c0_86 = arith.constant 0 : index
    %c0_87 = arith.constant 0 : index
    %75 = vector.load %arg4[%c7, %c0_86, %c0_87] : memref<9x4x128xf32, #tpu.memory_space<vmem>>, vector<1x4x128xf32>
    %76 = vector.shape_cast %75 : vector<1x4x128xf32> to vector<4x128xf32>
    %cst_88 = arith.constant dense<0.000000e+00> : vector<256x128xf32>
    %77 = tpu.matmul %73, %76, %cst_88 {dimension_numbers = #tpu.dot_dimension_numbers<[1], [0], [0], [1], [0, 0, 1, 1], [], []>} : vector<256x4xf32>, vector<4x128xf32>, vector<256x128xf32> -> vector<256x128xf32>
    %78 = arith.addf %74, %77 : vector<256x128xf32>
    %c0_89 = arith.constant 0 : index
    %c0_90 = arith.constant 0 : index
    %79 = vector.load %arg8[%c0_89, %c0_90] : memref<256x128xf32, #tpu.memory_space<vmem>>, vector<256x128xf32>
    tpu.vector_store %arg8[%c0_89, %c0_90], %78 {strides = array<i32>} : memref<256x128xf32, #tpu.memory_space<vmem>>, vector<256x128xf32>,
    %c2_91 = arith.constant 2 : index
    %c2_92 = arith.constant 2 : index
    %c0_93 = arith.constant 0 : index
    %80 = vector.load %arg7[%c2_91, %c2_92, %c0_93] : memref<18x18x4xf32, #tpu.memory_space<vmem>>, vector<16x16x4xf32>
    %81 = vector.shape_cast %80 : vector<16x16x4xf32> to vector<256x4xf32>
    %c0_94 = arith.constant 0 : index
    %c0_95 = arith.constant 0 : index
    %82 = vector.load %arg8[%c0_94, %c0_95] : memref<256x128xf32, #tpu.memory_space<vmem>>, vector<256x128xf32>
    %c8 = arith.constant 8 : index
    %c0_96 = arith.constant 0 : index
    %c0_97 = arith.constant 0 : index
    %83 = vector.load %arg4[%c8, %c0_96, %c0_97] : memref<9x4x128xf32, #tpu.memory_space<vmem>>, vector<1x4x128xf32>
    %84 = vector.shape_cast %83 : vector<1x4x128xf32> to vector<4x128xf32>
    %cst_98 = arith.constant dense<0.000000e+00> : vector<256x128xf32>
    %85 = tpu.matmul %81, %84, %cst_98 {dimension_numbers = #tpu.dot_dimension_numbers<[1], [0], [0], [1], [0, 0, 1, 1], [], []>} : vector<256x4xf32>, vector<4x128xf32>, vector<256x128xf32> -> vector<256x128xf32>
    %86 = arith.addf %82, %85 : vector<256x128xf32>
    %c0_99 = arith.constant 0 : index
    %c0_100 = arith.constant 0 : index
    %87 = vector.load %arg8[%c0_99, %c0_100] : memref<256x128xf32, #tpu.memory_space<vmem>>, vector<256x128xf32>
    tpu.vector_store %arg8[%c0_99, %c0_100], %86 {strides = array<i32>} : memref<256x128xf32, #tpu.memory_space<vmem>>, vector<256x128xf32>,
    %c0_101 = arith.constant 0 : index
    %c0_102 = arith.constant 0 : index
    %88 = vector.load %arg8[%c0_101, %c0_102] : memref<256x128xf32, #tpu.memory_space<vmem>>, vector<256x128xf32>
    %89 = vector.shape_cast %88 : vector<256x128xf32> to vector<16x16x128xf32>
    %c0_103 = arith.constant 0 : index
    %c0_104 = arith.constant 0 : index
    %c0_105 = arith.constant 0 : index
    %c0_106 = arith.constant 0 : index
    %90 = vector.load %arg6[%c0_103, %c0_104, %c0_105, %c0_106] : memref<1x16x16x128xf32, #tpu.memory_space<vmem>>, vector<1x16x16x128xf32>
    %91 = vector.shape_cast %90 : vector<1x16x16x128xf32> to vector<16x16x128xf32>
    %92 = vector.shape_cast %89 : vector<16x16x128xf32> to vector<1x16x16x128xf32>
    tpu.vector_store %arg6[%c0_103, %c0_104, %c0_105, %c0_106], %92 {strides = array<i32>} : memref<1x16x16x128xf32, #tpu.memory_space<vmem>>, vector<1x16x16x128xf32>,
    return
  }
  func.func @transform_0(%arg0: i32, %arg1: i32) -> i32 {
    %c0_i32 = arith.constant 0 : i32
    %c0_i32_0 = arith.constant 0 : i32
    return %c0_i32 : i32
  }
  func.func @transform_1(%arg0: i32, %arg1: i32) -> (i32, i32, i32, i32) {
    %c0_i32 = arith.constant 0 : i32
    %c0_i32_0 = arith.constant 0 : i32
    %c0_i32_1 = arith.constant 0 : i32
    %c0_i32_2 = arith.constant 0 : i32
    return %arg0, %c0_i32, %c0_i32_0, %c0_i32_1 : i32, i32, i32, i32
  }
  func.func @transform_2(%arg0: i32, %arg1: i32) -> (i32, i32, i32) {
    %c0_i32 = arith.constant 0 : i32
    %c0_i32_0 = arith.constant 0 : i32
    %c0_i32_1 = arith.constant 0 : i32
    %c0_i32_2 = arith.constant 0 : i32
    return %c0_i32, %c0_i32_0, %c0_i32_1 : i32, i32, i32
  }
  func.func @transform_3(%arg0: i32, %arg1: i32) -> (i32, i32) {
    %c0_i32 = arith.constant 0 : i32
    %c0_i32_0 = arith.constant 0 : i32
    %c0_i32_1 = arith.constant 0 : i32
    return %c0_i32, %c0_i32_0 : i32, i32
  }
  func.func @transform_4(%arg0: i32, %arg1: i32) -> (i32, i32, i32, i32) {
    %c0_i32 = arith.constant 0 : i32
    %c0_i32_0 = arith.constant 0 : i32
    %c0_i32_1 = arith.constant 0 : i32
    return %arg0, %arg1, %c0_i32, %c0_i32_0 : i32, i32, i32, i32
  }
}

</mosaic_0001>

<llo_original>
// kernel: basic_conv2d.1
$region0: #{basic_conv2d.1}
  #allocation0 [shape = 'u32[]', space=smem, size = 0x4, offset = 0x4, fixed_abs, tag = 'smem constant byte address 0x4 - core index']
  #allocation1 [shape = 'u32[72,128]{1,0:T(1,128)}', space=vmem, size = 0x9000, scoped, tag = 'internal scratch']
  #allocation2 [shape = 'f32[18,18,4]{2,1,0:T(8,128)}', space=vmem, size = 0x36000, scoped, tag = 'scratch operand']
  #allocation3 [shape = 'f32[256,128]{1,0:T(8,128)}', space=vmem, size = 0x20000, scoped, tag = 'scratch operand']
  #allocation4 [shape = 'f32[1]{0:T(128)S(6)}', space=smem, size = 0x200, scoped, tag = 'scoped memory for basic_conv2d.1']
  %s0 = inlined_call_operand.<no memory space> [shape: f32[1], index: 0, kind: input, shape index: {}]
  %s1 = inlined_call_operand.vmem [shape: f32[2,18,18,4], index: 1, kind: input, shape index: {}]
  %s2 = inlined_call_operand.vmem [shape: f32[9,4,128], index: 2, kind: input, shape index: {}]
  %s3 = inlined_call_operand.vmem [shape: f32[1,128], index: 3, kind: input, shape index: {}]
  %s4 = inlined_call_operand.vmem [shape: f32[2,16,16,128], index: 4, kind: output, shape index: {}]
  %s5 = sld [smem:[#allocation0]]
  $region49: #{basic_conv2d.1} parent=0
    _
  %s7 = ssub.s32 1, %s5
  %s8 = scalar_select 0, %s7, %s5
  %9 = sst [smem:[#allocation4]] %s0
  loop: start=0, step=1, limit=4
  $region2: #{basic_conv2d.1} parent=0 // loop_pre_header
    _
  $region3: #{basic_conv2d.1} parent=0 // loop_header
    %s11 = sphi 0, %s15
    %p12 = scmp.ge.s32.totalorder %s11, 4
    %s18 = sphi 0, %s30
    %s19 = sphi 0, %s26
    %s20 = sphi 0, %s18
    %s21 = sphi 0, %s19
    %s22 = sphi 0, %s20
    %s23 = sphi 0, %s21
    %s31 = sphi 0, %s31
    %s33 = sphi 0, %s31
    %s34 = sphi 0, %s33
    %s48 = sphi 0, %s34
    %s54 = sphi 0, %s56
    %s57 = sphi 0, %s54
    %s58 = sphi 0, %s57
    %s74 = sphi 0, %s58
    %s78 = sphi 0, %s78
    %s80 = sphi 0, %s78
    %s81 = sphi 0, %s80
    %s95 = sphi 0, %s81
    %s99 = sphi 0, %s99
    %s101 = sphi 0, %s99
    %s102 = sphi 0, %s101
    %s116 = sphi 0, %s102
    %s124 = sphi 0, %s126
    %s127 = sphi 0, %s124
    %s128 = sphi 0, %s127
    %s144 = sphi 0, %s128
  $region4: #{basic_conv2d.1} parent=0 // loop_header_branch
    %14 = sbr.rel (%p12) target = $region8
  $region5: #{basic_conv2d.1} parent=0 // loop_body
    %s16 = ssub.s32 %s11, 1
    %s17 = ssub.s32 %s11, 2
    %s24 = sadd.s32 1, %s19
    %p25 = scmp.ge.s32.totalorder %s24, 1
    %s26 = scalar_select %p25, 0, %s24
    %s27 = sadd.s32 1, %s18
    %s28 = scalar_select %p25, %s27, %s18
    %p29 = scmp.ge.s32.totalorder %s28, 2
    %s30 = scalar_select %p29, 0, %s28
    %s32 = sadd.s32 %s31, 1
    %p35 = scmp.eq.s32.totalorder %s11, 1
    %p36 = scmp.ne.s32.totalorder %s31, %s33
    %p37 = scmp.eq.s32.totalorder %s11, 0
    %p38 = por %p36, %p37
    %p39 = scmp.ne.s32.totalorder %s31, %s33
    %p40 = scmp.eq.s32.totalorder %s16, 1
    %p41 = por %p39, %p40
    %p42 = scmp.ne.s32.totalorder %s33, %s34
    %p43 = scmp.eq.s32.totalorder %s16, 0
    %p44 = por %p42, %p43
    %p45 = scmp.ne.s32.totalorder %s33, %s34
    %p46 = scmp.eq.s32.totalorder %s17, 1
    %p47 = por %p45, %p46
    %p49 = scmp.ne.s32.totalorder %s34, %s48
    %p50 = scmp.eq.s32.totalorder %s17, 0
    %p51 = por %p49, %p50
    %s52 = ssub.s32 %s18, %s30
    %p53 = scmp.eq.s32.totalorder %s52, 0
    %s55 = sadd.s32 %s54, 1
    %s56 = scalar_select %p53, %s54, %s55
    %p59 = pneg %p53
    %p60 = scmp.eq.s32.totalorder %s11, 1
    %p61 = por %p59, %p60
    %p62 = scmp.ne.s32.totalorder %s54, %s57
    %p63 = scmp.eq.s32.totalorder %s11, 0
    %p64 = por %p62, %p63
    %p65 = scmp.ne.s32.totalorder %s54, %s57
    %p66 = scmp.eq.s32.totalorder %s16, 1
    %p67 = por %p65, %p66
    %p68 = scmp.ne.s32.totalorder %s57, %s58
    %p69 = scmp.eq.s32.totalorder %s16, 0
    %p70 = por %p68, %p69
    %p71 = scmp.ne.s32.totalorder %s57, %s58
    %p72 = scmp.eq.s32.totalorder %s17, 1
    %p73 = por %p71, %p72
    %p75 = scmp.ne.s32.totalorder %s58, %s74
    %p76 = scmp.eq.s32.totalorder %s17, 0
    %p77 = por %p75, %p76
    %s79 = sadd.s32 %s78, 1
    %p82 = scmp.eq.s32.totalorder %s11, 1
    %p83 = scmp.ne.s32.totalorder %s78, %s80
    %p84 = scmp.eq.s32.totalorder %s11, 0
    %p85 = por %p83, %p84
    %p86 = scmp.ne.s32.totalorder %s78, %s80
    %p87 = scmp.eq.s32.totalorder %s16, 1
    %p88 = por %p86, %p87
    %p89 = scmp.ne.s32.totalorder %s80, %s81
    %p90 = scmp.eq.s32.totalorder %s16, 0
    %p91 = por %p89, %p90
    %p92 = scmp.ne.s32.totalorder %s80, %s81
    %p93 = scmp.eq.s32.totalorder %s17, 1
    %p94 = por %p92, %p93
    %p96 = scmp.ne.s32.totalorder %s81, %s95
    %p97 = scmp.eq.s32.totalorder %s17, 0
    %p98 = por %p96, %p97
    %s100 = sadd.s32 %s99, 1
    %p103 = scmp.eq.s32.totalorder %s11, 1
    %p104 = scmp.ne.s32.totalorder %s99, %s101
    %p105 = scmp.eq.s32.totalorder %s11, 0
    %p106 = por %p104, %p105
    %p107 = scmp.ne.s32.totalorder %s99, %s101
    %p108 = scmp.eq.s32.totalorder %s16, 1
    %p109 = por %p107, %p108
    %p110 = scmp.ne.s32.totalorder %s101, %s102
    %p111 = scmp.eq.s32.totalorder %s16, 0
    %p112 = por %p110, %p111
    %p113 = scmp.ne.s32.totalorder %s101, %s102
    %p114 = scmp.eq.s32.totalorder %s17, 1
    %p115 = por %p113, %p114
    %p117 = scmp.ne.s32.totalorder %s102, %s116
    %p118 = scmp.eq.s32.totalorder %s17, 0
    %p119 = por %p117, %p118
    %s120 = ssub.s32 %s18, %s30
    %s121 = ssub.s32 %s19, %s26
    %s122 = sor.u32 %s120, %s121
    %p123 = scmp.eq.s32.totalorder %s122, 0
    %s125 = sadd.s32 %s124, 1
    %s126 = scalar_select %p123, %s124, %s125
    %p129 = pneg %p123
    %p130 = scmp.eq.s32.totalorder %s11, 1
    %p131 = por %p129, %p130
    %p132 = scmp.ne.s32.totalorder %s124, %s127
    %p133 = scmp.eq.s32.totalorder %s11, 0
    %p134 = por %p132, %p133
    %p135 = scmp.ne.s32.totalorder %s124, %s127
    %p136 = scmp.eq.s32.totalorder %s16, 1
    %p137 = por %p135, %p136
    %p138 = scmp.ne.s32.totalorder %s127, %s128
    %p139 = scmp.eq.s32.totalorder %s16, 0
    %p140 = por %p138, %p139
    %p141 = scmp.ne.s32.totalorder %s127, %s128
    %p142 = scmp.eq.s32.totalorder %s17, 1
    %p143 = por %p141, %p142
    %p145 = scmp.ne.s32.totalorder %s128, %s144
    %p146 = scmp.eq.s32.totalorder %s17, 0
    %p147 = por %p145, %p146
    %p148 = scmp.le.s32.totalorder 1, %s11
    %p149 = scmp.lt.s32.totalorder %s11, 3
    %p150 = pnand %p148, %p149
    %p151 = pneg %p150
    // Predicated region
    $region9: #{basic_conv2d.1} parent=5 // pred_check
      _
    $region10: #{basic_conv2d.1} parent=5 // pred_check_branch
      %153 = sbr.rel (%p150) target = $region12
    $region11: #{basic_conv2d.1} parent=5 // pred_region
      %s154 = ssub.s32 %s11, 1
      // Predicated region
      $region13: #{basic_conv2d.1} parent=11 // pred_check
        %p155 = pneg %p44
      $region14: #{basic_conv2d.1} parent=11 // pred_check_branch
        %157 = sbr.rel (%p155) target = $region16
      $region15: #{basic_conv2d.1} parent=11 // pred_region
        _
      $region16: #{basic_conv2d.1} parent=11 // pred_fallthru
        _
      // Predicated region
      $region17: #{basic_conv2d.1} parent=11 // pred_check
        %p158 = pneg %p91
      $region18: #{basic_conv2d.1} parent=11 // pred_check_branch
        %160 = sbr.rel (%p158) target = $region20
      $region19: #{basic_conv2d.1} parent=11 // pred_region
        _
      $region20: #{basic_conv2d.1} parent=11 // pred_fallthru
        _
      // Predicated region
      $region21: #{basic_conv2d.1} parent=11 // pred_check
        %p161 = pneg %p112
      $region22: #{basic_conv2d.1} parent=11 // pred_check_branch
        %163 = sbr.rel (%p161) target = $region24
      $region23: #{basic_conv2d.1} parent=11 // pred_region
        _
      $region24: #{basic_conv2d.1} parent=11 // pred_fallthru
        _
    $region12: #{basic_conv2d.1} parent=5 // pred_fallthru
      _
    %p164 = scmp.lt.s32.totalorder %s11, 2
    // Predicated region
    $region25: #{basic_conv2d.1} parent=5 // pred_check
      %p165 = pneg %p164
    $region26: #{basic_conv2d.1} parent=5 // pred_check_branch
      %167 = sbr.rel (%p165) target = $region28
    $region27: #{basic_conv2d.1} parent=5 // pred_region
      // Predicated region
      $region29: #{basic_conv2d.1} parent=27 // pred_check
        %p168 = pneg %p64
      $region30: #{basic_conv2d.1} parent=27 // pred_check_branch
        %170 = sbr.rel (%p168) target = $region32
      $region31: #{basic_conv2d.1} parent=27 // pred_region
        %p171 = scmp.lt.s32.totalorder %s18, 1
        %s172 = scalar_select %p171, %s18, 1
        %s173 = smul.addr %s172, 54
        %s174 = smul.addr %s173, 8
        %s175 = scalar_lea.vmem %s1, %s174
      $region32: #{basic_conv2d.1} parent=27 // pred_fallthru
        _
    $region28: #{basic_conv2d.1} parent=5 // pred_fallthru
      _
    %p176 = scmp.le.s32.totalorder 1, %s11
    %p177 = scmp.lt.s32.totalorder %s11, 3
    %p178 = pnand %p176, %p177
    %p179 = pneg %p178
    // Predicated region
    $region33: #{basic_conv2d.1} parent=5 // pred_check
      _
    $region34: #{basic_conv2d.1} parent=5 // pred_check_branch
      %181 = sbr.rel (%p178) target = $region36
    $region35: #{basic_conv2d.1} parent=5 // pred_region
      %s182 = ssub.s32 %s11, 1
      %p183 = pneg %p44
      %p184 = pneg %p41
      %p185 = scmp.lt.s32.totalorder %s20, 1
      %s186 = scalar_select %p185, %s20, 1
      %s187 = smul.addr %s186, 54
      %s188 = smul.addr %s187, 8
      %s189 = scalar_lea.vmem %s1, %s188
      %p190 = pneg %p70
      %p191 = pneg %p67
      %p192 = pneg %p91
      %p193 = pneg %p88
      %p194 = pneg %p112
      %p195 = pneg %p109
      %p196 = pneg %p140
      %p197 = pneg %p137
      %s198 = smul.u32 16, %s21
      %p199 = scmp.lt.s32.totalorder %s20, 1
      %s200 = scalar_select %p199, %s20, 1
      %p201 = scmp.lt.s32.totalorder %s198, 15
      %s202 = scalar_select %p201, %s198, 15
      %s203 = smul.addr %s202, 2
      %s204 = smul.addr %s200, 32
      %s205 = sadd.s32 %s203, %s204
      %s206 = smul.addr %s205, 8
      %s207 = scalar_lea.vmem %s4, %s206
      %p208 = scmp.lt.s32.totalorder %s20, 1
      %s209 = scalar_select %p208, %s20, 1
      %s210 = smul.addr %s209, 54
      %s211 = smul.addr %s210, 8
      %s212 = scalar_lea.vmem %s1, %s211
      %s213 = smul.u32 16, %s21
      %p214 = scmp.lt.s32.totalorder %s20, 1
      %s215 = scalar_select %p214, %s20, 1
      %p216 = scmp.lt.s32.totalorder %s213, 15
      %s217 = scalar_select %p216, %s213, 15
      %s218 = smul.addr %s217, 2
      %s219 = smul.addr %s215, 32
      %s220 = sadd.s32 %s218, %s219
      %s221 = smul.addr %s220, 8
      %s222 = scalar_lea.vmem %s4, %s221
      %s223 = smul.u32 16, %s21
      %s224 = sld [smem:[#allocation4]]
      %s225 = smul.u32 %s21, 16
      %s226 = smul.u32 %s225, 24
      %s227 = scalar_lea.vmem %s212, %s226
      %v228 = vld [vmem:[%s227] sm:$0xff]
      %v229 = vld [vmem:[%s227 + $0x8] sm:$0xff]
      %v230 = vld [vmem:[%s227 + $0x10] sm:$0x3]
      %v231 = vld [vmem:[%s227 + $0x18] sm:$0xff]
      %v232 = vld [vmem:[%s227 + $0x20] sm:$0xff]
      %v233 = vld [vmem:[%s227 + $0x28] sm:$0x3]
      %v234 = vld [vmem:[%s227 + $0x30] sm:$0xff]
      %v235 = vld [vmem:[%s227 + $0x38] sm:$0xff]
      %v236 = vld [vmem:[%s227 + $0x40] sm:$0x3]
      %v237 = vld [vmem:[%s227 + $0x48] sm:$0xff]
      %v238 = vld [vmem:[%s227 + $0x50] sm:$0xff]
      %v239 = vld [vmem:[%s227 + $0x58] sm:$0x3]
      %v240 = vld [vmem:[%s227 + $0x60] sm:$0xff]
      %v241 = vld [vmem:[%s227 + $0x68] sm:$0xff]
      %v242 = vld [vmem:[%s227 + $0x70] sm:$0x3]
      %v243 = vld [vmem:[%s227 + $0x78] sm:$0xff]
      %v244 = vld [vmem:[%s227 + $0x80] sm:$0xff]
      %v245 = vld [vmem:[%s227 + $0x88] sm:$0x3]
      %v246 = vld [vmem:[%s227 + $0x90] sm:$0xff]
      %v247 = vld [vmem:[%s227 + $0x98] sm:$0xff]
      %v248 = vld [vmem:[%s227 + $0xa0] sm:$0x3]
      %v249 = vld [vmem:[%s227 + $0xa8] sm:$0xff]
      %v250 = vld [vmem:[%s227 + $0xb0] sm:$0xff]
      %v251 = vld [vmem:[%s227 + $0xb8] sm:$0x3]
      %v252 = vld [vmem:[%s227 + $0xc0] sm:$0xff]
      %v253 = vld [vmem:[%s227 + $0xc8] sm:$0xff]
      %v254 = vld [vmem:[%s227 + $0xd0] sm:$0x3]
      %v255 = vld [vmem:[%s227 + $0xd8] sm:$0xff]
      %v256 = vld [vmem:[%s227 + $0xe0] sm:$0xff]
      %v257 = vld [vmem:[%s227 + $0xe8] sm:$0x3]
      %v258 = vld [vmem:[%s227 + $0xf0] sm:$0xff]
      %v259 = vld [vmem:[%s227 + $0xf8] sm:$0xff]
      %v260 = vld [vmem:[%s227 + $0x100] sm:$0x3]
      %v261 = vld [vmem:[%s227 + $0x108] sm:$0xff]
      %v262 = vld [vmem:[%s227 + $0x110] sm:$0xff]
      %v263 = vld [vmem:[%s227 + $0x118] sm:$0x3]
      %v264 = vld [vmem:[%s227 + $0x120] sm:$0xff]
      %v265 = vld [vmem:[%s227 + $0x128] sm:$0xff]
      %v266 = vld [vmem:[%s227 + $0x130] sm:$0x3]
      %v267 = vld [vmem:[%s227 + $0x138] sm:$0xff]
      %v268 = vld [vmem:[%s227 + $0x140] sm:$0xff]
      %v269 = vld [vmem:[%s227 + $0x148] sm:$0x3]
      %v270 = vld [vmem:[%s227 + $0x150] sm:$0xff]
      %v271 = vld [vmem:[%s227 + $0x158] sm:$0xff]
      %v272 = vld [vmem:[%s227 + $0x160] sm:$0x3]
      %v273 = vld [vmem:[%s227 + $0x168] sm:$0xff]
      %v274 = vld [vmem:[%s227 + $0x170] sm:$0xff]
      %v275 = vld [vmem:[%s227 + $0x178] sm:$0x3]
      %v276 = vld [vmem:[%s227 + $0x180] sm:$0xff]
      %v277 = vld [vmem:[%s227 + $0x188] sm:$0xff]
      %v278 = vld [vmem:[%s227 + $0x190] sm:$0x3]
      %v279 = vld [vmem:[%s227 + $0x198] sm:$0xff]
      %v280 = vld [vmem:[%s227 + $0x1a0] sm:$0xff]
      %v281 = vld [vmem:[%s227 + $0x1a8] sm:$0x3]
      %vm282 = vcmp.ge.f32.partialorder %v228, 0.0
      %vm283 = vcmp.ge.f32.partialorder %v229, 0.0
      %vm284 = vcmp.ge.f32.partialorder %v230, 0.0
      %vm285 = vcmp.ge.f32.partialorder %v231, 0.0
      %vm286 = vcmp.ge.f32.partialorder %v232, 0.0
      %vm287 = vcmp.ge.f32.partialorder %v233, 0.0
      %vm288 = vcmp.ge.f32.partialorder %v234, 0.0
      %vm289 = vcmp.ge.f32.partialorder %v235, 0.0
      %vm290 = vcmp.ge.f32.partialorder %v236, 0.0
      %vm291 = vcmp.ge.f32.partialorder %v237, 0.0
      %vm292 = vcmp.ge.f32.partialorder %v238, 0.0
      %vm293 = vcmp.ge.f32.partialorder %v239, 0.0
      %vm294 = vcmp.ge.f32.partialorder %v240, 0.0
      %vm295 = vcmp.ge.f32.partialorder %v241, 0.0
      %vm296 = vcmp.ge.f32.partialorder %v242, 0.0
      %vm297 = vcmp.ge.f32.partialorder %v243, 0.0
      %vm298 = vcmp.ge.f32.partialorder %v244, 0.0
      %vm299 = vcmp.ge.f32.partialorder %v245, 0.0
      %vm300 = vcmp.ge.f32.partialorder %v246, 0.0
      %vm301 = vcmp.ge.f32.partialorder %v247, 0.0
      %vm302 = vcmp.ge.f32.partialorder %v248, 0.0
      %vm303 = vcmp.ge.f32.partialorder %v249, 0.0
      %vm304 = vcmp.ge.f32.partialorder %v250, 0.0
      %vm305 = vcmp.ge.f32.partialorder %v251, 0.0
      %vm306 = vcmp.ge.f32.partialorder %v252, 0.0
      %vm307 = vcmp.ge.f32.partialorder %v253, 0.0
      %vm308 = vcmp.ge.f32.partialorder %v254, 0.0
      %vm309 = vcmp.ge.f32.partialorder %v255, 0.0
      %vm310 = vcmp.ge.f32.partialorder %v256, 0.0
      %vm311 = vcmp.ge.f32.partialorder %v257, 0.0
      %vm312 = vcmp.ge.f32.partialorder %v258, 0.0
      %vm313 = vcmp.ge.f32.partialorder %v259, 0.0
      %vm314 = vcmp.ge.f32.partialorder %v260, 0.0
      %vm315 = vcmp.ge.f32.partialorder %v261, 0.0
      %vm316 = vcmp.ge.f32.partialorder %v262, 0.0
      %vm317 = vcmp.ge.f32.partialorder %v263, 0.0
      %vm318 = vcmp.ge.f32.partialorder %v264, 0.0
      %vm319 = vcmp.ge.f32.partialorder %v265, 0.0
      %vm320 = vcmp.ge.f32.partialorder %v266, 0.0
      %vm321 = vcmp.ge.f32.partialorder %v267, 0.0
      %vm322 = vcmp.ge.f32.partialorder %v268, 0.0
      %vm323 = vcmp.ge.f32.partialorder %v269, 0.0
      %vm324 = vcmp.ge.f32.partialorder %v270, 0.0
      %vm325 = vcmp.ge.f32.partialorder %v271, 0.0
      %vm326 = vcmp.ge.f32.partialorder %v272, 0.0
      %vm327 = vcmp.ge.f32.partialorder %v273, 0.0
      %vm328 = vcmp.ge.f32.partialorder %v274, 0.0
      %vm329 = vcmp.ge.f32.partialorder %v275, 0.0
      %vm330 = vcmp.ge.f32.partialorder %v276, 0.0
      %vm331 = vcmp.ge.f32.partialorder %v277, 0.0
      %vm332 = vcmp.ge.f32.partialorder %v278, 0.0
      %vm333 = vcmp.ge.f32.partialorder %v279, 0.0
      %vm334 = vcmp.ge.f32.partialorder %v280, 0.0
      %vm335 = vcmp.ge.f32.partialorder %v281, 0.0
      %v336 = vstv %s224
      %v337 = vmul.f32 %v336, %v228
      %v338 = vmul.f32 %v336, %v229
      %v339 = vmul.f32 %v336, %v230
      %v340 = vmul.f32 %v336, %v231
      %v341 = vmul.f32 %v336, %v232
      %v342 = vmul.f32 %v336, %v233
      %v343 = vmul.f32 %v336, %v234
      %v344 = vmul.f32 %v336, %v235
      %v345 = vmul.f32 %v336, %v236
      %v346 = vmul.f32 %v336, %v237
      %v347 = vmul.f32 %v336, %v238
      %v348 = vmul.f32 %v336, %v239
      %v349 = vmul.f32 %v336, %v240
      %v350 = vmul.f32 %v336, %v241
      %v351 = vmul.f32 %v336, %v242
      %v352 = vmul.f32 %v336, %v243
      %v353 = vmul.f32 %v336, %v244
      %v354 = vmul.f32 %v336, %v245
      %v355 = vmul.f32 %v336, %v246
      %v356 = vmul.f32 %v336, %v247
      %v357 = vmul.f32 %v336, %v248
      %v358 = vmul.f32 %v336, %v249
      %v359 = vmul.f32 %v336, %v250
      %v360 = vmul.f32 %v336, %v251
      %v361 = vmul.f32 %v336, %v252
      %v362 = vmul.f32 %v336, %v253
      %v363 = vmul.f32 %v336, %v254
      %v364 = vmul.f32 %v336, %v255
      %v365 = vmul.f32 %v336, %v256
      %v366 = vmul.f32 %v336, %v257
      %v367 = vmul.f32 %v336, %v258
      %v368 = vmul.f32 %v336, %v259
      %v369 = vmul.f32 %v336, %v260
      %v370 = vmul.f32 %v336, %v261
      %v371 = vmul.f32 %v336, %v262
      %v372 = vmul.f32 %v336, %v263
      %v373 = vmul.f32 %v336, %v264
      %v374 = vmul.f32 %v336, %v265
      %v375 = vmul.f32 %v336, %v266
      %v376 = vmul.f32 %v336, %v267
      %v377 = vmul.f32 %v336, %v268
      %v378 = vmul.f32 %v336, %v269
      %v379 = vmul.f32 %v336, %v270
      %v380 = vmul.f32 %v336, %v271
      %v381 = vmul.f32 %v336, %v272
      %v382 = vmul.f32 %v336, %v273
      %v383 = vmul.f32 %v336, %v274
      %v384 = vmul.f32 %v336, %v275
      %v385 = vmul.f32 %v336, %v276
      %v386 = vmul.f32 %v336, %v277
      %v387 = vmul.f32 %v336, %v278
      %v388 = vmul.f32 %v336, %v279
      %v389 = vmul.f32 %v336, %v280
      %v390 = vmul.f32 %v336, %v281
      %v391 = vsel %vm282, %v228, %v337
      %v392 = vsel %vm283, %v229, %v338
      %v393 = vsel %vm284, %v230, %v339
      %v394 = vsel %vm285, %v231, %v340
      %v395 = vsel %vm286, %v232, %v341
      %v396 = vsel %vm287, %v233, %v342
      %v397 = vsel %vm288, %v234, %v343
      %v398 = vsel %vm289, %v235, %v344
      %v399 = vsel %vm290, %v236, %v345
      %v400 = vsel %vm291, %v237, %v346
      %v401 = vsel %vm292, %v238, %v347
      %v402 = vsel %vm293, %v239, %v348
      %v403 = vsel %vm294, %v240, %v349
      %v404 = vsel %vm295, %v241, %v350
      %v405 = vsel %vm296, %v242, %v351
      %v406 = vsel %vm297, %v243, %v352
      %v407 = vsel %vm298, %v244, %v353
      %v408 = vsel %vm299, %v245, %v354
      %v409 = vsel %vm300, %v246, %v355
      %v410 = vsel %vm301, %v247, %v356
      %v411 = vsel %vm302, %v248, %v357
      %v412 = vsel %vm303, %v249, %v358
      %v413 = vsel %vm304, %v250, %v359
      %v414 = vsel %vm305, %v251, %v360
      %v415 = vsel %vm306, %v252, %v361
      %v416 = vsel %vm307, %v253, %v362
      %v417 = vsel %vm308, %v254, %v363
      %v418 = vsel %vm309, %v255, %v364
      %v419 = vsel %vm310, %v256, %v365
      %v420 = vsel %vm311, %v257, %v366
      %v421 = vsel %vm312, %v258, %v367
      %v422 = vsel %vm313, %v259, %v368
      %v423 = vsel %vm314, %v260, %v369
      %v424 = vsel %vm315, %v261, %v370
      %v425 = vsel %vm316, %v262, %v371
      %v426 = vsel %vm317, %v263, %v372
      %v427 = vsel %vm318, %v264, %v373
      %v428 = vsel %vm319, %v265, %v374
      %v429 = vsel %vm320, %v266, %v375
      %v430 = vsel %vm321, %v267, %v376
      %v431 = vsel %vm322, %v268, %v377
      %v432 = vsel %vm323, %v269, %v378
      %v433 = vsel %vm324, %v270, %v379
      %v434 = vsel %vm325, %v271, %v380
      %v435 = vsel %vm326, %v272, %v381
      %v436 = vsel %vm327, %v273, %v382
      %v437 = vsel %vm328, %v274, %v383
      %v438 = vsel %vm329, %v275, %v384
      %v439 = vsel %vm330, %v276, %v385
      %v440 = vsel %vm331, %v277, %v386
      %v441 = vsel %vm332, %v278, %v387
      %v442 = vsel %vm333, %v279, %v388
      %v443 = vsel %vm334, %v280, %v389
      %v444 = vsel %vm335, %v281, %v390
      %vm445 = vcmask 31744
      %446 = vst.msk [vmem:[#allocation2] sm:$0xff] %vm445, %v391
      %447 = vst.msk [vmem:[#allocation2 + $0x8] sm:$0xff] %vm445, %v392
      %vm448 = vcmask 25600
      %449 = vst.msk [vmem:[#allocation2 + $0x10] sm:$0x3] %vm448, %v393
      %450 = vst.msk [vmem:[#allocation2 + $0x18] sm:$0xff] %vm445, %v394
      %451 = vst.msk [vmem:[#allocation2 + $0x20] sm:$0xff] %vm445, %v395
      %452 = vst.msk [vmem:[#allocation2 + $0x28] sm:$0x3] %vm448, %v396
      %453 = vst.msk [vmem:[#allocation2 + $0x30] sm:$0xff] %vm445, %v397
      %454 = vst.msk [vmem:[#allocation2 + $0x38] sm:$0xff] %vm445, %v398
      %455 = vst.msk [vmem:[#allocation2 + $0x40] sm:$0x3] %vm448, %v399
      %456 = vst.msk [vmem:[#allocation2 + $0x48] sm:$0xff] %vm445, %v400
      %457 = vst.msk [vmem:[#allocation2 + $0x50] sm:$0xff] %vm445, %v401
      %458 = vst.msk [vmem:[#allocation2 + $0x58] sm:$0x3] %vm448, %v402
      %459 = vst.msk [vmem:[#allocation2 + $0x60] sm:$0xff] %vm445, %v403
      %460 = vst.msk [vmem:[#allocation2 + $0x68] sm:$0xff] %vm445, %v404
      %461 = vst.msk [vmem:[#allocation2 + $0x70] sm:$0x3] %vm448, %v405
      %462 = vst.msk [vmem:[#allocation2 + $0x78] sm:$0xff] %vm445, %v406
      %463 = vst.msk [vmem:[#allocation2 + $0x80] sm:$0xff] %vm445, %v407
      %464 = vst.msk [vmem:[#allocation2 + $0x88] sm:$0x3] %vm448, %v408
      %465 = vst.msk [vmem:[#allocation2 + $0x90] sm:$0xff] %vm445, %v409
      %466 = vst.msk [vmem:[#allocation2 + $0x98] sm:$0xff] %vm445, %v410
      %467 = vst.msk [vmem:[#allocation2 + $0xa0] sm:$0x3] %vm448, %v411
      %468 = vst.msk [vmem:[#allocation2 + $0xa8] sm:$0xff] %vm445, %v412
      %469 = vst.msk [vmem:[#allocation2 + $0xb0] sm:$0xff] %vm445, %v413
      %470 = vst.msk [vmem:[#allocation2 + $0xb8] sm:$0x3] %vm448, %v414
      %471 = vst.msk [vmem:[#allocation2 + $0xc0] sm:$0xff] %vm445, %v415
      %472 = vst.msk [vmem:[#allocation2 + $0xc8] sm:$0xff] %vm445, %v416
      %473 = vst.msk [vmem:[#allocation2 + $0xd0] sm:$0x3] %vm448, %v417
      %474 = vst.msk [vmem:[#allocation2 + $0xd8] sm:$0xff] %vm445, %v418
      %475 = vst.msk [vmem:[#allocation2 + $0xe0] sm:$0xff] %vm445, %v419
      %476 = vst.msk [vmem:[#allocation2 + $0xe8] sm:$0x3] %vm448, %v420
      %477 = vst.msk [vmem:[#allocation2 + $0xf0] sm:$0xff] %vm445, %v421
      %478 = vst.msk [vmem:[#allocation2 + $0xf8] sm:$0xff] %vm445, %v422
      %479 = vst.msk [vmem:[#allocation2 + $0x100] sm:$0x3] %vm448, %v423
      %480 = vst.msk [vmem:[#allocation2 + $0x108] sm:$0xff] %vm445, %v424
      %481 = vst.msk [vmem:[#allocation2 + $0x110] sm:$0xff] %vm445, %v425
      %482 = vst.msk [vmem:[#allocation2 + $0x118] sm:$0x3] %vm448, %v426
      %483 = vst.msk [vmem:[#allocation2 + $0x120] sm:$0xff] %vm445, %v427
      %484 = vst.msk [vmem:[#allocation2 + $0x128] sm:$0xff] %vm445, %v428
      %485 = vst.msk [vmem:[#allocation2 + $0x130] sm:$0x3] %vm448, %v429
      %486 = vst.msk [vmem:[#allocation2 + $0x138] sm:$0xff] %vm445, %v430
      %487 = vst.msk [vmem:[#allocation2 + $0x140] sm:$0xff] %vm445, %v431
      %488 = vst.msk [vmem:[#allocation2 + $0x148] sm:$0x3] %vm448, %v432
      %489 = vst.msk [vmem:[#allocation2 + $0x150] sm:$0xff] %vm445, %v433
      %490 = vst.msk [vmem:[#allocation2 + $0x158] sm:$0xff] %vm445, %v434
      %491 = vst.msk [vmem:[#allocation2 + $0x160] sm:$0x3] %vm448, %v435
      %492 = vst.msk [vmem:[#allocation2 + $0x168] sm:$0xff] %vm445, %v436
      %493 = vst.msk [vmem:[#allocation2 + $0x170] sm:$0xff] %vm445, %v437
      %494 = vst.msk [vmem:[#allocation2 + $0x178] sm:$0x3] %vm448, %v438
      %495 = vst.msk [vmem:[#allocation2 + $0x180] sm:$0xff] %vm445, %v439
      %496 = vst.msk [vmem:[#allocation2 + $0x188] sm:$0xff] %vm445, %v440
      %497 = vst.msk [vmem:[#allocation2 + $0x190] sm:$0x3] %vm448, %v441
      %498 = vst.msk [vmem:[#allocation2 + $0x198] sm:$0xff] %vm445, %v442
      %499 = vst.msk [vmem:[#allocation2 + $0x1a0] sm:$0xff] %vm445, %v443
      %500 = vst.msk [vmem:[#allocation2 + $0x1a8] sm:$0x3] %vm448, %v444
      %v501 = vld [vmem:[%s3] sm:$0x1]
      %v503 = vperm.slane %v501, 0
      %505 = vst [vmem:[#allocation3] sm:$0xff] %v503
      %506 = vst [vmem:[#allocation3 + $0x8] sm:$0xff] %v503
      %507 = vst [vmem:[#allocation3 + $0x10] sm:$0xff] %v503
      %508 = vst [vmem:[#allocation3 + $0x18] sm:$0xff] %v503
      %509 = vst [vmem:[#allocation3 + $0x20] sm:$0xff] %v503
      %510 = vst [vmem:[#allocation3 + $0x28] sm:$0xff] %v503
      %511 = vst [vmem:[#allocation3 + $0x30] sm:$0xff] %v503
      %512 = vst [vmem:[#allocation3 + $0x38] sm:$0xff] %v503
      %513 = vst [vmem:[#allocation3 + $0x40] sm:$0xff] %v503
      %514 = vst [vmem:[#allocation3 + $0x48] sm:$0xff] %v503
      %515 = vst [vmem:[#allocation3 + $0x50] sm:$0xff] %v503
      %516 = vst [vmem:[#allocation3 + $0x58] sm:$0xff] %v503
      %517 = vst [vmem:[#allocation3 + $0x60] sm:$0xff] %v503
      %518 = vst [vmem:[#allocation3 + $0x68] sm:$0xff] %v503
      %519 = vst [vmem:[#allocation3 + $0x70] sm:$0xff] %v503
      %520 = vst [vmem:[#allocation3 + $0x78] sm:$0xff] %v503
      %521 = vst [vmem:[#allocation3 + $0x80] sm:$0xff] %v503
      %522 = vst [vmem:[#allocation3 + $0x88] sm:$0xff] %v503
      %523 = vst [vmem:[#allocation3 + $0x90] sm:$0xff] %v503
      %524 = vst [vmem:[#allocation3 + $0x98] sm:$0xff] %v503
      %525 = vst [vmem:[#allocation3 + $0xa0] sm:$0xff] %v503
      %526 = vst [vmem:[#allocation3 + $0xa8] sm:$0xff] %v503
      %527 = vst [vmem:[#allocation3 + $0xb0] sm:$0xff] %v503
      %528 = vst [vmem:[#allocation3 + $0xb8] sm:$0xff] %v503
      %529 = vst [vmem:[#allocation3 + $0xc0] sm:$0xff] %v503
      %530 = vst [vmem:[#allocation3 + $0xc8] sm:$0xff] %v503
      %531 = vst [vmem:[#allocation3 + $0xd0] sm:$0xff] %v503
      %532 = vst [vmem:[#allocation3 + $0xd8] sm:$0xff] %v503
      %533 = vst [vmem:[#allocation3 + $0xe0] sm:$0xff] %v503
      %534 = vst [vmem:[#allocation3 + $0xe8] sm:$0xff] %v503
      %535 = vst [vmem:[#allocation3 + $0xf0] sm:$0xff] %v503
      %536 = vst [vmem:[#allocation3 + $0xf8] sm:$0xff] %v503
      %v537 = vld [vmem:[#allocation2] sm:$0xff]
      %v538 = vld [vmem:[#allocation2 + $0x8] sm:$0xff]
      %v539 = vld [vmem:[#allocation2 + $0x18] sm:$0xff]
      %v540 = vld [vmem:[#allocation2 + $0x20] sm:$0xff]
      %v541 = vld [vmem:[#allocation2 + $0x30] sm:$0xff]
      %v542 = vld [vmem:[#allocation2 + $0x38] sm:$0xff]
      %v543 = vld [vmem:[#allocation2 + $0x48] sm:$0xff]
      %v544 = vld [vmem:[#allocation2 + $0x50] sm:$0xff]
      %v545 = vld [vmem:[#allocation2 + $0x60] sm:$0xff]
      %v546 = vld [vmem:[#allocation2 + $0x68] sm:$0xff]
      %v547 = vld [vmem:[#allocation2 + $0x78] sm:$0xff]
      %v548 = vld [vmem:[#allocation2 + $0x80] sm:$0xff]
      %v549 = vld [vmem:[#allocation2 + $0x90] sm:$0xff]
      %v550 = vld [vmem:[#allocation2 + $0x98] sm:$0xff]
      %v551 = vld [vmem:[#allocation2 + $0xa8] sm:$0xff]
      %v552 = vld [vmem:[#allocation2 + $0xb0] sm:$0xff]
      %v553 = vld [vmem:[#allocation2 + $0xc0] sm:$0xff]
      %v554 = vld [vmem:[#allocation2 + $0xc8] sm:$0xff]
      %v555 = vld [vmem:[#allocation2 + $0xd8] sm:$0xff]
      %v556 = vld [vmem:[#allocation2 + $0xe0] sm:$0xff]
      %v557 = vld [vmem:[#allocation2 + $0xf0] sm:$0xff]
      %v558 = vld [vmem:[#allocation2 + $0xf8] sm:$0xff]
      %v559 = vld [vmem:[#allocation2 + $0x108] sm:$0xff]
      %v560 = vld [vmem:[#allocation2 + $0x110] sm:$0xff]
      %v561 = vld [vmem:[#allocation2 + $0x120] sm:$0xff]
      %v562 = vld [vmem:[#allocation2 + $0x128] sm:$0xff]
      %v563 = vld [vmem:[#allocation2 + $0x138] sm:$0xff]
      %v564 = vld [vmem:[#allocation2 + $0x140] sm:$0xff]
      %v565 = vld [vmem:[#allocation2 + $0x150] sm:$0xff]
      %v566 = vld [vmem:[#allocation2 + $0x158] sm:$0xff]
      %v567 = vld [vmem:[#allocation2 + $0x168] sm:$0xff]
      %v568 = vld [vmem:[#allocation2 + $0x170] sm:$0xff]
      %v569 = vld [vmem:[#allocation3] sm:$0xff]
      %v570 = vld [vmem:[#allocation3 + $0x8] sm:$0xff]
      %v571 = vld [vmem:[#allocation3 + $0x10] sm:$0xff]
      %v572 = vld [vmem:[#allocation3 + $0x18] sm:$0xff]
      %v573 = vld [vmem:[#allocation3 + $0x20] sm:$0xff]
      %v574 = vld [vmem:[#allocation3 + $0x28] sm:$0xff]
      %v575 = vld [vmem:[#allocation3 + $0x30] sm:$0xff]
      %v576 = vld [vmem:[#allocation3 + $0x38] sm:$0xff]
      %v577 = vld [vmem:[#allocation3 + $0x40] sm:$0xff]
      %v578 = vld [vmem:[#allocation3 + $0x48] sm:$0xff]
      %v579 = vld [vmem:[#allocation3 + $0x50] sm:$0xff]
      %v580 = vld [vmem:[#allocation3 + $0x58] sm:$0xff]
      %v581 = vld [vmem:[#allocation3 + $0x60] sm:$0xff]
      %v582 = vld [vmem:[#allocation3 + $0x68] sm:$0xff]
      %v583 = vld [vmem:[#allocation3 + $0x70] sm:$0xff]
      %v584 = vld [vmem:[#allocation3 + $0x78] sm:$0xff]
      %v585 = vld [vmem:[#allocation3 + $0x80] sm:$0xff]
      %v586 = vld [vmem:[#allocation3 + $0x88] sm:$0xff]
      %v587 = vld [vmem:[#allocation3 + $0x90] sm:$0xff]
      %v588 = vld [vmem:[#allocation3 + $0x98] sm:$0xff]
      %v589 = vld [vmem:[#allocation3 + $0xa0] sm:$0xff]
      %v590 = vld [vmem:[#allocation3 + $0xa8] sm:$0xff]
      %v591 = vld [vmem:[#allocation3 + $0xb0] sm:$0xff]
      %v592 = vld [vmem:[#allocation3 + $0xb8] sm:$0xff]
      %v593 = vld [vmem:[#allocation3 + $0xc0] sm:$0xff]
      %v594 = vld [vmem:[#allocation3 + $0xc8] sm:$0xff]
      %v595 = vld [vmem:[#allocation3 + $0xd0] sm:$0xff]
      %v596 = vld [vmem:[#allocation3 + $0xd8] sm:$0xff]
      %v597 = vld [vmem:[#allocation3 + $0xe0] sm:$0xff]
      %v598 = vld [vmem:[#allocation3 + $0xe8] sm:$0xff]
      %v599 = vld [vmem:[#allocation3 + $0xf0] sm:$0xff]
      %v600 = vld [vmem:[#allocation3 + $0xf8] sm:$0xff]
      %v601 = vld [vmem:[%s2] sm:$0xf]
      %v603 = vsel %vm445, %v537, 0
      %v606 = vsel %vm445, %v538, 0
      %v609 = vsel %vm445, %v539, 0
      %v612 = vsel %vm445, %v540, 0
      %v615 = vsel %vm445, %v541, 0
      %v618 = vsel %vm445, %v542, 0
      %v621 = vsel %vm445, %v543, 0
      %v624 = vsel %vm445, %v544, 0
      %v627 = vsel %vm445, %v545, 0
      %v630 = vsel %vm445, %v546, 0
      %v633 = vsel %vm445, %v547, 0
      %v636 = vsel %vm445, %v548, 0
      %v639 = vsel %vm445, %v549, 0
      %v642 = vsel %vm445, %v550, 0
      %v645 = vsel %vm445, %v551, 0
      %v648 = vsel %vm445, %v552, 0
      %v651 = vsel %vm445, %v553, 0
      %v654 = vsel %vm445, %v554, 0
      %v657 = vsel %vm445, %v555, 0
      %v660 = vsel %vm445, %v556, 0
      %v663 = vsel %vm445, %v557, 0
      %v666 = vsel %vm445, %v558, 0
      %v669 = vsel %vm445, %v559, 0
      %v672 = vsel %vm445, %v560, 0
      %v675 = vsel %vm445, %v561, 0
      %v678 = vsel %vm445, %v562, 0
      %v681 = vsel %vm445, %v563, 0
      %v684 = vsel %vm445, %v564, 0
      %v687 = vsel %vm445, %v565, 0
      %v690 = vsel %vm445, %v566, 0
      %v693 = vsel %vm445, %v567, 0
      %v696 = vsel %vm445, %v568, 0
      %vm698 = vcmask 1043456
      %v700 = vsel %vm698, %v601, 0
      %702 = vmatpush.msra.mxu0 0.0
      %703 = vmatpush.msra.mxu0 0.0
      %704 = vmatpush.msra.mxu0 0.0
      %705 = vmatpush.msra.mxu0 0.0
      %706 = vmatpush.msra.mxu0 0.0
      %707 = vmatpush.msra.mxu0 0.0
      %708 = vmatpush.msra.mxu0 0.0
      %709 = vmatpush.msra.mxu0 0.0
      %710 = vmatpush.msra.mxu0 0.0
      %711 = vmatpush.msra.mxu0 0.0
      %712 = vmatpush.msra.mxu0 0.0
      %713 = vmatpush.msra.mxu0 0.0
      %714 = vmatpush.msra.mxu0 0.0
      %715 = vmatpush.msra.mxu0 0.0
      %716 = vmatpush.msra.mxu0 0.0
      %717 = vmatpush.msra.mxu0 %v700
      %718 = vmatmul.f32.gmra.mxu0 %v603
      %v719 = vpop.f32.mrf.mxu0
      %v720 = vadd.f32 0.0, %v719
      %721 = vmatmul.f32.gmra.mxu0 %v606
      %v722 = vpop.f32.mrf.mxu0
      %v723 = vadd.f32 0.0, %v722
      %724 = vmatmul.f32.gmra.mxu0 %v609
      %v725 = vpop.f32.mrf.mxu0
      %v726 = vadd.f32 0.0, %v725
      %727 = vmatmul.f32.gmra.mxu0 %v612
      %v728 = vpop.f32.mrf.mxu0
      %v729 = vadd.f32 0.0, %v728
      %730 = vmatmul.f32.gmra.mxu0 %v615
      %v731 = vpop.f32.mrf.mxu0
      %v732 = vadd.f32 0.0, %v731
      %733 = vmatmul.f32.gmra.mxu0 %v618
      %v734 = vpop.f32.mrf.mxu0
      %v735 = vadd.f32 0.0, %v734
      %736 = vmatmul.f32.gmra.mxu0 %v621
      %v737 = vpop.f32.mrf.mxu0
      %v738 = vadd.f32 0.0, %v737
      %739 = vmatmul.f32.gmra.mxu0 %v624
      %v740 = vpop.f32.mrf.mxu0
      %v741 = vadd.f32 0.0, %v740
      %742 = vmatmul.f32.gmra.mxu0 %v627
      %v743 = vpop.f32.mrf.mxu0
      %v744 = vadd.f32 0.0, %v743
      %745 = vmatmul.f32.gmra.mxu0 %v630
      %v746 = vpop.f32.mrf.mxu0
      %v747 = vadd.f32 0.0, %v746
      %748 = vmatmul.f32.gmra.mxu0 %v633
      %v749 = vpop.f32.mrf.mxu0
      %v750 = vadd.f32 0.0, %v749
      %751 = vmatmul.f32.gmra.mxu0 %v636
      %v752 = vpop.f32.mrf.mxu0
      %v753 = vadd.f32 0.0, %v752
      %754 = vmatmul.f32.gmra.mxu0 %v639
      %v755 = vpop.f32.mrf.mxu0
      %v756 = vadd.f32 0.0, %v755
      %757 = vmatmul.f32.gmra.mxu0 %v642
      %v758 = vpop.f32.mrf.mxu0
      %v759 = vadd.f32 0.0, %v758
      %760 = vmatmul.f32.gmra.mxu0 %v645
      %v761 = vpop.f32.mrf.mxu0
      %v762 = vadd.f32 0.0, %v761
      %763 = vmatmul.f32.gmra.mxu0 %v648
      %v764 = vpop.f32.mrf.mxu0
      %v765 = vadd.f32 0.0, %v764
      %766 = vmatmul.f32.gmra.mxu0 %v651
      %v767 = vpop.f32.mrf.mxu0
      %v768 = vadd.f32 0.0, %v767
      %769 = vmatmul.f32.gmra.mxu0 %v654
      %v770 = vpop.f32.mrf.mxu0
      %v771 = vadd.f32 0.0, %v770
      %772 = vmatmul.f32.gmra.mxu0 %v657
      %v773 = vpop.f32.mrf.mxu0
      %v774 = vadd.f32 0.0, %v773
      %775 = vmatmul.f32.gmra.mxu0 %v660
      %v776 = vpop.f32.mrf.mxu0
      %v777 = vadd.f32 0.0, %v776
      %778 = vmatmul.f32.gmra.mxu0 %v663
      %v779 = vpop.f32.mrf.mxu0
      %v780 = vadd.f32 0.0, %v779
      %781 = vmatmul.f32.gmra.mxu0 %v666
      %v782 = vpop.f32.mrf.mxu0
      %v783 = vadd.f32 0.0, %v782
      %784 = vmatmul.f32.gmra.mxu0 %v669
      %v785 = vpop.f32.mrf.mxu0
      %v786 = vadd.f32 0.0, %v785
      %787 = vmatmul.f32.gmra.mxu0 %v672
      %v788 = vpop.f32.mrf.mxu0
      %v789 = vadd.f32 0.0, %v788
      %790 = vmatmul.f32.gmra.mxu0 %v675
      %v791 = vpop.f32.mrf.mxu0
      %v792 = vadd.f32 0.0, %v791
      %793 = vmatmul.f32.gmra.mxu0 %v678
      %v794 = vpop.f32.mrf.mxu0
      %v795 = vadd.f32 0.0, %v794
      %796 = vmatmul.f32.gmra.mxu0 %v681
      %v797 = vpop.f32.mrf.mxu0
      %v798 = vadd.f32 0.0, %v797
      %799 = vmatmul.f32.gmra.mxu0 %v684
      %v800 = vpop.f32.mrf.mxu0
      %v801 = vadd.f32 0.0, %v800
      %802 = vmatmul.f32.gmra.mxu0 %v687
      %v803 = vpop.f32.mrf.mxu0
      %v804 = vadd.f32 0.0, %v803
      %805 = vmatmul.f32.gmra.mxu0 %v690
      %v806 = vpop.f32.mrf.mxu0
      %v807 = vadd.f32 0.0, %v806
      %808 = vmatmul.f32.gmra.mxu0 %v693
      %v809 = vpop.f32.mrf.mxu0
      %v810 = vadd.f32 0.0, %v809
      %811 = vmatmul.f32.gmra.mxu0 %v696
      %v812 = vpop.f32.mrf.mxu0
      %v813 = vadd.f32 0.0, %v812
      %814 = vdwg.mxu0
      %v815 = vadd.f32 %v569, %v720
      %v816 = vadd.f32 %v570, %v723
      %v817 = vadd.f32 %v571, %v726
      %v818 = vadd.f32 %v572, %v729
      %v819 = vadd.f32 %v573, %v732
      %v820 = vadd.f32 %v574, %v735
      %v821 = vadd.f32 %v575, %v738
      %v822 = vadd.f32 %v576, %v741
      %v823 = vadd.f32 %v577, %v744
      %v824 = vadd.f32 %v578, %v747
      %v825 = vadd.f32 %v579, %v750
      %v826 = vadd.f32 %v580, %v753
      %v827 = vadd.f32 %v581, %v756
      %v828 = vadd.f32 %v582, %v759
      %v829 = vadd.f32 %v583, %v762
      %v830 = vadd.f32 %v584, %v765
      %v831 = vadd.f32 %v585, %v768
      %v832 = vadd.f32 %v586, %v771
      %v833 = vadd.f32 %v587, %v774
      %v834 = vadd.f32 %v588, %v777
      %v835 = vadd.f32 %v589, %v780
      %v836 = vadd.f32 %v590, %v783
      %v837 = vadd.f32 %v591, %v786
      %v838 = vadd.f32 %v592, %v789
      %v839 = vadd.f32 %v593, %v792
      %v840 = vadd.f32 %v594, %v795
      %v841 = vadd.f32 %v595, %v798
      %v842 = vadd.f32 %v596, %v801
      %v843 = vadd.f32 %v597, %v804
      %v844 = vadd.f32 %v598, %v807
      %v845 = vadd.f32 %v599, %v810
      %v846 = vadd.f32 %v600, %v813
      %847 = vst [vmem:[#allocation3] sm:$0xff] %v815
      %848 = vst [vmem:[#allocation3 + $0x8] sm:$0xff] %v816
      %849 = vst [vmem:[#allocation3 + $0x10] sm:$0xff] %v817
      %850 = vst [vmem:[#allocation3 + $0x18] sm:$0xff] %v818
      %851 = vst [vmem:[#allocation3 + $0x20] sm:$0xff] %v819
      %852 = vst [vmem:[#allocation3 + $0x28] sm:$0xff] %v820
      %853 = vst [vmem:[#allocation3 + $0x30] sm:$0xff] %v821
      %854 = vst [vmem:[#allocation3 + $0x38] sm:$0xff] %v822
      %855 = vst [vmem:[#allocation3 + $0x40] sm:$0xff] %v823
      %856 = vst [vmem:[#allocation3 + $0x48] sm:$0xff] %v824
      %857 = vst [vmem:[#allocation3 + $0x50] sm:$0xff] %v825
      %858 = vst [vmem:[#allocation3 + $0x58] sm:$0xff] %v826
      %859 = vst [vmem:[#allocation3 + $0x60] sm:$0xff] %v827
      %860 = vst [vmem:[#allocation3 + $0x68] sm:$0xff] %v828
      %861 = vst [vmem:[#allocation3 + $0x70] sm:$0xff] %v829
      %862 = vst [vmem:[#allocation3 + $0x78] sm:$0xff] %v830
      %863 = vst [vmem:[#allocation3 + $0x80] sm:$0xff] %v831
      %864 = vst [vmem:[#allocation3 + $0x88] sm:$0xff] %v832
      %865 = vst [vmem:[#allocation3 + $0x90] sm:$0xff] %v833
      %866 = vst [vmem:[#allocation3 + $0x98] sm:$0xff] %v834
      %867 = vst [vmem:[#allocation3 + $0xa0] sm:$0xff] %v835
      %868 = vst [vmem:[#allocation3 + $0xa8] sm:$0xff] %v836
      %869 = vst [vmem:[#allocation3 + $0xb0] sm:$0xff] %v837
      %870 = vst [vmem:[#allocation3 + $0xb8] sm:$0xff] %v838
      %871 = vst [vmem:[#allocation3 + $0xc0] sm:$0xff] %v839
      %872 = vst [vmem:[#allocation3 + $0xc8] sm:$0xff] %v840
      %873 = vst [vmem:[#allocation3 + $0xd0] sm:$0xff] %v841
      %874 = vst [vmem:[#allocation3 + $0xd8] sm:$0xff] %v842
      %875 = vst [vmem:[#allocation3 + $0xe0] sm:$0xff] %v843
      %876 = vst [vmem:[#allocation3 + $0xe8] sm:$0xff] %v844
      %877 = vst [vmem:[#allocation3 + $0xf0] sm:$0xff] %v845
      %878 = vst [vmem:[#allocation3 + $0xf8] sm:$0xff] %v846
      %v879 = vld [vmem:[#allocation2 + $0x1] sm:$0xff]
      %v880 = vld [vmem:[#allocation2 + $0x9] sm:$0xff]
      %v881 = vld [vmem:[#allocation2 + $0x19] sm:$0xff]
      %v882 = vld [vmem:[#allocation2 + $0x21] sm:$0xff]
      %v883 = vld [vmem:[#allocation2 + $0x31] sm:$0xff]
      %v884 = vld [vmem:[#allocation2 + $0x39] sm:$0xff]
      %v885 = vld [vmem:[#allocation2 + $0x49] sm:$0xff]
      %v886 = vld [vmem:[#allocation2 + $0x51] sm:$0xff]
      %v887 = vld [vmem:[#allocation2 + $0x61] sm:$0xff]
      %v888 = vld [vmem:[#allocation2 + $0x69] sm:$0xff]
      %v889 = vld [vmem:[#allocation2 + $0x79] sm:$0xff]
      %v890 = vld [vmem:[#allocation2 + $0x81] sm:$0xff]
      %v891 = vld [vmem:[#allocation2 + $0x91] sm:$0xff]
      %v892 = vld [vmem:[#allocation2 + $0x99] sm:$0xff]
      %v893 = vld [vmem:[#allocation2 + $0xa9] sm:$0xff]
      %v894 = vld [vmem:[#allocation2 + $0xb1] sm:$0xff]
      %v895 = vld [vmem:[#allocation2 + $0xc1] sm:$0xff]
      %v896 = vld [vmem:[#allocation2 + $0xc9] sm:$0xff]
      %v897 = vld [vmem:[#allocation2 + $0xd9] sm:$0xff]
      %v898 = vld [vmem:[#allocation2 + $0xe1] sm:$0xff]
      %v899 = vld [vmem:[#allocation2 + $0xf1] sm:$0xff]
      %v900 = vld [vmem:[#allocation2 + $0xf9] sm:$0xff]
      %v901 = vld [vmem:[#allocation2 + $0x109] sm:$0xff]
      %v902 = vld [vmem:[#allocation2 + $0x111] sm:$0xff]
      %v903 = vld [vmem:[#allocation2 + $0x121] sm:$0xff]
      %v904 = vld [vmem:[#allocation2 + $0x129] sm:$0xff]
      %v905 = vld [vmem:[#allocation2 + $0x139] sm:$0xff]
      %v906 = vld [vmem:[#allocation2 + $0x141] sm:$0xff]
      %v907 = vld [vmem:[#allocation2 + $0x151] sm:$0xff]
      %v908 = vld [vmem:[#allocation2 + $0x159] sm:$0xff]
      %v909 = vld [vmem:[#allocation2 + $0x169] sm:$0xff]
      %v910 = vld [vmem:[#allocation2 + $0x171] sm:$0xff]
      %v911 = vld [vmem:[#allocation3] sm:$0xff]
      %v912 = vld [vmem:[#allocation3 + $0x8] sm:$0xff]
      %v913 = vld [vmem:[#allocation3 + $0x10] sm:$0xff]
      %v914 = vld [vmem:[#allocation3 + $0x18] sm:$0xff]
      %v915 = vld [vmem:[#allocation3 + $0x20] sm:$0xff]
      %v916 = vld [vmem:[#allocation3 + $0x28] sm:$0xff]
      %v917 = vld [vmem:[#allocation3 + $0x30] sm:$0xff]
      %v918 = vld [vmem:[#allocation3 + $0x38] sm:$0xff]
      %v919 = vld [vmem:[#allocation3 + $0x40] sm:$0xff]
      %v920 = vld [vmem:[#allocation3 + $0x48] sm:$0xff]
      %v921 = vld [vmem:[#allocation3 + $0x50] sm:$0xff]
      %v922 = vld [vmem:[#allocation3 + $0x58] sm:$0xff]
      %v923 = vld [vmem:[#allocation3 + $0x60] sm:$0xff]
      %v924 = vld [vmem:[#allocation3 + $0x68] sm:$0xff]
      %v925 = vld [vmem:[#allocation3 + $0x70] sm:$0xff]
      %v926 = vld [vmem:[#allocation3 + $0x78] sm:$0xff]
      %v927 = vld [vmem:[#allocation3 + $0x80] sm:$0xff]
      %v928 = vld [vmem:[#allocation3 + $0x88] sm:$0xff]
      %v929 = vld [vmem:[#allocation3 + $0x90] sm:$0xff]
      %v930 = vld [vmem:[#allocation3 + $0x98] sm:$0xff]
      %v931 = vld [vmem:[#allocation3 + $0xa0] sm:$0xff]
      %v932 = vld [vmem:[#allocation3 + $0xa8] sm:$0xff]
      %v933 = vld [vmem:[#allocation3 + $0xb0] sm:$0xff]
      %v934 = vld [vmem:[#allocation3 + $0xb8] sm:$0xff]
      %v935 = vld [vmem:[#allocation3 + $0xc0] sm:$0xff]
      %v936 = vld [vmem:[#allocation3 + $0xc8] sm:$0xff]
      %v937 = vld [vmem:[#allocation3 + $0xd0] sm:$0xff]
      %v938 = vld [vmem:[#allocation3 + $0xd8] sm:$0xff]
      %v939 = vld [vmem:[#allocation3 + $0xe0] sm:$0xff]
      %v940 = vld [vmem:[#allocation3 + $0xe8] sm:$0xff]
      %v941 = vld [vmem:[#allocation3 + $0xf0] sm:$0xff]
      %v942 = vld [vmem:[#allocation3 + $0xf8] sm:$0xff]
      %s943 = scalar_lea.vmem %s2, 4
      %v944 = vld [vmem:[%s943] sm:$0xf]
      %v946 = vsel %vm445, %v879, 0
      %v949 = vsel %vm445, %v880, 0
      %v952 = vsel %vm445, %v881, 0
      %v955 = vsel %vm445, %v882, 0
      %v958 = vsel %vm445, %v883, 0
      %v961 = vsel %vm445, %v884, 0
      %v964 = vsel %vm445, %v885, 0
      %v967 = vsel %vm445, %v886, 0
      %v970 = vsel %vm445, %v887, 0
      %v973 = vsel %vm445, %v888, 0
      %v976 = vsel %vm445, %v889, 0
      %v979 = vsel %vm445, %v890, 0
      %v982 = vsel %vm445, %v891, 0
      %v985 = vsel %vm445, %v892, 0
      %v988 = vsel %vm445, %v893, 0
      %v991 = vsel %vm445, %v894, 0
      %v994 = vsel %vm445, %v895, 0
      %v997 = vsel %vm445, %v896, 0
      %v1000 = vsel %vm445, %v897, 0
      %v1003 = vsel %vm445, %v898, 0
      %v1006 = vsel %vm445, %v899, 0
      %v1009 = vsel %vm445, %v900, 0
      %v1012 = vsel %vm445, %v901, 0
      %v1015 = vsel %vm445, %v902, 0
      %v1018 = vsel %vm445, %v903, 0
      %v1021 = vsel %vm445, %v904, 0
      %v1024 = vsel %vm445, %v905, 0
      %v1027 = vsel %vm445, %v906, 0
      %v1030 = vsel %vm445, %v907, 0
      %v1033 = vsel %vm445, %v908, 0
      %v1036 = vsel %vm445, %v909, 0
      %v1039 = vsel %vm445, %v910, 0
      %v1042 = vsel %vm698, %v944, 0
      %1044 = vmatpush.msra.mxu0 0.0
      %1045 = vmatpush.msra.mxu0 0.0
      %1046 = vmatpush.msra.mxu0 0.0
      %1047 = vmatpush.msra.mxu0 0.0
      %1048 = vmatpush.msra.mxu0 0.0
      %1049 = vmatpush.msra.mxu0 0.0
      %1050 = vmatpush.msra.mxu0 0.0
      %1051 = vmatpush.msra.mxu0 0.0
      %1052 = vmatpush.msra.mxu0 0.0
      %1053 = vmatpush.msra.mxu0 0.0
      %1054 = vmatpush.msra.mxu0 0.0
      %1055 = vmatpush.msra.mxu0 0.0
      %1056 = vmatpush.msra.mxu0 0.0
      %1057 = vmatpush.msra.mxu0 0.0
      %1058 = vmatpush.msra.mxu0 0.0
      %1059 = vmatpush.msra.mxu0 %v1042
      %1060 = vmatmul.f32.gmra.mxu0 %v946
      %v1061 = vpop.f32.mrf.mxu0
      %v1062 = vadd.f32 0.0, %v1061
      %1063 = vmatmul.f32.gmra.mxu0 %v949
      %v1064 = vpop.f32.mrf.mxu0
      %v1065 = vadd.f32 0.0, %v1064
      %1066 = vmatmul.f32.gmra.mxu0 %v952
      %v1067 = vpop.f32.mrf.mxu0
      %v1068 = vadd.f32 0.0, %v1067
      %1069 = vmatmul.f32.gmra.mxu0 %v955
      %v1070 = vpop.f32.mrf.mxu0
      %v1071 = vadd.f32 0.0, %v1070
      %1072 = vmatmul.f32.gmra.mxu0 %v958
      %v1073 = vpop.f32.mrf.mxu0
      %v1074 = vadd.f32 0.0, %v1073
      %1075 = vmatmul.f32.gmra.mxu0 %v961
      %v1076 = vpop.f32.mrf.mxu0
      %v1077 = vadd.f32 0.0, %v1076
      %1078 = vmatmul.f32.gmra.mxu0 %v964
      %v1079 = vpop.f32.mrf.mxu0
      %v1080 = vadd.f32 0.0, %v1079
      %1081 = vmatmul.f32.gmra.mxu0 %v967
      %v1082 = vpop.f32.mrf.mxu0
      %v1083 = vadd.f32 0.0, %v1082
      %1084 = vmatmul.f32.gmra.mxu0 %v970
      %v1085 = vpop.f32.mrf.mxu0
      %v1086 = vadd.f32 0.0, %v1085
      %1087 = vmatmul.f32.gmra.mxu0 %v973
      %v1088 = vpop.f32.mrf.mxu0
      %v1089 = vadd.f32 0.0, %v1088
      %1090 = vmatmul.f32.gmra.mxu0 %v976
      %v1091 = vpop.f32.mrf.mxu0
      %v1092 = vadd.f32 0.0, %v1091
      %1093 = vmatmul.f32.gmra.mxu0 %v979
      %v1094 = vpop.f32.mrf.mxu0
      %v1095 = vadd.f32 0.0, %v1094
      %1096 = vmatmul.f32.gmra.mxu0 %v982
      %v1097 = vpop.f32.mrf.mxu0
      %v1098 = vadd.f32 0.0, %v1097
      %1099 = vmatmul.f32.gmra.mxu0 %v985
      %v1100 = vpop.f32.mrf.mxu0
      %v1101 = vadd.f32 0.0, %v1100
      %1102 = vmatmul.f32.gmra.mxu0 %v988
      %v1103 = vpop.f32.mrf.mxu0
      %v1104 = vadd.f32 0.0, %v1103
      %1105 = vmatmul.f32.gmra.mxu0 %v991
      %v1106 = vpop.f32.mrf.mxu0
      %v1107 = vadd.f32 0.0, %v1106
      %1108 = vmatmul.f32.gmra.mxu0 %v994
      %v1109 = vpop.f32.mrf.mxu0
      %v1110 = vadd.f32 0.0, %v1109
      %1111 = vmatmul.f32.gmra.mxu0 %v997
      %v1112 = vpop.f32.mrf.mxu0
      %v1113 = vadd.f32 0.0, %v1112
      %1114 = vmatmul.f32.gmra.mxu0 %v1000
      %v1115 = vpop.f32.mrf.mxu0
      %v1116 = vadd.f32 0.0, %v1115
      %1117 = vmatmul.f32.gmra.mxu0 %v1003
      %v1118 = vpop.f32.mrf.mxu0
      %v1119 = vadd.f32 0.0, %v1118
      %1120 = vmatmul.f32.gmra.mxu0 %v1006
      %v1121 = vpop.f32.mrf.mxu0
      %v1122 = vadd.f32 0.0, %v1121
      %1123 = vmatmul.f32.gmra.mxu0 %v1009
      %v1124 = vpop.f32.mrf.mxu0
      %v1125 = vadd.f32 0.0, %v1124
      %1126 = vmatmul.f32.gmra.mxu0 %v1012
      %v1127 = vpop.f32.mrf.mxu0
      %v1128 = vadd.f32 0.0, %v1127
      %1129 = vmatmul.f32.gmra.mxu0 %v1015
      %v1130 = vpop.f32.mrf.mxu0
      %v1131 = vadd.f32 0.0, %v1130
      %1132 = vmatmul.f32.gmra.mxu0 %v1018
      %v1133 = vpop.f32.mrf.mxu0
      %v1134 = vadd.f32 0.0, %v1133
      %1135 = vmatmul.f32.gmra.mxu0 %v1021
      %v1136 = vpop.f32.mrf.mxu0
      %v1137 = vadd.f32 0.0, %v1136
      %1138 = vmatmul.f32.gmra.mxu0 %v1024
      %v1139 = vpop.f32.mrf.mxu0
      %v1140 = vadd.f32 0.0, %v1139
      %1141 = vmatmul.f32.gmra.mxu0 %v1027
      %v1142 = vpop.f32.mrf.mxu0
      %v1143 = vadd.f32 0.0, %v1142
      %1144 = vmatmul.f32.gmra.mxu0 %v1030
      %v1145 = vpop.f32.mrf.mxu0
      %v1146 = vadd.f32 0.0, %v1145
      %1147 = vmatmul.f32.gmra.mxu0 %v1033
      %v1148 = vpop.f32.mrf.mxu0
      %v1149 = vadd.f32 0.0, %v1148
      %1150 = vmatmul.f32.gmra.mxu0 %v1036
      %v1151 = vpop.f32.mrf.mxu0
      %v1152 = vadd.f32 0.0, %v1151
      %1153 = vmatmul.f32.gmra.mxu0 %v1039
      %v1154 = vpop.f32.mrf.mxu0
      %v1155 = vadd.f32 0.0, %v1154
      %1156 = vdwg.mxu0
      %v1157 = vadd.f32 %v911, %v1062
      %v1158 = vadd.f32 %v912, %v1065
      %v1159 = vadd.f32 %v913, %v1068
      %v1160 = vadd.f32 %v914, %v1071
      %v1161 = vadd.f32 %v915, %v1074
      %v1162 = vadd.f32 %v916, %v1077
      %v1163 = vadd.f32 %v917, %v1080
      %v1164 = vadd.f32 %v918, %v1083
      %v1165 = vadd.f32 %v919, %v1086
      %v1166 = vadd.f32 %v920, %v1089
      %v1167 = vadd.f32 %v921, %v1092
      %v1168 = vadd.f32 %v922, %v1095
      %v1169 = vadd.f32 %v923, %v1098
      %v1170 = vadd.f32 %v924, %v1101
      %v1171 = vadd.f32 %v925, %v1104
      %v1172 = vadd.f32 %v926, %v1107
      %v1173 = vadd.f32 %v927, %v1110
      %v1174 = vadd.f32 %v928, %v1113
      %v1175 = vadd.f32 %v929, %v1116
      %v1176 = vadd.f32 %v930, %v1119
      %v1177 = vadd.f32 %v931, %v1122
      %v1178 = vadd.f32 %v932, %v1125
      %v1179 = vadd.f32 %v933, %v1128
      %v1180 = vadd.f32 %v934, %v1131
      %v1181 = vadd.f32 %v935, %v1134
      %v1182 = vadd.f32 %v936, %v1137
      %v1183 = vadd.f32 %v937, %v1140
      %v1184 = vadd.f32 %v938, %v1143
      %v1185 = vadd.f32 %v939, %v1146
      %v1186 = vadd.f32 %v940, %v1149
      %v1187 = vadd.f32 %v941, %v1152
      %v1188 = vadd.f32 %v942, %v1155
      %1189 = vst [vmem:[#allocation3] sm:$0xff] %v1157
      %1190 = vst [vmem:[#allocation3 + $0x8] sm:$0xff] %v1158
      %1191 = vst [vmem:[#allocation3 + $0x10] sm:$0xff] %v1159
      %1192 = vst [vmem:[#allocation3 + $0x18] sm:$0xff] %v1160
      %1193 = vst [vmem:[#allocation3 + $0x20] sm:$0xff] %v1161
      %1194 = vst [vmem:[#allocation3 + $0x28] sm:$0xff] %v1162
      %1195 = vst [vmem:[#allocation3 + $0x30] sm:$0xff] %v1163
      %1196 = vst [vmem:[#allocation3 + $0x38] sm:$0xff] %v1164
      %1197 = vst [vmem:[#allocation3 + $0x40] sm:$0xff] %v1165
      %1198 = vst [vmem:[#allocation3 + $0x48] sm:$0xff] %v1166
      %1199 = vst [vmem:[#allocation3 + $0x50] sm:$0xff] %v1167
      %1200 = vst [vmem:[#allocation3 + $0x58] sm:$0xff] %v1168
      %1201 = vst [vmem:[#allocation3 + $0x60] sm:$0xff] %v1169
      %1202 = vst [vmem:[#allocation3 + $0x68] sm:$0xff] %v1170
      %1203 = vst [vmem:[#allocation3 + $0x70] sm:$0xff] %v1171
      %1204 = vst [vmem:[#allocation3 + $0x78] sm:$0xff] %v1172
      %1205 = vst [vmem:[#allocation3 + $0x80] sm:$0xff] %v1173
      %1206 = vst [vmem:[#allocation3 + $0x88] sm:$0xff] %v1174
      %1207 = vst [vmem:[#allocation3 + $0x90] sm:$0xff] %v1175
      %1208 = vst [vmem:[#allocation3 + $0x98] sm:$0xff] %v1176
      %1209 = vst [vmem:[#allocation3 + $0xa0] sm:$0xff] %v1177
      %1210 = vst [vmem:[#allocation3 + $0xa8] sm:$0xff] %v1178
      %1211 = vst [vmem:[#allocation3 + $0xb0] sm:$0xff] %v1179
      %1212 = vst [vmem:[#allocation3 + $0xb8] sm:$0xff] %v1180
      %1213 = vst [vmem:[#allocation3 + $0xc0] sm:$0xff] %v1181
      %1214 = vst [vmem:[#allocation3 + $0xc8] sm:$0xff] %v1182
      %1215 = vst [vmem:[#allocation3 + $0xd0] sm:$0xff] %v1183
      %1216 = vst [vmem:[#allocation3 + $0xd8] sm:$0xff] %v1184
      %1217 = vst [vmem:[#allocation3 + $0xe0] sm:$0xff] %v1185
      %1218 = vst [vmem:[#allocation3 + $0xe8] sm:$0xff] %v1186
      %1219 = vst [vmem:[#allocation3 + $0xf0] sm:$0xff] %v1187
      %1220 = vst [vmem:[#allocation3 + $0xf8] sm:$0xff] %v1188
      %v1221 = vld [vmem:[#allocation2 + $0x2] sm:$0xff]
      %v1222 = vld [vmem:[#allocation2 + $0xa] sm:$0xff]
      %v1223 = vld [vmem:[#allocation2 + $0x1a] sm:$0xff]
      %v1224 = vld [vmem:[#allocation2 + $0x22] sm:$0xff]
      %v1225 = vld [vmem:[#allocation2 + $0x32] sm:$0xff]
      %v1226 = vld [vmem:[#allocation2 + $0x3a] sm:$0xff]
      %v1227 = vld [vmem:[#allocation2 + $0x4a] sm:$0xff]
      %v1228 = vld [vmem:[#allocation2 + $0x52] sm:$0xff]
      %v1229 = vld [vmem:[#allocation2 + $0x62] sm:$0xff]
      %v1230 = vld [vmem:[#allocation2 + $0x6a] sm:$0xff]
      %v1231 = vld [vmem:[#allocation2 + $0x7a] sm:$0xff]
      %v1232 = vld [vmem:[#allocation2 + $0x82] sm:$0xff]
      %v1233 = vld [vmem:[#allocation2 + $0x92] sm:$0xff]
      %v1234 = vld [vmem:[#allocation2 + $0x9a] sm:$0xff]
      %v1235 = vld [vmem:[#allocation2 + $0xaa] sm:$0xff]
      %v1236 = vld [vmem:[#allocation2 + $0xb2] sm:$0xff]
      %v1237 = vld [vmem:[#allocation2 + $0xc2] sm:$0xff]
      %v1238 = vld [vmem:[#allocation2 + $0xca] sm:$0xff]
      %v1239 = vld [vmem:[#allocation2 + $0xda] sm:$0xff]
      %v1240 = vld [vmem:[#allocation2 + $0xe2] sm:$0xff]
      %v1241 = vld [vmem:[#allocation2 + $0xf2] sm:$0xff]
      %v1242 = vld [vmem:[#allocation2 + $0xfa] sm:$0xff]
      %v1243 = vld [vmem:[#allocation2 + $0x10a] sm:$0xff]
      %v1244 = vld [vmem:[#allocation2 + $0x112] sm:$0xff]
      %v1245 = vld [vmem:[#allocation2 + $0x122] sm:$0xff]
      %v1246 = vld [vmem:[#allocation2 + $0x12a] sm:$0xff]
      %v1247 = vld [vmem:[#allocation2 + $0x13a] sm:$0xff]
      %v1248 = vld [vmem:[#allocation2 + $0x142] sm:$0xff]
      %v1249 = vld [vmem:[#allocation2 + $0x152] sm:$0xff]
      %v1250 = vld [vmem:[#allocation2 + $0x15a] sm:$0xff]
      %v1251 = vld [vmem:[#allocation2 + $0x16a] sm:$0xff]
      %v1252 = vld [vmem:[#allocation2 + $0x172] sm:$0xff]
      %v1253 = vld [vmem:[#allocation3] sm:$0xff]
      %v1254 = vld [vmem:[#allocation3 + $0x8] sm:$0xff]
      %v1255 = vld [vmem:[#allocation3 + $0x10] sm:$0xff]
      %v1256 = vld [vmem:[#allocation3 + $0x18] sm:$0xff]
      %v1257 = vld [vmem:[#allocation3 + $0x20] sm:$0xff]
      %v1258 = vld [vmem:[#allocation3 + $0x28] sm:$0xff]
      %v1259 = vld [vmem:[#allocation3 + $0x30] sm:$0xff]
      %v1260 = vld [vmem:[#allocation3 + $0x38] sm:$0xff]
      %v1261 = vld [vmem:[#allocation3 + $0x40] sm:$0xff]
      %v1262 = vld [vmem:[#allocation3 + $0x48] sm:$0xff]
      %v1263 = vld [vmem:[#allocation3 + $0x50] sm:$0xff]
      %v1264 = vld [vmem:[#allocation3 + $0x58] sm:$0xff]
      %v1265 = vld [vmem:[#allocation3 + $0x60] sm:$0xff]
      %v1266 = vld [vmem:[#allocation3 + $0x68] sm:$0xff]
      %v1267 = vld [vmem:[#allocation3 + $0x70] sm:$0xff]
      %v1268 = vld [vmem:[#allocation3 + $0x78] sm:$0xff]
      %v1269 = vld [vmem:[#allocation3 + $0x80] sm:$0xff]
      %v1270 = vld [vmem:[#allocation3 + $0x88] sm:$0xff]
      %v1271 = vld [vmem:[#allocation3 + $0x90] sm:$0xff]
      %v1272 = vld [vmem:[#allocation3 + $0x98] sm:$0xff]
      %v1273 = vld [vmem:[#allocation3 + $0xa0] sm:$0xff]
      %v1274 = vld [vmem:[#allocation3 + $0xa8] sm:$0xff]
      %v1275 = vld [vmem:[#allocation3 + $0xb0] sm:$0xff]
      %v1276 = vld [vmem:[#allocation3 + $0xb8] sm:$0xff]
      %v1277 = vld [vmem:[#allocation3 + $0xc0] sm:$0xff]
      %v1278 = vld [vmem:[#allocation3 + $0xc8] sm:$0xff]
      %v1279 = vld [vmem:[#allocation3 + $0xd0] sm:$0xff]
      %v1280 = vld [vmem:[#allocation3 + $0xd8] sm:$0xff]
      %v1281 = vld [vmem:[#allocation3 + $0xe0] sm:$0xff]
      %v1282 = vld [vmem:[#allocation3 + $0xe8] sm:$0xff]
      %v1283 = vld [vmem:[#allocation3 + $0xf0] sm:$0xff]
      %v1284 = vld [vmem:[#allocation3 + $0xf8] sm:$0xff]
      %s1285 = scalar_lea.vmem %s2, 8
      %v1286 = vld [vmem:[%s1285] sm:$0xf]
      %v1288 = vsel %vm445, %v1221, 0
      %v1291 = vsel %vm445, %v1222, 0
      %v1294 = vsel %vm445, %v1223, 0
      %v1297 = vsel %vm445, %v1224, 0
      %v1300 = vsel %vm445, %v1225, 0
      %v1303 = vsel %vm445, %v1226, 0
      %v1306 = vsel %vm445, %v1227, 0
      %v1309 = vsel %vm445, %v1228, 0
      %v1312 = vsel %vm445, %v1229, 0
      %v1315 = vsel %vm445, %v1230, 0
      %v1318 = vsel %vm445, %v1231, 0
      %v1321 = vsel %vm445, %v1232, 0
      %v1324 = vsel %vm445, %v1233, 0
      %v1327 = vsel %vm445, %v1234, 0
      %v1330 = vsel %vm445, %v1235, 0
      %v1333 = vsel %vm445, %v1236, 0
      %v1336 = vsel %vm445, %v1237, 0
      %v1339 = vsel %vm445, %v1238, 0
      %v1342 = vsel %vm445, %v1239, 0
      %v1345 = vsel %vm445, %v1240, 0
      %v1348 = vsel %vm445, %v1241, 0
      %v1351 = vsel %vm445, %v1242, 0
      %v1354 = vsel %vm445, %v1243, 0
      %v1357 = vsel %vm445, %v1244, 0
      %v1360 = vsel %vm445, %v1245, 0
      %v1363 = vsel %vm445, %v1246, 0
      %v1366 = vsel %vm445, %v1247, 0
      %v1369 = vsel %vm445, %v1248, 0
      %v1372 = vsel %vm445, %v1249, 0
      %v1375 = vsel %vm445, %v1250, 0
      %v1378 = vsel %vm445, %v1251, 0
      %v1381 = vsel %vm445, %v1252, 0
      %v1384 = vsel %vm698, %v1286, 0
      %1386 = vmatpush.msra.mxu0 0.0
      %1387 = vmatpush.msra.mxu0 0.0
      %1388 = vmatpush.msra.mxu0 0.0
      %1389 = vmatpush.msra.mxu0 0.0
      %1390 = vmatpush.msra.mxu0 0.0
      %1391 = vmatpush.msra.mxu0 0.0
      %1392 = vmatpush.msra.mxu0 0.0
      %1393 = vmatpush.msra.mxu0 0.0
      %1394 = vmatpush.msra.mxu0 0.0
      %1395 = vmatpush.msra.mxu0 0.0
      %1396 = vmatpush.msra.mxu0 0.0
      %1397 = vmatpush.msra.mxu0 0.0
      %1398 = vmatpush.msra.mxu0 0.0
      %1399 = vmatpush.msra.mxu0 0.0
      %1400 = vmatpush.msra.mxu0 0.0
      %1401 = vmatpush.msra.mxu0 %v1384
      %1402 = vmatmul.f32.gmra.mxu0 %v1288
      %v1403 = vpop.f32.mrf.mxu0
      %v1404 = vadd.f32 0.0, %v1403
      %1405 = vmatmul.f32.gmra.mxu0 %v1291
      %v1406 = vpop.f32.mrf.mxu0
      %v1407 = vadd.f32 0.0, %v1406
      %1408 = vmatmul.f32.gmra.mxu0 %v1294
      %v1409 = vpop.f32.mrf.mxu0
      %v1410 = vadd.f32 0.0, %v1409
      %1411 = vmatmul.f32.gmra.mxu0 %v1297
      %v1412 = vpop.f32.mrf.mxu0
      %v1413 = vadd.f32 0.0, %v1412
      %1414 = vmatmul.f32.gmra.mxu0 %v1300
      %v1415 = vpop.f32.mrf.mxu0
      %v1416 = vadd.f32 0.0, %v1415
      %1417 = vmatmul.f32.gmra.mxu0 %v1303
      %v1418 = vpop.f32.mrf.mxu0
      %v1419 = vadd.f32 0.0, %v1418
      %1420 = vmatmul.f32.gmra.mxu0 %v1306
      %v1421 = vpop.f32.mrf.mxu0
      %v1422 = vadd.f32 0.0, %v1421
      %1423 = vmatmul.f32.gmra.mxu0 %v1309
      %v1424 = vpop.f32.mrf.mxu0
      %v1425 = vadd.f32 0.0, %v1424
      %1426 = vmatmul.f32.gmra.mxu0 %v1312
      %v1427 = vpop.f32.mrf.mxu0
      %v1428 = vadd.f32 0.0, %v1427
      %1429 = vmatmul.f32.gmra.mxu0 %v1315
      %v1430 = vpop.f32.mrf.mxu0
      %v1431 = vadd.f32 0.0, %v1430
      %1432 = vmatmul.f32.gmra.mxu0 %v1318
      %v1433 = vpop.f32.mrf.mxu0
      %v1434 = vadd.f32 0.0, %v1433
      %1435 = vmatmul.f32.gmra.mxu0 %v1321
      %v1436 = vpop.f32.mrf.mxu0
      %v1437 = vadd.f32 0.0, %v1436
      %1438 = vmatmul.f32.gmra.mxu0 %v1324
      %v1439 = vpop.f32.mrf.mxu0
      %v1440 = vadd.f32 0.0, %v1439
      %1441 = vmatmul.f32.gmra.mxu0 %v1327
      %v1442 = vpop.f32.mrf.mxu0
      %v1443 = vadd.f32 0.0, %v1442
      %1444 = vmatmul.f32.gmra.mxu0 %v1330
      %v1445 = vpop.f32.mrf.mxu0
      %v1446 = vadd.f32 0.0, %v1445
      %1447 = vmatmul.f32.gmra.mxu0 %v1333
      %v1448 = vpop.f32.mrf.mxu0
      %v1449 = vadd.f32 0.0, %v1448
      %1450 = vmatmul.f32.gmra.mxu0 %v1336
      %v1451 = vpop.f32.mrf.mxu0
      %v1452 = vadd.f32 0.0, %v1451
      %1453 = vmatmul.f32.gmra.mxu0 %v1339
      %v1454 = vpop.f32.mrf.mxu0
      %v1455 = vadd.f32 0.0, %v1454
      %1456 = vmatmul.f32.gmra.mxu0 %v1342
      %v1457 = vpop.f32.mrf.mxu0
      %v1458 = vadd.f32 0.0, %v1457
      %1459 = vmatmul.f32.gmra.mxu0 %v1345
      %v1460 = vpop.f32.mrf.mxu0
      %v1461 = vadd.f32 0.0, %v1460
      %1462 = vmatmul.f32.gmra.mxu0 %v1348
      %v1463 = vpop.f32.mrf.mxu0
      %v1464 = vadd.f32 0.0, %v1463
      %1465 = vmatmul.f32.gmra.mxu0 %v1351
      %v1466 = vpop.f32.mrf.mxu0
      %v1467 = vadd.f32 0.0, %v1466
      %1468 = vmatmul.f32.gmra.mxu0 %v1354
      %v1469 = vpop.f32.mrf.mxu0
      %v1470 = vadd.f32 0.0, %v1469
      %1471 = vmatmul.f32.gmra.mxu0 %v1357
      %v1472 = vpop.f32.mrf.mxu0
      %v1473 = vadd.f32 0.0, %v1472
      %1474 = vmatmul.f32.gmra.mxu0 %v1360
      %v1475 = vpop.f32.mrf.mxu0
      %v1476 = vadd.f32 0.0, %v1475
      %1477 = vmatmul.f32.gmra.mxu0 %v1363
      %v1478 = vpop.f32.mrf.mxu0
      %v1479 = vadd.f32 0.0, %v1478
      %1480 = vmatmul.f32.gmra.mxu0 %v1366
      %v1481 = vpop.f32.mrf.mxu0
      %v1482 = vadd.f32 0.0, %v1481
      %1483 = vmatmul.f32.gmra.mxu0 %v1369
      %v1484 = vpop.f32.mrf.mxu0
      %v1485 = vadd.f32 0.0, %v1484
      %1486 = vmatmul.f32.gmra.mxu0 %v1372
      %v1487 = vpop.f32.mrf.mxu0
      %v1488 = vadd.f32 0.0, %v1487
      %1489 = vmatmul.f32.gmra.mxu0 %v1375
      %v1490 = vpop.f32.mrf.mxu0
      %v1491 = vadd.f32 0.0, %v1490
      %1492 = vmatmul.f32.gmra.mxu0 %v1378
      %v1493 = vpop.f32.mrf.mxu0
      %v1494 = vadd.f32 0.0, %v1493
      %1495 = vmatmul.f32.gmra.mxu0 %v1381
      %v1496 = vpop.f32.mrf.mxu0
      %v1497 = vadd.f32 0.0, %v1496
      %1498 = vdwg.mxu0
      %v1499 = vadd.f32 %v1253, %v1404
      %v1500 = vadd.f32 %v1254, %v1407
      %v1501 = vadd.f32 %v1255, %v1410
      %v1502 = vadd.f32 %v1256, %v1413
      %v1503 = vadd.f32 %v1257, %v1416
      %v1504 = vadd.f32 %v1258, %v1419
      %v1505 = vadd.f32 %v1259, %v1422
      %v1506 = vadd.f32 %v1260, %v1425
      %v1507 = vadd.f32 %v1261, %v1428
      %v1508 = vadd.f32 %v1262, %v1431
      %v1509 = vadd.f32 %v1263, %v1434
      %v1510 = vadd.f32 %v1264, %v1437
      %v1511 = vadd.f32 %v1265, %v1440
      %v1512 = vadd.f32 %v1266, %v1443
      %v1513 = vadd.f32 %v1267, %v1446
      %v1514 = vadd.f32 %v1268, %v1449
      %v1515 = vadd.f32 %v1269, %v1452
      %v1516 = vadd.f32 %v1270, %v1455
      %v1517 = vadd.f32 %v1271, %v1458
      %v1518 = vadd.f32 %v1272, %v1461
      %v1519 = vadd.f32 %v1273, %v1464
      %v1520 = vadd.f32 %v1274, %v1467
      %v1521 = vadd.f32 %v1275, %v1470
      %v1522 = vadd.f32 %v1276, %v1473
      %v1523 = vadd.f32 %v1277, %v1476
      %v1524 = vadd.f32 %v1278, %v1479
      %v1525 = vadd.f32 %v1279, %v1482
      %v1526 = vadd.f32 %v1280, %v1485
      %v1527 = vadd.f32 %v1281, %v1488
      %v1528 = vadd.f32 %v1282, %v1491
      %v1529 = vadd.f32 %v1283, %v1494
      %v1530 = vadd.f32 %v1284, %v1497
      %1531 = vst [vmem:[#allocation3] sm:$0xff] %v1499
      %1532 = vst [vmem:[#allocation3 + $0x8] sm:$0xff] %v1500
      %1533 = vst [vmem:[#allocation3 + $0x10] sm:$0xff] %v1501
      %1534 = vst [vmem:[#allocation3 + $0x18] sm:$0xff] %v1502
      %1535 = vst [vmem:[#allocation3 + $0x20] sm:$0xff] %v1503
      %1536 = vst [vmem:[#allocation3 + $0x28] sm:$0xff] %v1504
      %1537 = vst [vmem:[#allocation3 + $0x30] sm:$0xff] %v1505
      %1538 = vst [vmem:[#allocation3 + $0x38] sm:$0xff] %v1506
      %1539 = vst [vmem:[#allocation3 + $0x40] sm:$0xff] %v1507
      %1540 = vst [vmem:[#allocation3 + $0x48] sm:$0xff] %v1508
      %1541 = vst [vmem:[#allocation3 + $0x50] sm:$0xff] %v1509
      %1542 = vst [vmem:[#allocation3 + $0x58] sm:$0xff] %v1510
      %1543 = vst [vmem:[#allocation3 + $0x60] sm:$0xff] %v1511
      %1544 = vst [vmem:[#allocation3 + $0x68] sm:$0xff] %v1512
      %1545 = vst [vmem:[#allocation3 + $0x70] sm:$0xff] %v1513
      %1546 = vst [vmem:[#allocation3 + $0x78] sm:$0xff] %v1514
      %1547 = vst [vmem:[#allocation3 + $0x80] sm:$0xff] %v1515
      %1548 = vst [vmem:[#allocation3 + $0x88] sm:$0xff] %v1516
      %1549 = vst [vmem:[#allocation3 + $0x90] sm:$0xff] %v1517
      %1550 = vst [vmem:[#allocation3 + $0x98] sm:$0xff] %v1518
      %1551 = vst [vmem:[#allocation3 + $0xa0] sm:$0xff] %v1519
      %1552 = vst [vmem:[#allocation3 + $0xa8] sm:$0xff] %v1520
      %1553 = vst [vmem:[#allocation3 + $0xb0] sm:$0xff] %v1521
      %1554 = vst [vmem:[#allocation3 + $0xb8] sm:$0xff] %v1522
      %1555 = vst [vmem:[#allocation3 + $0xc0] sm:$0xff] %v1523
      %1556 = vst [vmem:[#allocation3 + $0xc8] sm:$0xff] %v1524
      %1557 = vst [vmem:[#allocation3 + $0xd0] sm:$0xff] %v1525
      %1558 = vst [vmem:[#allocation3 + $0xd8] sm:$0xff] %v1526
      %1559 = vst [vmem:[#allocation3 + $0xe0] sm:$0xff] %v1527
      %1560 = vst [vmem:[#allocation3 + $0xe8] sm:$0xff] %v1528
      %1561 = vst [vmem:[#allocation3 + $0xf0] sm:$0xff] %v1529
      %1562 = vst [vmem:[#allocation3 + $0xf8] sm:$0xff] %v1530
      %s1563 = scalar_lea.vmem [#allocation2], 24
      %v1564 = vld [vmem:[%s1563] sm:$0xff]
      %v1565 = vld [vmem:[%s1563 + $0x8] sm:$0xff]
      %v1566 = vld [vmem:[%s1563 + $0x18] sm:$0xff]
      %v1567 = vld [vmem:[%s1563 + $0x20] sm:$0xff]
      %v1568 = vld [vmem:[%s1563 + $0x30] sm:$0xff]
      %v1569 = vld [vmem:[%s1563 + $0x38] sm:$0xff]
      %v1570 = vld [vmem:[%s1563 + $0x48] sm:$0xff]
      %v1571 = vld [vmem:[%s1563 + $0x50] sm:$0xff]
      %v1572 = vld [vmem:[%s1563 + $0x60] sm:$0xff]
      %v1573 = vld [vmem:[%s1563 + $0x68] sm:$0xff]
      %v1574 = vld [vmem:[%s1563 + $0x78] sm:$0xff]
      %v1575 = vld [vmem:[%s1563 + $0x80] sm:$0xff]
      %v1576 = vld [vmem:[%s1563 + $0x90] sm:$0xff]
      %v1577 = vld [vmem:[%s1563 + $0x98] sm:$0xff]
      %v1578 = vld [vmem:[%s1563 + $0xa8] sm:$0xff]
      %v1579 = vld [vmem:[%s1563 + $0xb0] sm:$0xff]
      %v1580 = vld [vmem:[%s1563 + $0xc0] sm:$0xff]
      %v1581 = vld [vmem:[%s1563 + $0xc8] sm:$0xff]
      %v1582 = vld [vmem:[%s1563 + $0xd8] sm:$0xff]
      %v1583 = vld [vmem:[%s1563 + $0xe0] sm:$0xff]
      %v1584 = vld [vmem:[%s1563 + $0xf0] sm:$0xff]
      %v1585 = vld [vmem:[%s1563 + $0xf8] sm:$0xff]
      %v1586 = vld [vmem:[%s1563 + $0x108] sm:$0xff]
      %v1587 = vld [vmem:[%s1563 + $0x110] sm:$0xff]
      %v1588 = vld [vmem:[%s1563 + $0x120] sm:$0xff]
      %v1589 = vld [vmem:[%s1563 + $0x128] sm:$0xff]
      %v1590 = vld [vmem:[%s1563 + $0x138] sm:$0xff]
      %v1591 = vld [vmem:[%s1563 + $0x140] sm:$0xff]
      %v1592 = vld [vmem:[%s1563 + $0x150] sm:$0xff]
      %v1593 = vld [vmem:[%s1563 + $0x158] sm:$0xff]
      %v1594 = vld [vmem:[%s1563 + $0x168] sm:$0xff]
      %v1595 = vld [vmem:[%s1563 + $0x170] sm:$0xff]
      %v1596 = vld [vmem:[#allocation3] sm:$0xff]
      %v1597 = vld [vmem:[#allocation3 + $0x8] sm:$0xff]
      %v1598 = vld [vmem:[#allocation3 + $0x10] sm:$0xff]
      %v1599 = vld [vmem:[#allocation3 + $0x18] sm:$0xff]
      %v1600 = vld [vmem:[#allocation3 + $0x20] sm:$0xff]
      %v1601 = vld [vmem:[#allocation3 + $0x28] sm:$0xff]
      %v1602 = vld [vmem:[#allocation3 + $0x30] sm:$0xff]
      %v1603 = vld [vmem:[#allocation3 + $0x38] sm:$0xff]
      %v1604 = vld [vmem:[#allocation3 + $0x40] sm:$0xff]
      %v1605 = vld [vmem:[#allocation3 + $0x48] sm:$0xff]
      %v1606 = vld [vmem:[#allocation3 + $0x50] sm:$0xff]
      %v1607 = vld [vmem:[#allocation3 + $0x58] sm:$0xff]
      %v1608 = vld [vmem:[#allocation3 + $0x60] sm:$0xff]
      %v1609 = vld [vmem:[#allocation3 + $0x68] sm:$0xff]
      %v1610 = vld [vmem:[#allocation3 + $0x70] sm:$0xff]
      %v1611 = vld [vmem:[#allocation3 + $0x78] sm:$0xff]
      %v1612 = vld [vmem:[#allocation3 + $0x80] sm:$0xff]
      %v1613 = vld [vmem:[#allocation3 + $0x88] sm:$0xff]
      %v1614 = vld [vmem:[#allocation3 + $0x90] sm:$0xff]
      %v1615 = vld [vmem:[#allocation3 + $0x98] sm:$0xff]
      %v1616 = vld [vmem:[#allocation3 + $0xa0] sm:$0xff]
      %v1617 = vld [vmem:[#allocation3 + $0xa8] sm:$0xff]
      %v1618 = vld [vmem:[#allocation3 + $0xb0] sm:$0xff]
      %v1619 = vld [vmem:[#allocation3 + $0xb8] sm:$0xff]
      %v1620 = vld [vmem:[#allocation3 + $0xc0] sm:$0xff]
      %v1621 = vld [vmem:[#allocation3 + $0xc8] sm:$0xff]
      %v1622 = vld [vmem:[#allocation3 + $0xd0] sm:$0xff]
      %v1623 = vld [vmem:[#allocation3 + $0xd8] sm:$0xff]
      %v1624 = vld [vmem:[#allocation3 + $0xe0] sm:$0xff]
      %v1625 = vld [vmem:[#allocation3 + $0xe8] sm:$0xff]
      %v1626 = vld [vmem:[#allocation3 + $0xf0] sm:$0xff]
      %v1627 = vld [vmem:[#allocation3 + $0xf8] sm:$0xff]
      %s1628 = scalar_lea.vmem %s2, 12
      %v1629 = vld [vmem:[%s1628] sm:$0xf]
      %v1631 = vsel %vm445, %v1564, 0
      %v1634 = vsel %vm445, %v1565, 0
      %v1637 = vsel %vm445, %v1566, 0
      %v1640 = vsel %vm445, %v1567, 0
      %v1643 = vsel %vm445, %v1568, 0
      %v1646 = vsel %vm445, %v1569, 0
      %v1649 = vsel %vm445, %v1570, 0
      %v1652 = vsel %vm445, %v1571, 0
      %v1655 = vsel %vm445, %v1572, 0
      %v1658 = vsel %vm445, %v1573, 0
      %v1661 = vsel %vm445, %v1574, 0
      %v1664 = vsel %vm445, %v1575, 0
      %v1667 = vsel %vm445, %v1576, 0
      %v1670 = vsel %vm445, %v1577, 0
      %v1673 = vsel %vm445, %v1578, 0
      %v1676 = vsel %vm445, %v1579, 0
      %v1679 = vsel %vm445, %v1580, 0
      %v1682 = vsel %vm445, %v1581, 0
      %v1685 = vsel %vm445, %v1582, 0
      %v1688 = vsel %vm445, %v1583, 0
      %v1691 = vsel %vm445, %v1584, 0
      %v1694 = vsel %vm445, %v1585, 0
      %v1697 = vsel %vm445, %v1586, 0
      %v1700 = vsel %vm445, %v1587, 0
      %v1703 = vsel %vm445, %v1588, 0
      %v1706 = vsel %vm445, %v1589, 0
      %v1709 = vsel %vm445, %v1590, 0
      %v1712 = vsel %vm445, %v1591, 0
      %v1715 = vsel %vm445, %v1592, 0
      %v1718 = vsel %vm445, %v1593, 0
      %v1721 = vsel %vm445, %v1594, 0
      %v1724 = vsel %vm445, %v1595, 0
      %v1727 = vsel %vm698, %v1629, 0
      %1729 = vmatpush.msra.mxu0 0.0
      %1730 = vmatpush.msra.mxu0 0.0
      %1731 = vmatpush.msra.mxu0 0.0
      %1732 = vmatpush.msra.mxu0 0.0
      %1733 = vmatpush.msra.mxu0 0.0
      %1734 = vmatpush.msra.mxu0 0.0
      %1735 = vmatpush.msra.mxu0 0.0
      %1736 = vmatpush.msra.mxu0 0.0
      %1737 = vmatpush.msra.mxu0 0.0
      %1738 = vmatpush.msra.mxu0 0.0
      %1739 = vmatpush.msra.mxu0 0.0
      %1740 = vmatpush.msra.mxu0 0.0
      %1741 = vmatpush.msra.mxu0 0.0
      %1742 = vmatpush.msra.mxu0 0.0
      %1743 = vmatpush.msra.mxu0 0.0
      %1744 = vmatpush.msra.mxu0 %v1727
      %1745 = vmatmul.f32.gmra.mxu0 %v1631
      %v1746 = vpop.f32.mrf.mxu0
      %v1747 = vadd.f32 0.0, %v1746
      %1748 = vmatmul.f32.gmra.mxu0 %v1634
      %v1749 = vpop.f32.mrf.mxu0
      %v1750 = vadd.f32 0.0, %v1749
      %1751 = vmatmul.f32.gmra.mxu0 %v1637
      %v1752 = vpop.f32.mrf.mxu0
      %v1753 = vadd.f32 0.0, %v1752
      %1754 = vmatmul.f32.gmra.mxu0 %v1640
      %v1755 = vpop.f32.mrf.mxu0
      %v1756 = vadd.f32 0.0, %v1755
      %1757 = vmatmul.f32.gmra.mxu0 %v1643
      %v1758 = vpop.f32.mrf.mxu0
      %v1759 = vadd.f32 0.0, %v1758
      %1760 = vmatmul.f32.gmra.mxu0 %v1646
      %v1761 = vpop.f32.mrf.mxu0
      %v1762 = vadd.f32 0.0, %v1761
      %1763 = vmatmul.f32.gmra.mxu0 %v1649
      %v1764 = vpop.f32.mrf.mxu0
      %v1765 = vadd.f32 0.0, %v1764
      %1766 = vmatmul.f32.gmra.mxu0 %v1652
      %v1767 = vpop.f32.mrf.mxu0
      %v1768 = vadd.f32 0.0, %v1767
      %1769 = vmatmul.f32.gmra.mxu0 %v1655
      %v1770 = vpop.f32.mrf.mxu0
      %v1771 = vadd.f32 0.0, %v1770
      %1772 = vmatmul.f32.gmra.mxu0 %v1658
      %v1773 = vpop.f32.mrf.mxu0
      %v1774 = vadd.f32 0.0, %v1773
      %1775 = vmatmul.f32.gmra.mxu0 %v1661
      %v1776 = vpop.f32.mrf.mxu0
      %v1777 = vadd.f32 0.0, %v1776
      %1778 = vmatmul.f32.gmra.mxu0 %v1664
      %v1779 = vpop.f32.mrf.mxu0
      %v1780 = vadd.f32 0.0, %v1779
      %1781 = vmatmul.f32.gmra.mxu0 %v1667
      %v1782 = vpop.f32.mrf.mxu0
      %v1783 = vadd.f32 0.0, %v1782
      %1784 = vmatmul.f32.gmra.mxu0 %v1670
      %v1785 = vpop.f32.mrf.mxu0
      %v1786 = vadd.f32 0.0, %v1785
      %1787 = vmatmul.f32.gmra.mxu0 %v1673
      %v1788 = vpop.f32.mrf.mxu0
      %v1789 = vadd.f32 0.0, %v1788
      %1790 = vmatmul.f32.gmra.mxu0 %v1676
      %v1791 = vpop.f32.mrf.mxu0
      %v1792 = vadd.f32 0.0, %v1791
      %1793 = vmatmul.f32.gmra.mxu0 %v1679
      %v1794 = vpop.f32.mrf.mxu0
      %v1795 = vadd.f32 0.0, %v1794
      %1796 = vmatmul.f32.gmra.mxu0 %v1682
      %v1797 = vpop.f32.mrf.mxu0
      %v1798 = vadd.f32 0.0, %v1797
      %1799 = vmatmul.f32.gmra.mxu0 %v1685
      %v1800 = vpop.f32.mrf.mxu0
      %v1801 = vadd.f32 0.0, %v1800
      %1802 = vmatmul.f32.gmra.mxu0 %v1688
      %v1803 = vpop.f32.mrf.mxu0
      %v1804 = vadd.f32 0.0, %v1803
      %1805 = vmatmul.f32.gmra.mxu0 %v1691
      %v1806 = vpop.f32.mrf.mxu0
      %v1807 = vadd.f32 0.0, %v1806
      %1808 = vmatmul.f32.gmra.mxu0 %v1694
      %v1809 = vpop.f32.mrf.mxu0
      %v1810 = vadd.f32 0.0, %v1809
      %1811 = vmatmul.f32.gmra.mxu0 %v1697
      %v1812 = vpop.f32.mrf.mxu0
      %v1813 = vadd.f32 0.0, %v1812
      %1814 = vmatmul.f32.gmra.mxu0 %v1700
      %v1815 = vpop.f32.mrf.mxu0
      %v1816 = vadd.f32 0.0, %v1815
      %1817 = vmatmul.f32.gmra.mxu0 %v1703
      %v1818 = vpop.f32.mrf.mxu0
      %v1819 = vadd.f32 0.0, %v1818
      %1820 = vmatmul.f32.gmra.mxu0 %v1706
      %v1821 = vpop.f32.mrf.mxu0
      %v1822 = vadd.f32 0.0, %v1821
      %1823 = vmatmul.f32.gmra.mxu0 %v1709
      %v1824 = vpop.f32.mrf.mxu0
      %v1825 = vadd.f32 0.0, %v1824
      %1826 = vmatmul.f32.gmra.mxu0 %v1712
      %v1827 = vpop.f32.mrf.mxu0
      %v1828 = vadd.f32 0.0, %v1827
      %1829 = vmatmul.f32.gmra.mxu0 %v1715
      %v1830 = vpop.f32.mrf.mxu0
      %v1831 = vadd.f32 0.0, %v1830
      %1832 = vmatmul.f32.gmra.mxu0 %v1718
      %v1833 = vpop.f32.mrf.mxu0
      %v1834 = vadd.f32 0.0, %v1833
      %1835 = vmatmul.f32.gmra.mxu0 %v1721
      %v1836 = vpop.f32.mrf.mxu0
      %v1837 = vadd.f32 0.0, %v1836
      %1838 = vmatmul.f32.gmra.mxu0 %v1724
      %v1839 = vpop.f32.mrf.mxu0
      %v1840 = vadd.f32 0.0, %v1839
      %1841 = vdwg.mxu0
      %v1842 = vadd.f32 %v1596, %v1747
      %v1843 = vadd.f32 %v1597, %v1750
      %v1844 = vadd.f32 %v1598, %v1753
      %v1845 = vadd.f32 %v1599, %v1756
      %v1846 = vadd.f32 %v1600, %v1759
      %v1847 = vadd.f32 %v1601, %v1762
      %v1848 = vadd.f32 %v1602, %v1765
      %v1849 = vadd.f32 %v1603, %v1768
      %v1850 = vadd.f32 %v1604, %v1771
      %v1851 = vadd.f32 %v1605, %v1774
      %v1852 = vadd.f32 %v1606, %v1777
      %v1853 = vadd.f32 %v1607, %v1780
      %v1854 = vadd.f32 %v1608, %v1783
      %v1855 = vadd.f32 %v1609, %v1786
      %v1856 = vadd.f32 %v1610, %v1789
      %v1857 = vadd.f32 %v1611, %v1792
      %v1858 = vadd.f32 %v1612, %v1795
      %v1859 = vadd.f32 %v1613, %v1798
      %v1860 = vadd.f32 %v1614, %v1801
      %v1861 = vadd.f32 %v1615, %v1804
      %v1862 = vadd.f32 %v1616, %v1807
      %v1863 = vadd.f32 %v1617, %v1810
      %v1864 = vadd.f32 %v1618, %v1813
      %v1865 = vadd.f32 %v1619, %v1816
      %v1866 = vadd.f32 %v1620, %v1819
      %v1867 = vadd.f32 %v1621, %v1822
      %v1868 = vadd.f32 %v1622, %v1825
      %v1869 = vadd.f32 %v1623, %v1828
      %v1870 = vadd.f32 %v1624, %v1831
      %v1871 = vadd.f32 %v1625, %v1834
      %v1872 = vadd.f32 %v1626, %v1837
      %v1873 = vadd.f32 %v1627, %v1840
      %1874 = vst [vmem:[#allocation3] sm:$0xff] %v1842
      %1875 = vst [vmem:[#allocation3 + $0x8] sm:$0xff] %v1843
      %1876 = vst [vmem:[#allocation3 + $0x10] sm:$0xff] %v1844
      %1877 = vst [vmem:[#allocation3 + $0x18] sm:$0xff] %v1845
      %1878 = vst [vmem:[#allocation3 + $0x20] sm:$0xff] %v1846
      %1879 = vst [vmem:[#allocation3 + $0x28] sm:$0xff] %v1847
      %1880 = vst [vmem:[#allocation3 + $0x30] sm:$0xff] %v1848
      %1881 = vst [vmem:[#allocation3 + $0x38] sm:$0xff] %v1849
      %1882 = vst [vmem:[#allocation3 + $0x40] sm:$0xff] %v1850
      %1883 = vst [vmem:[#allocation3 + $0x48] sm:$0xff] %v1851
      %1884 = vst [vmem:[#allocation3 + $0x50] sm:$0xff] %v1852
      %1885 = vst [vmem:[#allocation3 + $0x58] sm:$0xff] %v1853
      %1886 = vst [vmem:[#allocation3 + $0x60] sm:$0xff] %v1854
      %1887 = vst [vmem:[#allocation3 + $0x68] sm:$0xff] %v1855
      %1888 = vst [vmem:[#allocation3 + $0x70] sm:$0xff] %v1856
      %1889 = vst [vmem:[#allocation3 + $0x78] sm:$0xff] %v1857
      %1890 = vst [vmem:[#allocation3 + $0x80] sm:$0xff] %v1858
      %1891 = vst [vmem:[#allocation3 + $0x88] sm:$0xff] %v1859
      %1892 = vst [vmem:[#allocation3 + $0x90] sm:$0xff] %v1860
      %1893 = vst [vmem:[#allocation3 + $0x98] sm:$0xff] %v1861
      %1894 = vst [vmem:[#allocation3 + $0xa0] sm:$0xff] %v1862
      %1895 = vst [vmem:[#allocation3 + $0xa8] sm:$0xff] %v1863
      %1896 = vst [vmem:[#allocation3 + $0xb0] sm:$0xff] %v1864
      %1897 = vst [vmem:[#allocation3 + $0xb8] sm:$0xff] %v1865
      %1898 = vst [vmem:[#allocation3 + $0xc0] sm:$0xff] %v1866
      %1899 = vst [vmem:[#allocation3 + $0xc8] sm:$0xff] %v1867
      %1900 = vst [vmem:[#allocation3 + $0xd0] sm:$0xff] %v1868
      %1901 = vst [vmem:[#allocation3 + $0xd8] sm:$0xff] %v1869
      %1902 = vst [vmem:[#allocation3 + $0xe0] sm:$0xff] %v1870
      %1903 = vst [vmem:[#allocation3 + $0xe8] sm:$0xff] %v1871
      %1904 = vst [vmem:[#allocation3 + $0xf0] sm:$0xff] %v1872
      %1905 = vst [vmem:[#allocation3 + $0xf8] sm:$0xff] %v1873
      %v1906 = vld [vmem:[%s1563 + $0x1] sm:$0xff]
      %v1907 = vld [vmem:[%s1563 + $0x9] sm:$0xff]
      %v1908 = vld [vmem:[%s1563 + $0x19] sm:$0xff]
      %v1909 = vld [vmem:[%s1563 + $0x21] sm:$0xff]
      %v1910 = vld [vmem:[%s1563 + $0x31] sm:$0xff]
      %v1911 = vld [vmem:[%s1563 + $0x39] sm:$0xff]
      %v1912 = vld [vmem:[%s1563 + $0x49] sm:$0xff]
      %v1913 = vld [vmem:[%s1563 + $0x51] sm:$0xff]
      %v1914 = vld [vmem:[%s1563 + $0x61] sm:$0xff]
      %v1915 = vld [vmem:[%s1563 + $0x69] sm:$0xff]
      %v1916 = vld [vmem:[%s1563 + $0x79] sm:$0xff]
      %v1917 = vld [vmem:[%s1563 + $0x81] sm:$0xff]
      %v1918 = vld [vmem:[%s1563 + $0x91] sm:$0xff]
      %v1919 = vld [vmem:[%s1563 + $0x99] sm:$0xff]
      %v1920 = vld [vmem:[%s1563 + $0xa9] sm:$0xff]
      %v1921 = vld [vmem:[%s1563 + $0xb1] sm:$0xff]
      %v1922 = vld [vmem:[%s1563 + $0xc1] sm:$0xff]
      %v1923 = vld [vmem:[%s1563 + $0xc9] sm:$0xff]
      %v1924 = vld [vmem:[%s1563 + $0xd9] sm:$0xff]
      %v1925 = vld [vmem:[%s1563 + $0xe1] sm:$0xff]
      %v1926 = vld [vmem:[%s1563 + $0xf1] sm:$0xff]
      %v1927 = vld [vmem:[%s1563 + $0xf9] sm:$0xff]
      %v1928 = vld [vmem:[%s1563 + $0x109] sm:$0xff]
      %v1929 = vld [vmem:[%s1563 + $0x111] sm:$0xff]
      %v1930 = vld [vmem:[%s1563 + $0x121] sm:$0xff]
      %v1931 = vld [vmem:[%s1563 + $0x129] sm:$0xff]
      %v1932 = vld [vmem:[%s1563 + $0x139] sm:$0xff]
      %v1933 = vld [vmem:[%s1563 + $0x141] sm:$0xff]
      %v1934 = vld [vmem:[%s1563 + $0x151] sm:$0xff]
      %v1935 = vld [vmem:[%s1563 + $0x159] sm:$0xff]
      %v1936 = vld [vmem:[%s1563 + $0x169] sm:$0xff]
      %v1937 = vld [vmem:[%s1563 + $0x171] sm:$0xff]
      %v1938 = vld [vmem:[#allocation3] sm:$0xff]
      %v1939 = vld [vmem:[#allocation3 + $0x8] sm:$0xff]
      %v1940 = vld [vmem:[#allocation3 + $0x10] sm:$0xff]
      %v1941 = vld [vmem:[#allocation3 + $0x18] sm:$0xff]
      %v1942 = vld [vmem:[#allocation3 + $0x20] sm:$0xff]
      %v1943 = vld [vmem:[#allocation3 + $0x28] sm:$0xff]
      %v1944 = vld [vmem:[#allocation3 + $0x30] sm:$0xff]
      %v1945 = vld [vmem:[#allocation3 + $0x38] sm:$0xff]
      %v1946 = vld [vmem:[#allocation3 + $0x40] sm:$0xff]
      %v1947 = vld [vmem:[#allocation3 + $0x48] sm:$0xff]
      %v1948 = vld [vmem:[#allocation3 + $0x50] sm:$0xff]
      %v1949 = vld [vmem:[#allocation3 + $0x58] sm:$0xff]
      %v1950 = vld [vmem:[#allocation3 + $0x60] sm:$0xff]
      %v1951 = vld [vmem:[#allocation3 + $0x68] sm:$0xff]
      %v1952 = vld [vmem:[#allocation3 + $0x70] sm:$0xff]
      %v1953 = vld [vmem:[#allocation3 + $0x78] sm:$0xff]
      %v1954 = vld [vmem:[#allocation3 + $0x80] sm:$0xff]
      %v1955 = vld [vmem:[#allocation3 + $0x88] sm:$0xff]
      %v1956 = vld [vmem:[#allocation3 + $0x90] sm:$0xff]
      %v1957 = vld [vmem:[#allocation3 + $0x98] sm:$0xff]
      %v1958 = vld [vmem:[#allocation3 + $0xa0] sm:$0xff]
      %v1959 = vld [vmem:[#allocation3 + $0xa8] sm:$0xff]
      %v1960 = vld [vmem:[#allocation3 + $0xb0] sm:$0xff]
      %v1961 = vld [vmem:[#allocation3 + $0xb8] sm:$0xff]
      %v1962 = vld [vmem:[#allocation3 + $0xc0] sm:$0xff]
      %v1963 = vld [vmem:[#allocation3 + $0xc8] sm:$0xff]
      %v1964 = vld [vmem:[#allocation3 + $0xd0] sm:$0xff]
      %v1965 = vld [vmem:[#allocation3 + $0xd8] sm:$0xff]
      %v1966 = vld [vmem:[#allocation3 + $0xe0] sm:$0xff]
      %v1967 = vld [vmem:[#allocation3 + $0xe8] sm:$0xff]
      %v1968 = vld [vmem:[#allocation3 + $0xf0] sm:$0xff]
      %v1969 = vld [vmem:[#allocation3 + $0xf8] sm:$0xff]
      %s1970 = scalar_lea.vmem %s2, 16
      %v1971 = vld [vmem:[%s1970] sm:$0xf]
      %v1973 = vsel %vm445, %v1906, 0
      %v1976 = vsel %vm445, %v1907, 0
      %v1979 = vsel %vm445, %v1908, 0
      %v1982 = vsel %vm445, %v1909, 0
      %v1985 = vsel %vm445, %v1910, 0
      %v1988 = vsel %vm445, %v1911, 0
      %v1991 = vsel %vm445, %v1912, 0
      %v1994 = vsel %vm445, %v1913, 0
      %v1997 = vsel %vm445, %v1914, 0
      %v2000 = vsel %vm445, %v1915, 0
      %v2003 = vsel %vm445, %v1916, 0
      %v2006 = vsel %vm445, %v1917, 0
      %v2009 = vsel %vm445, %v1918, 0
      %v2012 = vsel %vm445, %v1919, 0
      %v2015 = vsel %vm445, %v1920, 0
      %v2018 = vsel %vm445, %v1921, 0
      %v2021 = vsel %vm445, %v1922, 0
      %v2024 = vsel %vm445, %v1923, 0
      %v2027 = vsel %vm445, %v1924, 0
      %v2030 = vsel %vm445, %v1925, 0
      %v2033 = vsel %vm445, %v1926, 0
      %v2036 = vsel %vm445, %v1927, 0
      %v2039 = vsel %vm445, %v1928, 0
      %v2042 = vsel %vm445, %v1929, 0
      %v2045 = vsel %vm445, %v1930, 0
      %v2048 = vsel %vm445, %v1931, 0
      %v2051 = vsel %vm445, %v1932, 0
      %v2054 = vsel %vm445, %v1933, 0
      %v2057 = vsel %vm445, %v1934, 0
      %v2060 = vsel %vm445, %v1935, 0
      %v2063 = vsel %vm445, %v1936, 0
      %v2066 = vsel %vm445, %v1937, 0
      %v2069 = vsel %vm698, %v1971, 0
      %2071 = vmatpush.msra.mxu0 0.0
      %2072 = vmatpush.msra.mxu0 0.0
      %2073 = vmatpush.msra.mxu0 0.0
      %2074 = vmatpush.msra.mxu0 0.0
      %2075 = vmatpush.msra.mxu0 0.0
      %2076 = vmatpush.msra.mxu0 0.0
      %2077 = vmatpush.msra.mxu0 0.0
      %2078 = vmatpush.msra.mxu0 0.0
      %2079 = vmatpush.msra.mxu0 0.0
      %2080 = vmatpush.msra.mxu0 0.0
      %2081 = vmatpush.msra.mxu0 0.0
      %2082 = vmatpush.msra.mxu0 0.0
      %2083 = vmatpush.msra.mxu0 0.0
      %2084 = vmatpush.msra.mxu0 0.0
      %2085 = vmatpush.msra.mxu0 0.0
      %2086 = vmatpush.msra.mxu0 %v2069
      %2087 = vmatmul.f32.gmra.mxu0 %v1973
      %v2088 = vpop.f32.mrf.mxu0
      %v2089 = vadd.f32 0.0, %v2088
      %2090 = vmatmul.f32.gmra.mxu0 %v1976
      %v2091 = vpop.f32.mrf.mxu0
      %v2092 = vadd.f32 0.0, %v2091
      %2093 = vmatmul.f32.gmra.mxu0 %v1979
      %v2094 = vpop.f32.mrf.mxu0
      %v2095 = vadd.f32 0.0, %v2094
      %2096 = vmatmul.f32.gmra.mxu0 %v1982
      %v2097 = vpop.f32.mrf.mxu0
      %v2098 = vadd.f32 0.0, %v2097
      %2099 = vmatmul.f32.gmra.mxu0 %v1985
      %v2100 = vpop.f32.mrf.mxu0
      %v2101 = vadd.f32 0.0, %v2100
      %2102 = vmatmul.f32.gmra.mxu0 %v1988
      %v2103 = vpop.f32.mrf.mxu0
      %v2104 = vadd.f32 0.0, %v2103
      %2105 = vmatmul.f32.gmra.mxu0 %v1991
      %v2106 = vpop.f32.mrf.mxu0
      %v2107 = vadd.f32 0.0, %v2106
      %2108 = vmatmul.f32.gmra.mxu0 %v1994
      %v2109 = vpop.f32.mrf.mxu0
      %v2110 = vadd.f32 0.0, %v2109
      %2111 = vmatmul.f32.gmra.mxu0 %v1997
      %v2112 = vpop.f32.mrf.mxu0
      %v2113 = vadd.f32 0.0, %v2112
      %2114 = vmatmul.f32.gmra.mxu0 %v2000
      %v2115 = vpop.f32.mrf.mxu0
      %v2116 = vadd.f32 0.0, %v2115
      %2117 = vmatmul.f32.gmra.mxu0 %v2003
      %v2118 = vpop.f32.mrf.mxu0
      %v2119 = vadd.f32 0.0, %v2118
      %2120 = vmatmul.f32.gmra.mxu0 %v2006
      %v2121 = vpop.f32.mrf.mxu0
      %v2122 = vadd.f32 0.0, %v2121
      %2123 = vmatmul.f32.gmra.mxu0 %v2009
      %v2124 = vpop.f32.mrf.mxu0
      %v2125 = vadd.f32 0.0, %v2124
      %2126 = vmatmul.f32.gmra.mxu0 %v2012
      %v2127 = vpop.f32.mrf.mxu0
      %v2128 = vadd.f32 0.0, %v2127
      %2129 = vmatmul.f32.gmra.mxu0 %v2015
      %v2130 = vpop.f32.mrf.mxu0
      %v2131 = vadd.f32 0.0, %v2130
      %2132 = vmatmul.f32.gmra.mxu0 %v2018
      %v2133 = vpop.f32.mrf.mxu0
      %v2134 = vadd.f32 0.0, %v2133
      %2135 = vmatmul.f32.gmra.mxu0 %v2021
      %v2136 = vpop.f32.mrf.mxu0
      %v2137 = vadd.f32 0.0, %v2136
      %2138 = vmatmul.f32.gmra.mxu0 %v2024
      %v2139 = vpop.f32.mrf.mxu0
      %v2140 = vadd.f32 0.0, %v2139
      %2141 = vmatmul.f32.gmra.mxu0 %v2027
      %v2142 = vpop.f32.mrf.mxu0
      %v2143 = vadd.f32 0.0, %v2142
      %2144 = vmatmul.f32.gmra.mxu0 %v2030
      %v2145 = vpop.f32.mrf.mxu0
      %v2146 = vadd.f32 0.0, %v2145
      %2147 = vmatmul.f32.gmra.mxu0 %v2033
      %v2148 = vpop.f32.mrf.mxu0
      %v2149 = vadd.f32 0.0, %v2148
      %2150 = vmatmul.f32.gmra.mxu0 %v2036
      %v2151 = vpop.f32.mrf.mxu0
      %v2152 = vadd.f32 0.0, %v2151
      %2153 = vmatmul.f32.gmra.mxu0 %v2039
      %v2154 = vpop.f32.mrf.mxu0
      %v2155 = vadd.f32 0.0, %v2154
      %2156 = vmatmul.f32.gmra.mxu0 %v2042
      %v2157 = vpop.f32.mrf.mxu0
      %v2158 = vadd.f32 0.0, %v2157
      %2159 = vmatmul.f32.gmra.mxu0 %v2045
      %v2160 = vpop.f32.mrf.mxu0
      %v2161 = vadd.f32 0.0, %v2160
      %2162 = vmatmul.f32.gmra.mxu0 %v2048
      %v2163 = vpop.f32.mrf.mxu0
      %v2164 = vadd.f32 0.0, %v2163
      %2165 = vmatmul.f32.gmra.mxu0 %v2051
      %v2166 = vpop.f32.mrf.mxu0
      %v2167 = vadd.f32 0.0, %v2166
      %2168 = vmatmul.f32.gmra.mxu0 %v2054
      %v2169 = vpop.f32.mrf.mxu0
      %v2170 = vadd.f32 0.0, %v2169
      %2171 = vmatmul.f32.gmra.mxu0 %v2057
      %v2172 = vpop.f32.mrf.mxu0
      %v2173 = vadd.f32 0.0, %v2172
      %2174 = vmatmul.f32.gmra.mxu0 %v2060
      %v2175 = vpop.f32.mrf.mxu0
      %v2176 = vadd.f32 0.0, %v2175
      %2177 = vmatmul.f32.gmra.mxu0 %v2063
      %v2178 = vpop.f32.mrf.mxu0
      %v2179 = vadd.f32 0.0, %v2178
      %2180 = vmatmul.f32.gmra.mxu0 %v2066
      %v2181 = vpop.f32.mrf.mxu0
      %v2182 = vadd.f32 0.0, %v2181
      %2183 = vdwg.mxu0
      %v2184 = vadd.f32 %v1938, %v2089
      %v2185 = vadd.f32 %v1939, %v2092
      %v2186 = vadd.f32 %v1940, %v2095
      %v2187 = vadd.f32 %v1941, %v2098
      %v2188 = vadd.f32 %v1942, %v2101
      %v2189 = vadd.f32 %v1943, %v2104
      %v2190 = vadd.f32 %v1944, %v2107
      %v2191 = vadd.f32 %v1945, %v2110
      %v2192 = vadd.f32 %v1946, %v2113
      %v2193 = vadd.f32 %v1947, %v2116
      %v2194 = vadd.f32 %v1948, %v2119
      %v2195 = vadd.f32 %v1949, %v2122
      %v2196 = vadd.f32 %v1950, %v2125
      %v2197 = vadd.f32 %v1951, %v2128
      %v2198 = vadd.f32 %v1952, %v2131
      %v2199 = vadd.f32 %v1953, %v2134
      %v2200 = vadd.f32 %v1954, %v2137
      %v2201 = vadd.f32 %v1955, %v2140
      %v2202 = vadd.f32 %v1956, %v2143
      %v2203 = vadd.f32 %v1957, %v2146
      %v2204 = vadd.f32 %v1958, %v2149
      %v2205 = vadd.f32 %v1959, %v2152
      %v2206 = vadd.f32 %v1960, %v2155
      %v2207 = vadd.f32 %v1961, %v2158
      %v2208 = vadd.f32 %v1962, %v2161
      %v2209 = vadd.f32 %v1963, %v2164
      %v2210 = vadd.f32 %v1964, %v2167
      %v2211 = vadd.f32 %v1965, %v2170
      %v2212 = vadd.f32 %v1966, %v2173
      %v2213 = vadd.f32 %v1967, %v2176
      %v2214 = vadd.f32 %v1968, %v2179
      %v2215 = vadd.f32 %v1969, %v2182
      %2216 = vst [vmem:[#allocation3] sm:$0xff] %v2184
      %2217 = vst [vmem:[#allocation3 + $0x8] sm:$0xff] %v2185
      %2218 = vst [vmem:[#allocation3 + $0x10] sm:$0xff] %v2186
      %2219 = vst [vmem:[#allocation3 + $0x18] sm:$0xff] %v2187
      %2220 = vst [vmem:[#allocation3 + $0x20] sm:$0xff] %v2188
      %2221 = vst [vmem:[#allocation3 + $0x28] sm:$0xff] %v2189
      %2222 = vst [vmem:[#allocation3 + $0x30] sm:$0xff] %v2190
      %2223 = vst [vmem:[#allocation3 + $0x38] sm:$0xff] %v2191
      %2224 = vst [vmem:[#allocation3 + $0x40] sm:$0xff] %v2192
      %2225 = vst [vmem:[#allocation3 + $0x48] sm:$0xff] %v2193
      %2226 = vst [vmem:[#allocation3 + $0x50] sm:$0xff] %v2194
      %2227 = vst [vmem:[#allocation3 + $0x58] sm:$0xff] %v2195
      %2228 = vst [vmem:[#allocation3 + $0x60] sm:$0xff] %v2196
      %2229 = vst [vmem:[#allocation3 + $0x68] sm:$0xff] %v2197
      %2230 = vst [vmem:[#allocation3 + $0x70] sm:$0xff] %v2198
      %2231 = vst [vmem:[#allocation3 + $0x78] sm:$0xff] %v2199
      %2232 = vst [vmem:[#allocation3 + $0x80] sm:$0xff] %v2200
      %2233 = vst [vmem:[#allocation3 + $0x88] sm:$0xff] %v2201
      %2234 = vst [vmem:[#allocation3 + $0x90] sm:$0xff] %v2202
      %2235 = vst [vmem:[#allocation3 + $0x98] sm:$0xff] %v2203
      %2236 = vst [vmem:[#allocation3 + $0xa0] sm:$0xff] %v2204
      %2237 = vst [vmem:[#allocation3 + $0xa8] sm:$0xff] %v2205
      %2238 = vst [vmem:[#allocation3 + $0xb0] sm:$0xff] %v2206
      %2239 = vst [vmem:[#allocation3 + $0xb8] sm:$0xff] %v2207
      %2240 = vst [vmem:[#allocation3 + $0xc0] sm:$0xff] %v2208
      %2241 = vst [vmem:[#allocation3 + $0xc8] sm:$0xff] %v2209
      %2242 = vst [vmem:[#allocation3 + $0xd0] sm:$0xff] %v2210
      %2243 = vst [vmem:[#allocation3 + $0xd8] sm:$0xff] %v2211
      %2244 = vst [vmem:[#allocation3 + $0xe0] sm:$0xff] %v2212
      %2245 = vst [vmem:[#allocation3 + $0xe8] sm:$0xff] %v2213
      %2246 = vst [vmem:[#allocation3 + $0xf0] sm:$0xff] %v2214
      %2247 = vst [vmem:[#allocation3 + $0xf8] sm:$0xff] %v2215
      %v2248 = vld [vmem:[%s1563 + $0x2] sm:$0xff]
      %v2249 = vld [vmem:[%s1563 + $0xa] sm:$0xff]
      %v2250 = vld [vmem:[%s1563 + $0x1a] sm:$0xff]
      %v2251 = vld [vmem:[%s1563 + $0x22] sm:$0xff]
      %v2252 = vld [vmem:[%s1563 + $0x32] sm:$0xff]
      %v2253 = vld [vmem:[%s1563 + $0x3a] sm:$0xff]
      %v2254 = vld [vmem:[%s1563 + $0x4a] sm:$0xff]
      %v2255 = vld [vmem:[%s1563 + $0x52] sm:$0xff]
      %v2256 = vld [vmem:[%s1563 + $0x62] sm:$0xff]
      %v2257 = vld [vmem:[%s1563 + $0x6a] sm:$0xff]
      %v2258 = vld [vmem:[%s1563 + $0x7a] sm:$0xff]
      %v2259 = vld [vmem:[%s1563 + $0x82] sm:$0xff]
      %v2260 = vld [vmem:[%s1563 + $0x92] sm:$0xff]
      %v2261 = vld [vmem:[%s1563 + $0x9a] sm:$0xff]
      %v2262 = vld [vmem:[%s1563 + $0xaa] sm:$0xff]
      %v2263 = vld [vmem:[%s1563 + $0xb2] sm:$0xff]
      %v2264 = vld [vmem:[%s1563 + $0xc2] sm:$0xff]
      %v2265 = vld [vmem:[%s1563 + $0xca] sm:$0xff]
      %v2266 = vld [vmem:[%s1563 + $0xda] sm:$0xff]
      %v2267 = vld [vmem:[%s1563 + $0xe2] sm:$0xff]
      %v2268 = vld [vmem:[%s1563 + $0xf2] sm:$0xff]
      %v2269 = vld [vmem:[%s1563 + $0xfa] sm:$0xff]
      %v2270 = vld [vmem:[%s1563 + $0x10a] sm:$0xff]
      %v2271 = vld [vmem:[%s1563 + $0x112] sm:$0xff]
      %v2272 = vld [vmem:[%s1563 + $0x122] sm:$0xff]
      %v2273 = vld [vmem:[%s1563 + $0x12a] sm:$0xff]
      %v2274 = vld [vmem:[%s1563 + $0x13a] sm:$0xff]
      %v2275 = vld [vmem:[%s1563 + $0x142] sm:$0xff]
      %v2276 = vld [vmem:[%s1563 + $0x152] sm:$0xff]
      %v2277 = vld [vmem:[%s1563 + $0x15a] sm:$0xff]
      %v2278 = vld [vmem:[%s1563 + $0x16a] sm:$0xff]
      %v2279 = vld [vmem:[%s1563 + $0x172] sm:$0xff]
      %v2280 = vld [vmem:[#allocation3] sm:$0xff]
      %v2281 = vld [vmem:[#allocation3 + $0x8] sm:$0xff]
      %v2282 = vld [vmem:[#allocation3 + $0x10] sm:$0xff]
      %v2283 = vld [vmem:[#allocation3 + $0x18] sm:$0xff]
      %v2284 = vld [vmem:[#allocation3 + $0x20] sm:$0xff]
      %v2285 = vld [vmem:[#allocation3 + $0x28] sm:$0xff]
      %v2286 = vld [vmem:[#allocation3 + $0x30] sm:$0xff]
      %v2287 = vld [vmem:[#allocation3 + $0x38] sm:$0xff]
      %v2288 = vld [vmem:[#allocation3 + $0x40] sm:$0xff]
      %v2289 = vld [vmem:[#allocation3 + $0x48] sm:$0xff]
      %v2290 = vld [vmem:[#allocation3 + $0x50] sm:$0xff]
      %v2291 = vld [vmem:[#allocation3 + $0x58] sm:$0xff]
      %v2292 = vld [vmem:[#allocation3 + $0x60] sm:$0xff]
      %v2293 = vld [vmem:[#allocation3 + $0x68] sm:$0xff]
      %v2294 = vld [vmem:[#allocation3 + $0x70] sm:$0xff]
      %v2295 = vld [vmem:[#allocation3 + $0x78] sm:$0xff]
      %v2296 = vld [vmem:[#allocation3 + $0x80] sm:$0xff]
      %v2297 = vld [vmem:[#allocation3 + $0x88] sm:$0xff]
      %v2298 = vld [vmem:[#allocation3 + $0x90] sm:$0xff]
      %v2299 = vld [vmem:[#allocation3 + $0x98] sm:$0xff]
      %v2300 = vld [vmem:[#allocation3 + $0xa0] sm:$0xff]
      %v2301 = vld [vmem:[#allocation3 + $0xa8] sm:$0xff]
      %v2302 = vld [vmem:[#allocation3 + $0xb0] sm:$0xff]
      %v2303 = vld [vmem:[#allocation3 + $0xb8] sm:$0xff]
      %v2304 = vld [vmem:[#allocation3 + $0xc0] sm:$0xff]
      %v2305 = vld [vmem:[#allocation3 + $0xc8] sm:$0xff]
      %v2306 = vld [vmem:[#allocation3 + $0xd0] sm:$0xff]
      %v2307 = vld [vmem:[#allocation3 + $0xd8] sm:$0xff]
      %v2308 = vld [vmem:[#allocation3 + $0xe0] sm:$0xff]
      %v2309 = vld [vmem:[#allocation3 + $0xe8] sm:$0xff]
      %v2310 = vld [vmem:[#allocation3 + $0xf0] sm:$0xff]
      %v2311 = vld [vmem:[#allocation3 + $0xf8] sm:$0xff]
      %s2312 = scalar_lea.vmem %s2, 20
      %v2313 = vld [vmem:[%s2312] sm:$0xf]
      %v2315 = vsel %vm445, %v2248, 0
      %v2318 = vsel %vm445, %v2249, 0
      %v2321 = vsel %vm445, %v2250, 0
      %v2324 = vsel %vm445, %v2251, 0
      %v2327 = vsel %vm445, %v2252, 0
      %v2330 = vsel %vm445, %v2253, 0
      %v2333 = vsel %vm445, %v2254, 0
      %v2336 = vsel %vm445, %v2255, 0
      %v2339 = vsel %vm445, %v2256, 0
      %v2342 = vsel %vm445, %v2257, 0
      %v2345 = vsel %vm445, %v2258, 0
      %v2348 = vsel %vm445, %v2259, 0
      %v2351 = vsel %vm445, %v2260, 0
      %v2354 = vsel %vm445, %v2261, 0
      %v2357 = vsel %vm445, %v2262, 0
      %v2360 = vsel %vm445, %v2263, 0
      %v2363 = vsel %vm445, %v2264, 0
      %v2366 = vsel %vm445, %v2265, 0
      %v2369 = vsel %vm445, %v2266, 0
      %v2372 = vsel %vm445, %v2267, 0
      %v2375 = vsel %vm445, %v2268, 0
      %v2378 = vsel %vm445, %v2269, 0
      %v2381 = vsel %vm445, %v2270, 0
      %v2384 = vsel %vm445, %v2271, 0
      %v2387 = vsel %vm445, %v2272, 0
      %v2390 = vsel %vm445, %v2273, 0
      %v2393 = vsel %vm445, %v2274, 0
      %v2396 = vsel %vm445, %v2275, 0
      %v2399 = vsel %vm445, %v2276, 0
      %v2402 = vsel %vm445, %v2277, 0
      %v2405 = vsel %vm445, %v2278, 0
      %v2408 = vsel %vm445, %v2279, 0
      %v2411 = vsel %vm698, %v2313, 0
      %2413 = vmatpush.msra.mxu0 0.0
      %2414 = vmatpush.msra.mxu0 0.0
      %2415 = vmatpush.msra.mxu0 0.0
      %2416 = vmatpush.msra.mxu0 0.0
      %2417 = vmatpush.msra.mxu0 0.0
      %2418 = vmatpush.msra.mxu0 0.0
      %2419 = vmatpush.msra.mxu0 0.0
      %2420 = vmatpush.msra.mxu0 0.0
      %2421 = vmatpush.msra.mxu0 0.0
      %2422 = vmatpush.msra.mxu0 0.0
      %2423 = vmatpush.msra.mxu0 0.0
      %2424 = vmatpush.msra.mxu0 0.0
      %2425 = vmatpush.msra.mxu0 0.0
      %2426 = vmatpush.msra.mxu0 0.0
      %2427 = vmatpush.msra.mxu0 0.0
      %2428 = vmatpush.msra.mxu0 %v2411
      %2429 = vmatmul.f32.gmra.mxu0 %v2315
      %v2430 = vpop.f32.mrf.mxu0
      %v2431 = vadd.f32 0.0, %v2430
      %2432 = vmatmul.f32.gmra.mxu0 %v2318
      %v2433 = vpop.f32.mrf.mxu0
      %v2434 = vadd.f32 0.0, %v2433
      %2435 = vmatmul.f32.gmra.mxu0 %v2321
      %v2436 = vpop.f32.mrf.mxu0
      %v2437 = vadd.f32 0.0, %v2436
      %2438 = vmatmul.f32.gmra.mxu0 %v2324
      %v2439 = vpop.f32.mrf.mxu0
      %v2440 = vadd.f32 0.0, %v2439
      %2441 = vmatmul.f32.gmra.mxu0 %v2327
      %v2442 = vpop.f32.mrf.mxu0
      %v2443 = vadd.f32 0.0, %v2442
      %2444 = vmatmul.f32.gmra.mxu0 %v2330
      %v2445 = vpop.f32.mrf.mxu0
      %v2446 = vadd.f32 0.0, %v2445
      %2447 = vmatmul.f32.gmra.mxu0 %v2333
      %v2448 = vpop.f32.mrf.mxu0
      %v2449 = vadd.f32 0.0, %v2448
      %2450 = vmatmul.f32.gmra.mxu0 %v2336
      %v2451 = vpop.f32.mrf.mxu0
      %v2452 = vadd.f32 0.0, %v2451
      %2453 = vmatmul.f32.gmra.mxu0 %v2339
      %v2454 = vpop.f32.mrf.mxu0
      %v2455 = vadd.f32 0.0, %v2454
      %2456 = vmatmul.f32.gmra.mxu0 %v2342
      %v2457 = vpop.f32.mrf.mxu0
      %v2458 = vadd.f32 0.0, %v2457
      %2459 = vmatmul.f32.gmra.mxu0 %v2345
      %v2460 = vpop.f32.mrf.mxu0
      %v2461 = vadd.f32 0.0, %v2460
      %2462 = vmatmul.f32.gmra.mxu0 %v2348
      %v2463 = vpop.f32.mrf.mxu0
      %v2464 = vadd.f32 0.0, %v2463
      %2465 = vmatmul.f32.gmra.mxu0 %v2351
      %v2466 = vpop.f32.mrf.mxu0
      %v2467 = vadd.f32 0.0, %v2466
      %2468 = vmatmul.f32.gmra.mxu0 %v2354
      %v2469 = vpop.f32.mrf.mxu0
      %v2470 = vadd.f32 0.0, %v2469
      %2471 = vmatmul.f32.gmra.mxu0 %v2357
      %v2472 = vpop.f32.mrf.mxu0
      %v2473 = vadd.f32 0.0, %v2472
      %2474 = vmatmul.f32.gmra.mxu0 %v2360
      %v2475 = vpop.f32.mrf.mxu0
      %v2476 = vadd.f32 0.0, %v2475
      %2477 = vmatmul.f32.gmra.mxu0 %v2363
      %v2478 = vpop.f32.mrf.mxu0
      %v2479 = vadd.f32 0.0, %v2478
      %2480 = vmatmul.f32.gmra.mxu0 %v2366
      %v2481 = vpop.f32.mrf.mxu0
      %v2482 = vadd.f32 0.0, %v2481
      %2483 = vmatmul.f32.gmra.mxu0 %v2369
      %v2484 = vpop.f32.mrf.mxu0
      %v2485 = vadd.f32 0.0, %v2484
      %2486 = vmatmul.f32.gmra.mxu0 %v2372
      %v2487 = vpop.f32.mrf.mxu0
      %v2488 = vadd.f32 0.0, %v2487
      %2489 = vmatmul.f32.gmra.mxu0 %v2375
      %v2490 = vpop.f32.mrf.mxu0
      %v2491 = vadd.f32 0.0, %v2490
      %2492 = vmatmul.f32.gmra.mxu0 %v2378
      %v2493 = vpop.f32.mrf.mxu0
      %v2494 = vadd.f32 0.0, %v2493
      %2495 = vmatmul.f32.gmra.mxu0 %v2381
      %v2496 = vpop.f32.mrf.mxu0
      %v2497 = vadd.f32 0.0, %v2496
      %2498 = vmatmul.f32.gmra.mxu0 %v2384
      %v2499 = vpop.f32.mrf.mxu0
      %v2500 = vadd.f32 0.0, %v2499
      %2501 = vmatmul.f32.gmra.mxu0 %v2387
      %v2502 = vpop.f32.mrf.mxu0
      %v2503 = vadd.f32 0.0, %v2502
      %2504 = vmatmul.f32.gmra.mxu0 %v2390
      %v2505 = vpop.f32.mrf.mxu0
      %v2506 = vadd.f32 0.0, %v2505
      %2507 = vmatmul.f32.gmra.mxu0 %v2393
      %v2508 = vpop.f32.mrf.mxu0
      %v2509 = vadd.f32 0.0, %v2508
      %2510 = vmatmul.f32.gmra.mxu0 %v2396
      %v2511 = vpop.f32.mrf.mxu0
      %v2512 = vadd.f32 0.0, %v2511
      %2513 = vmatmul.f32.gmra.mxu0 %v2399
      %v2514 = vpop.f32.mrf.mxu0
      %v2515 = vadd.f32 0.0, %v2514
      %2516 = vmatmul.f32.gmra.mxu0 %v2402
      %v2517 = vpop.f32.mrf.mxu0
      %v2518 = vadd.f32 0.0, %v2517
      %2519 = vmatmul.f32.gmra.mxu0 %v2405
      %v2520 = vpop.f32.mrf.mxu0
      %v2521 = vadd.f32 0.0, %v2520
      %2522 = vmatmul.f32.gmra.mxu0 %v2408
      %v2523 = vpop.f32.mrf.mxu0
      %v2524 = vadd.f32 0.0, %v2523
      %2525 = vdwg.mxu0
      %v2526 = vadd.f32 %v2280, %v2431
      %v2527 = vadd.f32 %v2281, %v2434
      %v2528 = vadd.f32 %v2282, %v2437
      %v2529 = vadd.f32 %v2283, %v2440
      %v2530 = vadd.f32 %v2284, %v2443
      %v2531 = vadd.f32 %v2285, %v2446
      %v2532 = vadd.f32 %v2286, %v2449
      %v2533 = vadd.f32 %v2287, %v2452
      %v2534 = vadd.f32 %v2288, %v2455
      %v2535 = vadd.f32 %v2289, %v2458
      %v2536 = vadd.f32 %v2290, %v2461
      %v2537 = vadd.f32 %v2291, %v2464
      %v2538 = vadd.f32 %v2292, %v2467
      %v2539 = vadd.f32 %v2293, %v2470
      %v2540 = vadd.f32 %v2294, %v2473
      %v2541 = vadd.f32 %v2295, %v2476
      %v2542 = vadd.f32 %v2296, %v2479
      %v2543 = vadd.f32 %v2297, %v2482
      %v2544 = vadd.f32 %v2298, %v2485
      %v2545 = vadd.f32 %v2299, %v2488
      %v2546 = vadd.f32 %v2300, %v2491
      %v2547 = vadd.f32 %v2301, %v2494
      %v2548 = vadd.f32 %v2302, %v2497
      %v2549 = vadd.f32 %v2303, %v2500
      %v2550 = vadd.f32 %v2304, %v2503
      %v2551 = vadd.f32 %v2305, %v2506
      %v2552 = vadd.f32 %v2306, %v2509
      %v2553 = vadd.f32 %v2307, %v2512
      %v2554 = vadd.f32 %v2308, %v2515
      %v2555 = vadd.f32 %v2309, %v2518
      %v2556 = vadd.f32 %v2310, %v2521
      %v2557 = vadd.f32 %v2311, %v2524
      %2558 = vst [vmem:[#allocation3] sm:$0xff] %v2526
      %2559 = vst [vmem:[#allocation3 + $0x8] sm:$0xff] %v2527
      %2560 = vst [vmem:[#allocation3 + $0x10] sm:$0xff] %v2528
      %2561 = vst [vmem:[#allocation3 + $0x18] sm:$0xff] %v2529
      %2562 = vst [vmem:[#allocation3 + $0x20] sm:$0xff] %v2530
      %2563 = vst [vmem:[#allocation3 + $0x28] sm:$0xff] %v2531
      %2564 = vst [vmem:[#allocation3 + $0x30] sm:$0xff] %v2532
      %2565 = vst [vmem:[#allocation3 + $0x38] sm:$0xff] %v2533
      %2566 = vst [vmem:[#allocation3 + $0x40] sm:$0xff] %v2534
      %2567 = vst [vmem:[#allocation3 + $0x48] sm:$0xff] %v2535
      %2568 = vst [vmem:[#allocation3 + $0x50] sm:$0xff] %v2536
      %2569 = vst [vmem:[#allocation3 + $0x58] sm:$0xff] %v2537
      %2570 = vst [vmem:[#allocation3 + $0x60] sm:$0xff] %v2538
      %2571 = vst [vmem:[#allocation3 + $0x68] sm:$0xff] %v2539
      %2572 = vst [vmem:[#allocation3 + $0x70] sm:$0xff] %v2540
      %2573 = vst [vmem:[#allocation3 + $0x78] sm:$0xff] %v2541
      %2574 = vst [vmem:[#allocation3 + $0x80] sm:$0xff] %v2542
      %2575 = vst [vmem:[#allocation3 + $0x88] sm:$0xff] %v2543
      %2576 = vst [vmem:[#allocation3 + $0x90] sm:$0xff] %v2544
      %2577 = vst [vmem:[#allocation3 + $0x98] sm:$0xff] %v2545
      %2578 = vst [vmem:[#allocation3 + $0xa0] sm:$0xff] %v2546
      %2579 = vst [vmem:[#allocation3 + $0xa8] sm:$0xff] %v2547
      %2580 = vst [vmem:[#allocation3 + $0xb0] sm:$0xff] %v2548
      %2581 = vst [vmem:[#allocation3 + $0xb8] sm:$0xff] %v2549
      %2582 = vst [vmem:[#allocation3 + $0xc0] sm:$0xff] %v2550
      %2583 = vst [vmem:[#allocation3 + $0xc8] sm:$0xff] %v2551
      %2584 = vst [vmem:[#allocation3 + $0xd0] sm:$0xff] %v2552
      %2585 = vst [vmem:[#allocation3 + $0xd8] sm:$0xff] %v2553
      %2586 = vst [vmem:[#allocation3 + $0xe0] sm:$0xff] %v2554
      %2587 = vst [vmem:[#allocation3 + $0xe8] sm:$0xff] %v2555
      %2588 = vst [vmem:[#allocation3 + $0xf0] sm:$0xff] %v2556
      %2589 = vst [vmem:[#allocation3 + $0xf8] sm:$0xff] %v2557
      %s2590 = scalar_lea.vmem [#allocation2], 48
      %v2591 = vld [vmem:[%s2590] sm:$0xff]
      %v2592 = vld [vmem:[%s2590 + $0x8] sm:$0xff]
      %v2593 = vld [vmem:[%s2590 + $0x18] sm:$0xff]
      %v2594 = vld [vmem:[%s2590 + $0x20] sm:$0xff]
      %v2595 = vld [vmem:[%s2590 + $0x30] sm:$0xff]
      %v2596 = vld [vmem:[%s2590 + $0x38] sm:$0xff]
      %v2597 = vld [vmem:[%s2590 + $0x48] sm:$0xff]
      %v2598 = vld [vmem:[%s2590 + $0x50] sm:$0xff]
      %v2599 = vld [vmem:[%s2590 + $0x60] sm:$0xff]
      %v2600 = vld [vmem:[%s2590 + $0x68] sm:$0xff]
      %v2601 = vld [vmem:[%s2590 + $0x78] sm:$0xff]
      %v2602 = vld [vmem:[%s2590 + $0x80] sm:$0xff]
      %v2603 = vld [vmem:[%s2590 + $0x90] sm:$0xff]
      %v2604 = vld [vmem:[%s2590 + $0x98] sm:$0xff]
      %v2605 = vld [vmem:[%s2590 + $0xa8] sm:$0xff]
      %v2606 = vld [vmem:[%s2590 + $0xb0] sm:$0xff]
      %v2607 = vld [vmem:[%s2590 + $0xc0] sm:$0xff]
      %v2608 = vld [vmem:[%s2590 + $0xc8] sm:$0xff]
      %v2609 = vld [vmem:[%s2590 + $0xd8] sm:$0xff]
      %v2610 = vld [vmem:[%s2590 + $0xe0] sm:$0xff]
      %v2611 = vld [vmem:[%s2590 + $0xf0] sm:$0xff]
      %v2612 = vld [vmem:[%s2590 + $0xf8] sm:$0xff]
      %v2613 = vld [vmem:[%s2590 + $0x108] sm:$0xff]
      %v2614 = vld [vmem:[%s2590 + $0x110] sm:$0xff]
      %v2615 = vld [vmem:[%s2590 + $0x120] sm:$0xff]
      %v2616 = vld [vmem:[%s2590 + $0x128] sm:$0xff]
      %v2617 = vld [vmem:[%s2590 + $0x138] sm:$0xff]
      %v2618 = vld [vmem:[%s2590 + $0x140] sm:$0xff]
      %v2619 = vld [vmem:[%s2590 + $0x150] sm:$0xff]
      %v2620 = vld [vmem:[%s2590 + $0x158] sm:$0xff]
      %v2621 = vld [vmem:[%s2590 + $0x168] sm:$0xff]
      %v2622 = vld [vmem:[%s2590 + $0x170] sm:$0xff]
      %v2623 = vld [vmem:[#allocation3] sm:$0xff]
      %v2624 = vld [vmem:[#allocation3 + $0x8] sm:$0xff]
      %v2625 = vld [vmem:[#allocation3 + $0x10] sm:$0xff]
      %v2626 = vld [vmem:[#allocation3 + $0x18] sm:$0xff]
      %v2627 = vld [vmem:[#allocation3 + $0x20] sm:$0xff]
      %v2628 = vld [vmem:[#allocation3 + $0x28] sm:$0xff]
      %v2629 = vld [vmem:[#allocation3 + $0x30] sm:$0xff]
      %v2630 = vld [vmem:[#allocation3 + $0x38] sm:$0xff]
      %v2631 = vld [vmem:[#allocation3 + $0x40] sm:$0xff]
      %v2632 = vld [vmem:[#allocation3 + $0x48] sm:$0xff]
      %v2633 = vld [vmem:[#allocation3 + $0x50] sm:$0xff]
      %v2634 = vld [vmem:[#allocation3 + $0x58] sm:$0xff]
      %v2635 = vld [vmem:[#allocation3 + $0x60] sm:$0xff]
      %v2636 = vld [vmem:[#allocation3 + $0x68] sm:$0xff]
      %v2637 = vld [vmem:[#allocation3 + $0x70] sm:$0xff]
      %v2638 = vld [vmem:[#allocation3 + $0x78] sm:$0xff]
      %v2639 = vld [vmem:[#allocation3 + $0x80] sm:$0xff]
      %v2640 = vld [vmem:[#allocation3 + $0x88] sm:$0xff]
      %v2641 = vld [vmem:[#allocation3 + $0x90] sm:$0xff]
      %v2642 = vld [vmem:[#allocation3 + $0x98] sm:$0xff]
      %v2643 = vld [vmem:[#allocation3 + $0xa0] sm:$0xff]
      %v2644 = vld [vmem:[#allocation3 + $0xa8] sm:$0xff]
      %v2645 = vld [vmem:[#allocation3 + $0xb0] sm:$0xff]
      %v2646 = vld [vmem:[#allocation3 + $0xb8] sm:$0xff]
      %v2647 = vld [vmem:[#allocation3 + $0xc0] sm:$0xff]
      %v2648 = vld [vmem:[#allocation3 + $0xc8] sm:$0xff]
      %v2649 = vld [vmem:[#allocation3 + $0xd0] sm:$0xff]
      %v2650 = vld [vmem:[#allocation3 + $0xd8] sm:$0xff]
      %v2651 = vld [vmem:[#allocation3 + $0xe0] sm:$0xff]
      %v2652 = vld [vmem:[#allocation3 + $0xe8] sm:$0xff]
      %v2653 = vld [vmem:[#allocation3 + $0xf0] sm:$0xff]
      %v2654 = vld [vmem:[#allocation3 + $0xf8] sm:$0xff]
      %s2655 = scalar_lea.vmem %s2, 24
      %v2656 = vld [vmem:[%s2655] sm:$0xf]
      %v2658 = vsel %vm445, %v2591, 0
      %v2661 = vsel %vm445, %v2592, 0
      %v2664 = vsel %vm445, %v2593, 0
      %v2667 = vsel %vm445, %v2594, 0
      %v2670 = vsel %vm445, %v2595, 0
      %v2673 = vsel %vm445, %v2596, 0
      %v2676 = vsel %vm445, %v2597, 0
      %v2679 = vsel %vm445, %v2598, 0
      %v2682 = vsel %vm445, %v2599, 0
      %v2685 = vsel %vm445, %v2600, 0
      %v2688 = vsel %vm445, %v2601, 0
      %v2691 = vsel %vm445, %v2602, 0
      %v2694 = vsel %vm445, %v2603, 0
      %v2697 = vsel %vm445, %v2604, 0
      %v2700 = vsel %vm445, %v2605, 0
      %v2703 = vsel %vm445, %v2606, 0
      %v2706 = vsel %vm445, %v2607, 0
      %v2709 = vsel %vm445, %v2608, 0
      %v2712 = vsel %vm445, %v2609, 0
      %v2715 = vsel %vm445, %v2610, 0
      %v2718 = vsel %vm445, %v2611, 0
      %v2721 = vsel %vm445, %v2612, 0
      %v2724 = vsel %vm445, %v2613, 0
      %v2727 = vsel %vm445, %v2614, 0
      %v2730 = vsel %vm445, %v2615, 0
      %v2733 = vsel %vm445, %v2616, 0
      %v2736 = vsel %vm445, %v2617, 0
      %v2739 = vsel %vm445, %v2618, 0
      %v2742 = vsel %vm445, %v2619, 0
      %v2745 = vsel %vm445, %v2620, 0
      %v2748 = vsel %vm445, %v2621, 0
      %v2751 = vsel %vm445, %v2622, 0
      %v2754 = vsel %vm698, %v2656, 0
      %2756 = vmatpush.msra.mxu0 0.0
      %2757 = vmatpush.msra.mxu0 0.0
      %2758 = vmatpush.msra.mxu0 0.0
      %2759 = vmatpush.msra.mxu0 0.0
      %2760 = vmatpush.msra.mxu0 0.0
      %2761 = vmatpush.msra.mxu0 0.0
      %2762 = vmatpush.msra.mxu0 0.0
      %2763 = vmatpush.msra.mxu0 0.0
      %2764 = vmatpush.msra.mxu0 0.0
      %2765 = vmatpush.msra.mxu0 0.0
      %2766 = vmatpush.msra.mxu0 0.0
      %2767 = vmatpush.msra.mxu0 0.0
      %2768 = vmatpush.msra.mxu0 0.0
      %2769 = vmatpush.msra.mxu0 0.0
      %2770 = vmatpush.msra.mxu0 0.0
      %2771 = vmatpush.msra.mxu0 %v2754
      %2772 = vmatmul.f32.gmra.mxu0 %v2658
      %v2773 = vpop.f32.mrf.mxu0
      %v2774 = vadd.f32 0.0, %v2773
      %2775 = vmatmul.f32.gmra.mxu0 %v2661
      %v2776 = vpop.f32.mrf.mxu0
      %v2777 = vadd.f32 0.0, %v2776
      %2778 = vmatmul.f32.gmra.mxu0 %v2664
      %v2779 = vpop.f32.mrf.mxu0
      %v2780 = vadd.f32 0.0, %v2779
      %2781 = vmatmul.f32.gmra.mxu0 %v2667
      %v2782 = vpop.f32.mrf.mxu0
      %v2783 = vadd.f32 0.0, %v2782
      %2784 = vmatmul.f32.gmra.mxu0 %v2670
      %v2785 = vpop.f32.mrf.mxu0
      %v2786 = vadd.f32 0.0, %v2785
      %2787 = vmatmul.f32.gmra.mxu0 %v2673
      %v2788 = vpop.f32.mrf.mxu0
      %v2789 = vadd.f32 0.0, %v2788
      %2790 = vmatmul.f32.gmra.mxu0 %v2676
      %v2791 = vpop.f32.mrf.mxu0
      %v2792 = vadd.f32 0.0, %v2791
      %2793 = vmatmul.f32.gmra.mxu0 %v2679
      %v2794 = vpop.f32.mrf.mxu0
      %v2795 = vadd.f32 0.0, %v2794
      %2796 = vmatmul.f32.gmra.mxu0 %v2682
      %v2797 = vpop.f32.mrf.mxu0
      %v2798 = vadd.f32 0.0, %v2797
      %2799 = vmatmul.f32.gmra.mxu0 %v2685
      %v2800 = vpop.f32.mrf.mxu0
      %v2801 = vadd.f32 0.0, %v2800
      %2802 = vmatmul.f32.gmra.mxu0 %v2688
      %v2803 = vpop.f32.mrf.mxu0
      %v2804 = vadd.f32 0.0, %v2803
      %2805 = vmatmul.f32.gmra.mxu0 %v2691
      %v2806 = vpop.f32.mrf.mxu0
      %v2807 = vadd.f32 0.0, %v2806
      %2808 = vmatmul.f32.gmra.mxu0 %v2694
      %v2809 = vpop.f32.mrf.mxu0
      %v2810 = vadd.f32 0.0, %v2809
      %2811 = vmatmul.f32.gmra.mxu0 %v2697
      %v2812 = vpop.f32.mrf.mxu0
      %v2813 = vadd.f32 0.0, %v2812
      %2814 = vmatmul.f32.gmra.mxu0 %v2700
      %v2815 = vpop.f32.mrf.mxu0
      %v2816 = vadd.f32 0.0, %v2815
      %2817 = vmatmul.f32.gmra.mxu0 %v2703
      %v2818 = vpop.f32.mrf.mxu0
      %v2819 = vadd.f32 0.0, %v2818
      %2820 = vmatmul.f32.gmra.mxu0 %v2706
      %v2821 = vpop.f32.mrf.mxu0
      %v2822 = vadd.f32 0.0, %v2821
      %2823 = vmatmul.f32.gmra.mxu0 %v2709
      %v2824 = vpop.f32.mrf.mxu0
      %v2825 = vadd.f32 0.0, %v2824
      %2826 = vmatmul.f32.gmra.mxu0 %v2712
      %v2827 = vpop.f32.mrf.mxu0
      %v2828 = vadd.f32 0.0, %v2827
      %2829 = vmatmul.f32.gmra.mxu0 %v2715
      %v2830 = vpop.f32.mrf.mxu0
      %v2831 = vadd.f32 0.0, %v2830
      %2832 = vmatmul.f32.gmra.mxu0 %v2718
      %v2833 = vpop.f32.mrf.mxu0
      %v2834 = vadd.f32 0.0, %v2833
      %2835 = vmatmul.f32.gmra.mxu0 %v2721
      %v2836 = vpop.f32.mrf.mxu0
      %v2837 = vadd.f32 0.0, %v2836
      %2838 = vmatmul.f32.gmra.mxu0 %v2724
      %v2839 = vpop.f32.mrf.mxu0
      %v2840 = vadd.f32 0.0, %v2839
      %2841 = vmatmul.f32.gmra.mxu0 %v2727
      %v2842 = vpop.f32.mrf.mxu0
      %v2843 = vadd.f32 0.0, %v2842
      %2844 = vmatmul.f32.gmra.mxu0 %v2730
      %v2845 = vpop.f32.mrf.mxu0
      %v2846 = vadd.f32 0.0, %v2845
      %2847 = vmatmul.f32.gmra.mxu0 %v2733
      %v2848 = vpop.f32.mrf.mxu0
      %v2849 = vadd.f32 0.0, %v2848
      %2850 = vmatmul.f32.gmra.mxu0 %v2736
      %v2851 = vpop.f32.mrf.mxu0
      %v2852 = vadd.f32 0.0, %v2851
      %2853 = vmatmul.f32.gmra.mxu0 %v2739
      %v2854 = vpop.f32.mrf.mxu0
      %v2855 = vadd.f32 0.0, %v2854
      %2856 = vmatmul.f32.gmra.mxu0 %v2742
      %v2857 = vpop.f32.mrf.mxu0
      %v2858 = vadd.f32 0.0, %v2857
      %2859 = vmatmul.f32.gmra.mxu0 %v2745
      %v2860 = vpop.f32.mrf.mxu0
      %v2861 = vadd.f32 0.0, %v2860
      %2862 = vmatmul.f32.gmra.mxu0 %v2748
      %v2863 = vpop.f32.mrf.mxu0
      %v2864 = vadd.f32 0.0, %v2863
      %2865 = vmatmul.f32.gmra.mxu0 %v2751
      %v2866 = vpop.f32.mrf.mxu0
      %v2867 = vadd.f32 0.0, %v2866
      %2868 = vdwg.mxu0
      %v2869 = vadd.f32 %v2623, %v2774
      %v2870 = vadd.f32 %v2624, %v2777
      %v2871 = vadd.f32 %v2625, %v2780
      %v2872 = vadd.f32 %v2626, %v2783
      %v2873 = vadd.f32 %v2627, %v2786
      %v2874 = vadd.f32 %v2628, %v2789
      %v2875 = vadd.f32 %v2629, %v2792
      %v2876 = vadd.f32 %v2630, %v2795
      %v2877 = vadd.f32 %v2631, %v2798
      %v2878 = vadd.f32 %v2632, %v2801
      %v2879 = vadd.f32 %v2633, %v2804
      %v2880 = vadd.f32 %v2634, %v2807
      %v2881 = vadd.f32 %v2635, %v2810
      %v2882 = vadd.f32 %v2636, %v2813
      %v2883 = vadd.f32 %v2637, %v2816
      %v2884 = vadd.f32 %v2638, %v2819
      %v2885 = vadd.f32 %v2639, %v2822
      %v2886 = vadd.f32 %v2640, %v2825
      %v2887 = vadd.f32 %v2641, %v2828
      %v2888 = vadd.f32 %v2642, %v2831
      %v2889 = vadd.f32 %v2643, %v2834
      %v2890 = vadd.f32 %v2644, %v2837
      %v2891 = vadd.f32 %v2645, %v2840
      %v2892 = vadd.f32 %v2646, %v2843
      %v2893 = vadd.f32 %v2647, %v2846
      %v2894 = vadd.f32 %v2648, %v2849
      %v2895 = vadd.f32 %v2649, %v2852
      %v2896 = vadd.f32 %v2650, %v2855
      %v2897 = vadd.f32 %v2651, %v2858
      %v2898 = vadd.f32 %v2652, %v2861
      %v2899 = vadd.f32 %v2653, %v2864
      %v2900 = vadd.f32 %v2654, %v2867
      %2901 = vst [vmem:[#allocation3] sm:$0xff] %v2869
      %2902 = vst [vmem:[#allocation3 + $0x8] sm:$0xff] %v2870
      %2903 = vst [vmem:[#allocation3 + $0x10] sm:$0xff] %v2871
      %2904 = vst [vmem:[#allocation3 + $0x18] sm:$0xff] %v2872
      %2905 = vst [vmem:[#allocation3 + $0x20] sm:$0xff] %v2873
      %2906 = vst [vmem:[#allocation3 + $0x28] sm:$0xff] %v2874
      %2907 = vst [vmem:[#allocation3 + $0x30] sm:$0xff] %v2875
      %2908 = vst [vmem:[#allocation3 + $0x38] sm:$0xff] %v2876
      %2909 = vst [vmem:[#allocation3 + $0x40] sm:$0xff] %v2877
      %2910 = vst [vmem:[#allocation3 + $0x48] sm:$0xff] %v2878
      %2911 = vst [vmem:[#allocation3 + $0x50] sm:$0xff] %v2879
      %2912 = vst [vmem:[#allocation3 + $0x58] sm:$0xff] %v2880
      %2913 = vst [vmem:[#allocation3 + $0x60] sm:$0xff] %v2881
      %2914 = vst [vmem:[#allocation3 + $0x68] sm:$0xff] %v2882
      %2915 = vst [vmem:[#allocation3 + $0x70] sm:$0xff] %v2883
      %2916 = vst [vmem:[#allocation3 + $0x78] sm:$0xff] %v2884
      %2917 = vst [vmem:[#allocation3 + $0x80] sm:$0xff] %v2885
      %2918 = vst [vmem:[#allocation3 + $0x88] sm:$0xff] %v2886
      %2919 = vst [vmem:[#allocation3 + $0x90] sm:$0xff] %v2887
      %2920 = vst [vmem:[#allocation3 + $0x98] sm:$0xff] %v2888
      %2921 = vst [vmem:[#allocation3 + $0xa0] sm:$0xff] %v2889
      %2922 = vst [vmem:[#allocation3 + $0xa8] sm:$0xff] %v2890
      %2923 = vst [vmem:[#allocation3 + $0xb0] sm:$0xff] %v2891
      %2924 = vst [vmem:[#allocation3 + $0xb8] sm:$0xff] %v2892
      %2925 = vst [vmem:[#allocation3 + $0xc0] sm:$0xff] %v2893
      %2926 = vst [vmem:[#allocation3 + $0xc8] sm:$0xff] %v2894
      %2927 = vst [vmem:[#allocation3 + $0xd0] sm:$0xff] %v2895
      %2928 = vst [vmem:[#allocation3 + $0xd8] sm:$0xff] %v2896
      %2929 = vst [vmem:[#allocation3 + $0xe0] sm:$0xff] %v2897
      %2930 = vst [vmem:[#allocation3 + $0xe8] sm:$0xff] %v2898
      %2931 = vst [vmem:[#allocation3 + $0xf0] sm:$0xff] %v2899
      %2932 = vst [vmem:[#allocation3 + $0xf8] sm:$0xff] %v2900
      %v2933 = vld [vmem:[%s2590 + $0x1] sm:$0xff]
      %v2934 = vld [vmem:[%s2590 + $0x9] sm:$0xff]
      %v2935 = vld [vmem:[%s2590 + $0x19] sm:$0xff]
      %v2936 = vld [vmem:[%s2590 + $0x21] sm:$0xff]
      %v2937 = vld [vmem:[%s2590 + $0x31] sm:$0xff]
      %v2938 = vld [vmem:[%s2590 + $0x39] sm:$0xff]
      %v2939 = vld [vmem:[%s2590 + $0x49] sm:$0xff]
      %v2940 = vld [vmem:[%s2590 + $0x51] sm:$0xff]
      %v2941 = vld [vmem:[%s2590 + $0x61] sm:$0xff]
      %v2942 = vld [vmem:[%s2590 + $0x69] sm:$0xff]
      %v2943 = vld [vmem:[%s2590 + $0x79] sm:$0xff]
      %v2944 = vld [vmem:[%s2590 + $0x81] sm:$0xff]
      %v2945 = vld [vmem:[%s2590 + $0x91] sm:$0xff]
      %v2946 = vld [vmem:[%s2590 + $0x99] sm:$0xff]
      %v2947 = vld [vmem:[%s2590 + $0xa9] sm:$0xff]
      %v2948 = vld [vmem:[%s2590 + $0xb1] sm:$0xff]
      %v2949 = vld [vmem:[%s2590 + $0xc1] sm:$0xff]
      %v2950 = vld [vmem:[%s2590 + $0xc9] sm:$0xff]
      %v2951 = vld [vmem:[%s2590 + $0xd9] sm:$0xff]
      %v2952 = vld [vmem:[%s2590 + $0xe1] sm:$0xff]
      %v2953 = vld [vmem:[%s2590 + $0xf1] sm:$0xff]
      %v2954 = vld [vmem:[%s2590 + $0xf9] sm:$0xff]
      %v2955 = vld [vmem:[%s2590 + $0x109] sm:$0xff]
      %v2956 = vld [vmem:[%s2590 + $0x111] sm:$0xff]
      %v2957 = vld [vmem:[%s2590 + $0x121] sm:$0xff]
      %v2958 = vld [vmem:[%s2590 + $0x129] sm:$0xff]
      %v2959 = vld [vmem:[%s2590 + $0x139] sm:$0xff]
      %v2960 = vld [vmem:[%s2590 + $0x141] sm:$0xff]
      %v2961 = vld [vmem:[%s2590 + $0x151] sm:$0xff]
      %v2962 = vld [vmem:[%s2590 + $0x159] sm:$0xff]
      %v2963 = vld [vmem:[%s2590 + $0x169] sm:$0xff]
      %v2964 = vld [vmem:[%s2590 + $0x171] sm:$0xff]
      %v2965 = vld [vmem:[#allocation3] sm:$0xff]
      %v2966 = vld [vmem:[#allocation3 + $0x8] sm:$0xff]
      %v2967 = vld [vmem:[#allocation3 + $0x10] sm:$0xff]
      %v2968 = vld [vmem:[#allocation3 + $0x18] sm:$0xff]
      %v2969 = vld [vmem:[#allocation3 + $0x20] sm:$0xff]
      %v2970 = vld [vmem:[#allocation3 + $0x28] sm:$0xff]
      %v2971 = vld [vmem:[#allocation3 + $0x30] sm:$0xff]
      %v2972 = vld [vmem:[#allocation3 + $0x38] sm:$0xff]
      %v2973 = vld [vmem:[#allocation3 + $0x40] sm:$0xff]
      %v2974 = vld [vmem:[#allocation3 + $0x48] sm:$0xff]
      %v2975 = vld [vmem:[#allocation3 + $0x50] sm:$0xff]
      %v2976 = vld [vmem:[#allocation3 + $0x58] sm:$0xff]
      %v2977 = vld [vmem:[#allocation3 + $0x60] sm:$0xff]
      %v2978 = vld [vmem:[#allocation3 + $0x68] sm:$0xff]
      %v2979 = vld [vmem:[#allocation3 + $0x70] sm:$0xff]
      %v2980 = vld [vmem:[#allocation3 + $0x78] sm:$0xff]
      %v2981 = vld [vmem:[#allocation3 + $0x80] sm:$0xff]
      %v2982 = vld [vmem:[#allocation3 + $0x88] sm:$0xff]
      %v2983 = vld [vmem:[#allocation3 + $0x90] sm:$0xff]
      %v2984 = vld [vmem:[#allocation3 + $0x98] sm:$0xff]
      %v2985 = vld [vmem:[#allocation3 + $0xa0] sm:$0xff]
      %v2986 = vld [vmem:[#allocation3 + $0xa8] sm:$0xff]
      %v2987 = vld [vmem:[#allocation3 + $0xb0] sm:$0xff]
      %v2988 = vld [vmem:[#allocation3 + $0xb8] sm:$0xff]
      %v2989 = vld [vmem:[#allocation3 + $0xc0] sm:$0xff]
      %v2990 = vld [vmem:[#allocation3 + $0xc8] sm:$0xff]
      %v2991 = vld [vmem:[#allocation3 + $0xd0] sm:$0xff]
      %v2992 = vld [vmem:[#allocation3 + $0xd8] sm:$0xff]
      %v2993 = vld [vmem:[#allocation3 + $0xe0] sm:$0xff]
      %v2994 = vld [vmem:[#allocation3 + $0xe8] sm:$0xff]
      %v2995 = vld [vmem:[#allocation3 + $0xf0] sm:$0xff]
      %v2996 = vld [vmem:[#allocation3 + $0xf8] sm:$0xff]
      %s2997 = scalar_lea.vmem %s2, 28
      %v2998 = vld [vmem:[%s2997] sm:$0xf]
      %v3000 = vsel %vm445, %v2933, 0
      %v3003 = vsel %vm445, %v2934, 0
      %v3006 = vsel %vm445, %v2935, 0
      %v3009 = vsel %vm445, %v2936, 0
      %v3012 = vsel %vm445, %v2937, 0
      %v3015 = vsel %vm445, %v2938, 0
      %v3018 = vsel %vm445, %v2939, 0
      %v3021 = vsel %vm445, %v2940, 0
      %v3024 = vsel %vm445, %v2941, 0
      %v3027 = vsel %vm445, %v2942, 0
      %v3030 = vsel %vm445, %v2943, 0
      %v3033 = vsel %vm445, %v2944, 0
      %v3036 = vsel %vm445, %v2945, 0
      %v3039 = vsel %vm445, %v2946, 0
      %v3042 = vsel %vm445, %v2947, 0
      %v3045 = vsel %vm445, %v2948, 0
      %v3048 = vsel %vm445, %v2949, 0
      %v3051 = vsel %vm445, %v2950, 0
      %v3054 = vsel %vm445, %v2951, 0
      %v3057 = vsel %vm445, %v2952, 0
      %v3060 = vsel %vm445, %v2953, 0
      %v3063 = vsel %vm445, %v2954, 0
      %v3066 = vsel %vm445, %v2955, 0
      %v3069 = vsel %vm445, %v2956, 0
      %v3072 = vsel %vm445, %v2957, 0
      %v3075 = vsel %vm445, %v2958, 0
      %v3078 = vsel %vm445, %v2959, 0
      %v3081 = vsel %vm445, %v2960, 0
      %v3084 = vsel %vm445, %v2961, 0
      %v3087 = vsel %vm445, %v2962, 0
      %v3090 = vsel %vm445, %v2963, 0
      %v3093 = vsel %vm445, %v2964, 0
      %v3096 = vsel %vm698, %v2998, 0
      %3098 = vmatpush.msra.mxu0 0.0
      %3099 = vmatpush.msra.mxu0 0.0
      %3100 = vmatpush.msra.mxu0 0.0
      %3101 = vmatpush.msra.mxu0 0.0
      %3102 = vmatpush.msra.mxu0 0.0
      %3103 = vmatpush.msra.mxu0 0.0
      %3104 = vmatpush.msra.mxu0 0.0
      %3105 = vmatpush.msra.mxu0 0.0
      %3106 = vmatpush.msra.mxu0 0.0
      %3107 = vmatpush.msra.mxu0 0.0
      %3108 = vmatpush.msra.mxu0 0.0
      %3109 = vmatpush.msra.mxu0 0.0
      %3110 = vmatpush.msra.mxu0 0.0
      %3111 = vmatpush.msra.mxu0 0.0
      %3112 = vmatpush.msra.mxu0 0.0
      %3113 = vmatpush.msra.mxu0 %v3096
      %3114 = vmatmul.f32.gmra.mxu0 %v3000
      %v3115 = vpop.f32.mrf.mxu0
      %v3116 = vadd.f32 0.0, %v3115
      %3117 = vmatmul.f32.gmra.mxu0 %v3003
      %v3118 = vpop.f32.mrf.mxu0
      %v3119 = vadd.f32 0.0, %v3118
      %3120 = vmatmul.f32.gmra.mxu0 %v3006
      %v3121 = vpop.f32.mrf.mxu0
      %v3122 = vadd.f32 0.0, %v3121
      %3123 = vmatmul.f32.gmra.mxu0 %v3009
      %v3124 = vpop.f32.mrf.mxu0
      %v3125 = vadd.f32 0.0, %v3124
      %3126 = vmatmul.f32.gmra.mxu0 %v3012
      %v3127 = vpop.f32.mrf.mxu0
      %v3128 = vadd.f32 0.0, %v3127
      %3129 = vmatmul.f32.gmra.mxu0 %v3015
      %v3130 = vpop.f32.mrf.mxu0
      %v3131 = vadd.f32 0.0, %v3130
      %3132 = vmatmul.f32.gmra.mxu0 %v3018
      %v3133 = vpop.f32.mrf.mxu0
      %v3134 = vadd.f32 0.0, %v3133
      %3135 = vmatmul.f32.gmra.mxu0 %v3021
      %v3136 = vpop.f32.mrf.mxu0
      %v3137 = vadd.f32 0.0, %v3136
      %3138 = vmatmul.f32.gmra.mxu0 %v3024
      %v3139 = vpop.f32.mrf.mxu0
      %v3140 = vadd.f32 0.0, %v3139
      %3141 = vmatmul.f32.gmra.mxu0 %v3027
      %v3142 = vpop.f32.mrf.mxu0
      %v3143 = vadd.f32 0.0, %v3142
      %3144 = vmatmul.f32.gmra.mxu0 %v3030
      %v3145 = vpop.f32.mrf.mxu0
      %v3146 = vadd.f32 0.0, %v3145
      %3147 = vmatmul.f32.gmra.mxu0 %v3033
      %v3148 = vpop.f32.mrf.mxu0
      %v3149 = vadd.f32 0.0, %v3148
      %3150 = vmatmul.f32.gmra.mxu0 %v3036
      %v3151 = vpop.f32.mrf.mxu0
      %v3152 = vadd.f32 0.0, %v3151
      %3153 = vmatmul.f32.gmra.mxu0 %v3039
      %v3154 = vpop.f32.mrf.mxu0
      %v3155 = vadd.f32 0.0, %v3154
      %3156 = vmatmul.f32.gmra.mxu0 %v3042
      %v3157 = vpop.f32.mrf.mxu0
      %v3158 = vadd.f32 0.0, %v3157
      %3159 = vmatmul.f32.gmra.mxu0 %v3045
      %v3160 = vpop.f32.mrf.mxu0
      %v3161 = vadd.f32 0.0, %v3160
      %3162 = vmatmul.f32.gmra.mxu0 %v3048
      %v3163 = vpop.f32.mrf.mxu0
      %v3164 = vadd.f32 0.0, %v3163
      %3165 = vmatmul.f32.gmra.mxu0 %v3051
      %v3166 = vpop.f32.mrf.mxu0
      %v3167 = vadd.f32 0.0, %v3166
      %3168 = vmatmul.f32.gmra.mxu0 %v3054
      %v3169 = vpop.f32.mrf.mxu0
      %v3170 = vadd.f32 0.0, %v3169
      %3171 = vmatmul.f32.gmra.mxu0 %v3057
      %v3172 = vpop.f32.mrf.mxu0
      %v3173 = vadd.f32 0.0, %v3172
      %3174 = vmatmul.f32.gmra.mxu0 %v3060
      %v3175 = vpop.f32.mrf.mxu0
      %v3176 = vadd.f32 0.0, %v3175
      %3177 = vmatmul.f32.gmra.mxu0 %v3063
      %v3178 = vpop.f32.mrf.mxu0
      %v3179 = vadd.f32 0.0, %v3178
      %3180 = vmatmul.f32.gmra.mxu0 %v3066
      %v3181 = vpop.f32.mrf.mxu0
      %v3182 = vadd.f32 0.0, %v3181
      %3183 = vmatmul.f32.gmra.mxu0 %v3069
      %v3184 = vpop.f32.mrf.mxu0
      %v3185 = vadd.f32 0.0, %v3184
      %3186 = vmatmul.f32.gmra.mxu0 %v3072
      %v3187 = vpop.f32.mrf.mxu0
      %v3188 = vadd.f32 0.0, %v3187
      %3189 = vmatmul.f32.gmra.mxu0 %v3075
      %v3190 = vpop.f32.mrf.mxu0
      %v3191 = vadd.f32 0.0, %v3190
      %3192 = vmatmul.f32.gmra.mxu0 %v3078
      %v3193 = vpop.f32.mrf.mxu0
      %v3194 = vadd.f32 0.0, %v3193
      %3195 = vmatmul.f32.gmra.mxu0 %v3081
      %v3196 = vpop.f32.mrf.mxu0
      %v3197 = vadd.f32 0.0, %v3196
      %3198 = vmatmul.f32.gmra.mxu0 %v3084
      %v3199 = vpop.f32.mrf.mxu0
      %v3200 = vadd.f32 0.0, %v3199
      %3201 = vmatmul.f32.gmra.mxu0 %v3087
      %v3202 = vpop.f32.mrf.mxu0
      %v3203 = vadd.f32 0.0, %v3202
      %3204 = vmatmul.f32.gmra.mxu0 %v3090
      %v3205 = vpop.f32.mrf.mxu0
      %v3206 = vadd.f32 0.0, %v3205
      %3207 = vmatmul.f32.gmra.mxu0 %v3093
      %v3208 = vpop.f32.mrf.mxu0
      %v3209 = vadd.f32 0.0, %v3208
      %3210 = vdwg.mxu0
      %v3211 = vadd.f32 %v2965, %v3116
      %v3212 = vadd.f32 %v2966, %v3119
      %v3213 = vadd.f32 %v2967, %v3122
      %v3214 = vadd.f32 %v2968, %v3125
      %v3215 = vadd.f32 %v2969, %v3128
      %v3216 = vadd.f32 %v2970, %v3131
      %v3217 = vadd.f32 %v2971, %v3134
      %v3218 = vadd.f32 %v2972, %v3137
      %v3219 = vadd.f32 %v2973, %v3140
      %v3220 = vadd.f32 %v2974, %v3143
      %v3221 = vadd.f32 %v2975, %v3146
      %v3222 = vadd.f32 %v2976, %v3149
      %v3223 = vadd.f32 %v2977, %v3152
      %v3224 = vadd.f32 %v2978, %v3155
      %v3225 = vadd.f32 %v2979, %v3158
      %v3226 = vadd.f32 %v2980, %v3161
      %v3227 = vadd.f32 %v2981, %v3164
      %v3228 = vadd.f32 %v2982, %v3167
      %v3229 = vadd.f32 %v2983, %v3170
      %v3230 = vadd.f32 %v2984, %v3173
      %v3231 = vadd.f32 %v2985, %v3176
      %v3232 = vadd.f32 %v2986, %v3179
      %v3233 = vadd.f32 %v2987, %v3182
      %v3234 = vadd.f32 %v2988, %v3185
      %v3235 = vadd.f32 %v2989, %v3188
      %v3236 = vadd.f32 %v2990, %v3191
      %v3237 = vadd.f32 %v2991, %v3194
      %v3238 = vadd.f32 %v2992, %v3197
      %v3239 = vadd.f32 %v2993, %v3200
      %v3240 = vadd.f32 %v2994, %v3203
      %v3241 = vadd.f32 %v2995, %v3206
      %v3242 = vadd.f32 %v2996, %v3209
      %3243 = vst [vmem:[#allocation3] sm:$0xff] %v3211
      %3244 = vst [vmem:[#allocation3 + $0x8] sm:$0xff] %v3212
      %3245 = vst [vmem:[#allocation3 + $0x10] sm:$0xff] %v3213
      %3246 = vst [vmem:[#allocation3 + $0x18] sm:$0xff] %v3214
      %3247 = vst [vmem:[#allocation3 + $0x20] sm:$0xff] %v3215
      %3248 = vst [vmem:[#allocation3 + $0x28] sm:$0xff] %v3216
      %3249 = vst [vmem:[#allocation3 + $0x30] sm:$0xff] %v3217
      %3250 = vst [vmem:[#allocation3 + $0x38] sm:$0xff] %v3218
      %3251 = vst [vmem:[#allocation3 + $0x40] sm:$0xff] %v3219
      %3252 = vst [vmem:[#allocation3 + $0x48] sm:$0xff] %v3220
      %3253 = vst [vmem:[#allocation3 + $0x50] sm:$0xff] %v3221
      %3254 = vst [vmem:[#allocation3 + $0x58] sm:$0xff] %v3222
      %3255 = vst [vmem:[#allocation3 + $0x60] sm:$0xff] %v3223
      %3256 = vst [vmem:[#allocation3 + $0x68] sm:$0xff] %v3224
      %3257 = vst [vmem:[#allocation3 + $0x70] sm:$0xff] %v3225
      %3258 = vst [vmem:[#allocation3 + $0x78] sm:$0xff] %v3226
      %3259 = vst [vmem:[#allocation3 + $0x80] sm:$0xff] %v3227
      %3260 = vst [vmem:[#allocation3 + $0x88] sm:$0xff] %v3228
      %3261 = vst [vmem:[#allocation3 + $0x90] sm:$0xff] %v3229
      %3262 = vst [vmem:[#allocation3 + $0x98] sm:$0xff] %v3230
      %3263 = vst [vmem:[#allocation3 + $0xa0] sm:$0xff] %v3231
      %3264 = vst [vmem:[#allocation3 + $0xa8] sm:$0xff] %v3232
      %3265 = vst [vmem:[#allocation3 + $0xb0] sm:$0xff] %v3233
      %3266 = vst [vmem:[#allocation3 + $0xb8] sm:$0xff] %v3234
      %3267 = vst [vmem:[#allocation3 + $0xc0] sm:$0xff] %v3235
      %3268 = vst [vmem:[#allocation3 + $0xc8] sm:$0xff] %v3236
      %3269 = vst [vmem:[#allocation3 + $0xd0] sm:$0xff] %v3237
      %3270 = vst [vmem:[#allocation3 + $0xd8] sm:$0xff] %v3238
      %3271 = vst [vmem:[#allocation3 + $0xe0] sm:$0xff] %v3239
      %3272 = vst [vmem:[#allocation3 + $0xe8] sm:$0xff] %v3240
      %3273 = vst [vmem:[#allocation3 + $0xf0] sm:$0xff] %v3241
      %3274 = vst [vmem:[#allocation3 + $0xf8] sm:$0xff] %v3242
      %v3275 = vld [vmem:[%s2590 + $0x2] sm:$0xff]
      %v3276 = vld [vmem:[%s2590 + $0xa] sm:$0xff]
      %v3277 = vld [vmem:[%s2590 + $0x1a] sm:$0xff]
      %v3278 = vld [vmem:[%s2590 + $0x22] sm:$0xff]
      %v3279 = vld [vmem:[%s2590 + $0x32] sm:$0xff]
      %v3280 = vld [vmem:[%s2590 + $0x3a] sm:$0xff]
      %v3281 = vld [vmem:[%s2590 + $0x4a] sm:$0xff]
      %v3282 = vld [vmem:[%s2590 + $0x52] sm:$0xff]
      %v3283 = vld [vmem:[%s2590 + $0x62] sm:$0xff]
      %v3284 = vld [vmem:[%s2590 + $0x6a] sm:$0xff]
      %v3285 = vld [vmem:[%s2590 + $0x7a] sm:$0xff]
      %v3286 = vld [vmem:[%s2590 + $0x82] sm:$0xff]
      %v3287 = vld [vmem:[%s2590 + $0x92] sm:$0xff]
      %v3288 = vld [vmem:[%s2590 + $0x9a] sm:$0xff]
      %v3289 = vld [vmem:[%s2590 + $0xaa] sm:$0xff]
      %v3290 = vld [vmem:[%s2590 + $0xb2] sm:$0xff]
      %v3291 = vld [vmem:[%s2590 + $0xc2] sm:$0xff]
      %v3292 = vld [vmem:[%s2590 + $0xca] sm:$0xff]
      %v3293 = vld [vmem:[%s2590 + $0xda] sm:$0xff]
      %v3294 = vld [vmem:[%s2590 + $0xe2] sm:$0xff]
      %v3295 = vld [vmem:[%s2590 + $0xf2] sm:$0xff]
      %v3296 = vld [vmem:[%s2590 + $0xfa] sm:$0xff]
      %v3297 = vld [vmem:[%s2590 + $0x10a] sm:$0xff]
      %v3298 = vld [vmem:[%s2590 + $0x112] sm:$0xff]
      %v3299 = vld [vmem:[%s2590 + $0x122] sm:$0xff]
      %v3300 = vld [vmem:[%s2590 + $0x12a] sm:$0xff]
      %v3301 = vld [vmem:[%s2590 + $0x13a] sm:$0xff]
      %v3302 = vld [vmem:[%s2590 + $0x142] sm:$0xff]
      %v3303 = vld [vmem:[%s2590 + $0x152] sm:$0xff]
      %v3304 = vld [vmem:[%s2590 + $0x15a] sm:$0xff]
      %v3305 = vld [vmem:[%s2590 + $0x16a] sm:$0xff]
      %v3306 = vld [vmem:[%s2590 + $0x172] sm:$0xff]
      %v3307 = vld [vmem:[#allocation3] sm:$0xff]
      %v3308 = vld [vmem:[#allocation3 + $0x8] sm:$0xff]
      %v3309 = vld [vmem:[#allocation3 + $0x10] sm:$0xff]
      %v3310 = vld [vmem:[#allocation3 + $0x18] sm:$0xff]
      %v3311 = vld [vmem:[#allocation3 + $0x20] sm:$0xff]
      %v3312 = vld [vmem:[#allocation3 + $0x28] sm:$0xff]
      %v3313 = vld [vmem:[#allocation3 + $0x30] sm:$0xff]
      %v3314 = vld [vmem:[#allocation3 + $0x38] sm:$0xff]
      %v3315 = vld [vmem:[#allocation3 + $0x40] sm:$0xff]
      %v3316 = vld [vmem:[#allocation3 + $0x48] sm:$0xff]
      %v3317 = vld [vmem:[#allocation3 + $0x50] sm:$0xff]
      %v3318 = vld [vmem:[#allocation3 + $0x58] sm:$0xff]
      %v3319 = vld [vmem:[#allocation3 + $0x60] sm:$0xff]
      %v3320 = vld [vmem:[#allocation3 + $0x68] sm:$0xff]
      %v3321 = vld [vmem:[#allocation3 + $0x70] sm:$0xff]
      %v3322 = vld [vmem:[#allocation3 + $0x78] sm:$0xff]
      %v3323 = vld [vmem:[#allocation3 + $0x80] sm:$0xff]
      %v3324 = vld [vmem:[#allocation3 + $0x88] sm:$0xff]
      %v3325 = vld [vmem:[#allocation3 + $0x90] sm:$0xff]
      %v3326 = vld [vmem:[#allocation3 + $0x98] sm:$0xff]
      %v3327 = vld [vmem:[#allocation3 + $0xa0] sm:$0xff]
      %v3328 = vld [vmem:[#allocation3 + $0xa8] sm:$0xff]
      %v3329 = vld [vmem:[#allocation3 + $0xb0] sm:$0xff]
      %v3330 = vld [vmem:[#allocation3 + $0xb8] sm:$0xff]
      %v3331 = vld [vmem:[#allocation3 + $0xc0] sm:$0xff]
      %v3332 = vld [vmem:[#allocation3 + $0xc8] sm:$0xff]
      %v3333 = vld [vmem:[#allocation3 + $0xd0] sm:$0xff]
      %v3334 = vld [vmem:[#allocation3 + $0xd8] sm:$0xff]
      %v3335 = vld [vmem:[#allocation3 + $0xe0] sm:$0xff]
      %v3336 = vld [vmem:[#allocation3 + $0xe8] sm:$0xff]
      %v3337 = vld [vmem:[#allocation3 + $0xf0] sm:$0xff]
      %v3338 = vld [vmem:[#allocation3 + $0xf8] sm:$0xff]
      %s3339 = scalar_lea.vmem %s2, 32
      %v3340 = vld [vmem:[%s3339] sm:$0xf]
      %v3342 = vsel %vm445, %v3275, 0
      %v3345 = vsel %vm445, %v3276, 0
      %v3348 = vsel %vm445, %v3277, 0
      %v3351 = vsel %vm445, %v3278, 0
      %v3354 = vsel %vm445, %v3279, 0
      %v3357 = vsel %vm445, %v3280, 0
      %v3360 = vsel %vm445, %v3281, 0
      %v3363 = vsel %vm445, %v3282, 0
      %v3366 = vsel %vm445, %v3283, 0
      %v3369 = vsel %vm445, %v3284, 0
      %v3372 = vsel %vm445, %v3285, 0
      %v3375 = vsel %vm445, %v3286, 0
      %v3378 = vsel %vm445, %v3287, 0
      %v3381 = vsel %vm445, %v3288, 0
      %v3384 = vsel %vm445, %v3289, 0
      %v3387 = vsel %vm445, %v3290, 0
      %v3390 = vsel %vm445, %v3291, 0
      %v3393 = vsel %vm445, %v3292, 0
      %v3396 = vsel %vm445, %v3293, 0
      %v3399 = vsel %vm445, %v3294, 0
      %v3402 = vsel %vm445, %v3295, 0
      %v3405 = vsel %vm445, %v3296, 0
      %v3408 = vsel %vm445, %v3297, 0
      %v3411 = vsel %vm445, %v3298, 0
      %v3414 = vsel %vm445, %v3299, 0
      %v3417 = vsel %vm445, %v3300, 0
      %v3420 = vsel %vm445, %v3301, 0
      %v3423 = vsel %vm445, %v3302, 0
      %v3426 = vsel %vm445, %v3303, 0
      %v3429 = vsel %vm445, %v3304, 0
      %v3432 = vsel %vm445, %v3305, 0
      %v3435 = vsel %vm445, %v3306, 0
      %v3438 = vsel %vm698, %v3340, 0
      %3440 = vmatpush.msra.mxu0 0.0
      %3441 = vmatpush.msra.mxu0 0.0
      %3442 = vmatpush.msra.mxu0 0.0
      %3443 = vmatpush.msra.mxu0 0.0
      %3444 = vmatpush.msra.mxu0 0.0
      %3445 = vmatpush.msra.mxu0 0.0
      %3446 = vmatpush.msra.mxu0 0.0
      %3447 = vmatpush.msra.mxu0 0.0
      %3448 = vmatpush.msra.mxu0 0.0
      %3449 = vmatpush.msra.mxu0 0.0
      %3450 = vmatpush.msra.mxu0 0.0
      %3451 = vmatpush.msra.mxu0 0.0
      %3452 = vmatpush.msra.mxu0 0.0
      %3453 = vmatpush.msra.mxu0 0.0
      %3454 = vmatpush.msra.mxu0 0.0
      %3455 = vmatpush.msra.mxu0 %v3438
      %3456 = vmatmul.f32.gmra.mxu0 %v3342
      %v3457 = vpop.f32.mrf.mxu0
      %v3458 = vadd.f32 0.0, %v3457
      %3459 = vmatmul.f32.gmra.mxu0 %v3345
      %v3460 = vpop.f32.mrf.mxu0
      %v3461 = vadd.f32 0.0, %v3460
      %3462 = vmatmul.f32.gmra.mxu0 %v3348
      %v3463 = vpop.f32.mrf.mxu0
      %v3464 = vadd.f32 0.0, %v3463
      %3465 = vmatmul.f32.gmra.mxu0 %v3351
      %v3466 = vpop.f32.mrf.mxu0
      %v3467 = vadd.f32 0.0, %v3466
      %3468 = vmatmul.f32.gmra.mxu0 %v3354
      %v3469 = vpop.f32.mrf.mxu0
      %v3470 = vadd.f32 0.0, %v3469
      %3471 = vmatmul.f32.gmra.mxu0 %v3357
      %v3472 = vpop.f32.mrf.mxu0
      %v3473 = vadd.f32 0.0, %v3472
      %3474 = vmatmul.f32.gmra.mxu0 %v3360
      %v3475 = vpop.f32.mrf.mxu0
      %v3476 = vadd.f32 0.0, %v3475
      %3477 = vmatmul.f32.gmra.mxu0 %v3363
      %v3478 = vpop.f32.mrf.mxu0
      %v3479 = vadd.f32 0.0, %v3478
      %3480 = vmatmul.f32.gmra.mxu0 %v3366
      %v3481 = vpop.f32.mrf.mxu0
      %v3482 = vadd.f32 0.0, %v3481
      %3483 = vmatmul.f32.gmra.mxu0 %v3369
      %v3484 = vpop.f32.mrf.mxu0
      %v3485 = vadd.f32 0.0, %v3484
      %3486 = vmatmul.f32.gmra.mxu0 %v3372
      %v3487 = vpop.f32.mrf.mxu0
      %v3488 = vadd.f32 0.0, %v3487
      %3489 = vmatmul.f32.gmra.mxu0 %v3375
      %v3490 = vpop.f32.mrf.mxu0
      %v3491 = vadd.f32 0.0, %v3490
      %3492 = vmatmul.f32.gmra.mxu0 %v3378
      %v3493 = vpop.f32.mrf.mxu0
      %v3494 = vadd.f32 0.0, %v3493
      %3495 = vmatmul.f32.gmra.mxu0 %v3381
      %v3496 = vpop.f32.mrf.mxu0
      %v3497 = vadd.f32 0.0, %v3496
      %3498 = vmatmul.f32.gmra.mxu0 %v3384
      %v3499 = vpop.f32.mrf.mxu0
      %v3500 = vadd.f32 0.0, %v3499
      %3501 = vmatmul.f32.gmra.mxu0 %v3387
      %v3502 = vpop.f32.mrf.mxu0
      %v3503 = vadd.f32 0.0, %v3502
      %3504 = vmatmul.f32.gmra.mxu0 %v3390
      %v3505 = vpop.f32.mrf.mxu0
      %v3506 = vadd.f32 0.0, %v3505
      %3507 = vmatmul.f32.gmra.mxu0 %v3393
      %v3508 = vpop.f32.mrf.mxu0
      %v3509 = vadd.f32 0.0, %v3508
      %3510 = vmatmul.f32.gmra.mxu0 %v3396
      %v3511 = vpop.f32.mrf.mxu0
      %v3512 = vadd.f32 0.0, %v3511
      %3513 = vmatmul.f32.gmra.mxu0 %v3399
      %v3514 = vpop.f32.mrf.mxu0
      %v3515 = vadd.f32 0.0, %v3514
      %3516 = vmatmul.f32.gmra.mxu0 %v3402
      %v3517 = vpop.f32.mrf.mxu0
      %v3518 = vadd.f32 0.0, %v3517
      %3519 = vmatmul.f32.gmra.mxu0 %v3405
      %v3520 = vpop.f32.mrf.mxu0
      %v3521 = vadd.f32 0.0, %v3520
      %3522 = vmatmul.f32.gmra.mxu0 %v3408
      %v3523 = vpop.f32.mrf.mxu0
      %v3524 = vadd.f32 0.0, %v3523
      %3525 = vmatmul.f32.gmra.mxu0 %v3411
      %v3526 = vpop.f32.mrf.mxu0
      %v3527 = vadd.f32 0.0, %v3526
      %3528 = vmatmul.f32.gmra.mxu0 %v3414
      %v3529 = vpop.f32.mrf.mxu0
      %v3530 = vadd.f32 0.0, %v3529
      %3531 = vmatmul.f32.gmra.mxu0 %v3417
      %v3532 = vpop.f32.mrf.mxu0
      %v3533 = vadd.f32 0.0, %v3532
      %3534 = vmatmul.f32.gmra.mxu0 %v3420
      %v3535 = vpop.f32.mrf.mxu0
      %v3536 = vadd.f32 0.0, %v3535
      %3537 = vmatmul.f32.gmra.mxu0 %v3423
      %v3538 = vpop.f32.mrf.mxu0
      %v3539 = vadd.f32 0.0, %v3538
      %3540 = vmatmul.f32.gmra.mxu0 %v3426
      %v3541 = vpop.f32.mrf.mxu0
      %v3542 = vadd.f32 0.0, %v3541
      %3543 = vmatmul.f32.gmra.mxu0 %v3429
      %v3544 = vpop.f32.mrf.mxu0
      %v3545 = vadd.f32 0.0, %v3544
      %3546 = vmatmul.f32.gmra.mxu0 %v3432
      %v3547 = vpop.f32.mrf.mxu0
      %v3548 = vadd.f32 0.0, %v3547
      %3549 = vmatmul.f32.gmra.mxu0 %v3435
      %v3550 = vpop.f32.mrf.mxu0
      %v3551 = vadd.f32 0.0, %v3550
      %3552 = vdwg.mxu0
      %v3553 = vadd.f32 %v3307, %v3458
      %v3554 = vadd.f32 %v3308, %v3461
      %v3555 = vadd.f32 %v3309, %v3464
      %v3556 = vadd.f32 %v3310, %v3467
      %v3557 = vadd.f32 %v3311, %v3470
      %v3558 = vadd.f32 %v3312, %v3473
      %v3559 = vadd.f32 %v3313, %v3476
      %v3560 = vadd.f32 %v3314, %v3479
      %v3561 = vadd.f32 %v3315, %v3482
      %v3562 = vadd.f32 %v3316, %v3485
      %v3563 = vadd.f32 %v3317, %v3488
      %v3564 = vadd.f32 %v3318, %v3491
      %v3565 = vadd.f32 %v3319, %v3494
      %v3566 = vadd.f32 %v3320, %v3497
      %v3567 = vadd.f32 %v3321, %v3500
      %v3568 = vadd.f32 %v3322, %v3503
      %v3569 = vadd.f32 %v3323, %v3506
      %v3570 = vadd.f32 %v3324, %v3509
      %v3571 = vadd.f32 %v3325, %v3512
      %v3572 = vadd.f32 %v3326, %v3515
      %v3573 = vadd.f32 %v3327, %v3518
      %v3574 = vadd.f32 %v3328, %v3521
      %v3575 = vadd.f32 %v3329, %v3524
      %v3576 = vadd.f32 %v3330, %v3527
      %v3577 = vadd.f32 %v3331, %v3530
      %v3578 = vadd.f32 %v3332, %v3533
      %v3579 = vadd.f32 %v3333, %v3536
      %v3580 = vadd.f32 %v3334, %v3539
      %v3581 = vadd.f32 %v3335, %v3542
      %v3582 = vadd.f32 %v3336, %v3545
      %v3583 = vadd.f32 %v3337, %v3548
      %v3584 = vadd.f32 %v3338, %v3551
      %3585 = vst [vmem:[#allocation3] sm:$0xff] %v3553
      %3586 = vst [vmem:[#allocation3 + $0x8] sm:$0xff] %v3554
      %3587 = vst [vmem:[#allocation3 + $0x10] sm:$0xff] %v3555
      %3588 = vst [vmem:[#allocation3 + $0x18] sm:$0xff] %v3556
      %3589 = vst [vmem:[#allocation3 + $0x20] sm:$0xff] %v3557
      %3590 = vst [vmem:[#allocation3 + $0x28] sm:$0xff] %v3558
      %3591 = vst [vmem:[#allocation3 + $0x30] sm:$0xff] %v3559
      %3592 = vst [vmem:[#allocation3 + $0x38] sm:$0xff] %v3560
      %3593 = vst [vmem:[#allocation3 + $0x40] sm:$0xff] %v3561
      %3594 = vst [vmem:[#allocation3 + $0x48] sm:$0xff] %v3562
      %3595 = vst [vmem:[#allocation3 + $0x50] sm:$0xff] %v3563
      %3596 = vst [vmem:[#allocation3 + $0x58] sm:$0xff] %v3564
      %3597 = vst [vmem:[#allocation3 + $0x60] sm:$0xff] %v3565
      %3598 = vst [vmem:[#allocation3 + $0x68] sm:$0xff] %v3566
      %3599 = vst [vmem:[#allocation3 + $0x70] sm:$0xff] %v3567
      %3600 = vst [vmem:[#allocation3 + $0x78] sm:$0xff] %v3568
      %3601 = vst [vmem:[#allocation3 + $0x80] sm:$0xff] %v3569
      %3602 = vst [vmem:[#allocation3 + $0x88] sm:$0xff] %v3570
      %3603 = vst [vmem:[#allocation3 + $0x90] sm:$0xff] %v3571
      %3604 = vst [vmem:[#allocation3 + $0x98] sm:$0xff] %v3572
      %3605 = vst [vmem:[#allocation3 + $0xa0] sm:$0xff] %v3573
      %3606 = vst [vmem:[#allocation3 + $0xa8] sm:$0xff] %v3574
      %3607 = vst [vmem:[#allocation3 + $0xb0] sm:$0xff] %v3575
      %3608 = vst [vmem:[#allocation3 + $0xb8] sm:$0xff] %v3576
      %3609 = vst [vmem:[#allocation3 + $0xc0] sm:$0xff] %v3577
      %3610 = vst [vmem:[#allocation3 + $0xc8] sm:$0xff] %v3578
      %3611 = vst [vmem:[#allocation3 + $0xd0] sm:$0xff] %v3579
      %3612 = vst [vmem:[#allocation3 + $0xd8] sm:$0xff] %v3580
      %3613 = vst [vmem:[#allocation3 + $0xe0] sm:$0xff] %v3581
      %3614 = vst [vmem:[#allocation3 + $0xe8] sm:$0xff] %v3582
      %3615 = vst [vmem:[#allocation3 + $0xf0] sm:$0xff] %v3583
      %3616 = vst [vmem:[#allocation3 + $0xf8] sm:$0xff] %v3584
      %v3617 = vld [vmem:[#allocation3] sm:$0xff]
      %v3618 = vld [vmem:[#allocation3 + $0x8] sm:$0xff]
      %v3619 = vld [vmem:[#allocation3 + $0x10] sm:$0xff]
      %v3620 = vld [vmem:[#allocation3 + $0x18] sm:$0xff]
      %v3621 = vld [vmem:[#allocation3 + $0x20] sm:$0xff]
      %v3622 = vld [vmem:[#allocation3 + $0x28] sm:$0xff]
      %v3623 = vld [vmem:[#allocation3 + $0x30] sm:$0xff]
      %v3624 = vld [vmem:[#allocation3 + $0x38] sm:$0xff]
      %v3625 = vld [vmem:[#allocation3 + $0x40] sm:$0xff]
      %v3626 = vld [vmem:[#allocation3 + $0x48] sm:$0xff]
      %v3627 = vld [vmem:[#allocation3 + $0x50] sm:$0xff]
      %v3628 = vld [vmem:[#allocation3 + $0x58] sm:$0xff]
      %v3629 = vld [vmem:[#allocation3 + $0x60] sm:$0xff]
      %v3630 = vld [vmem:[#allocation3 + $0x68] sm:$0xff]
      %v3631 = vld [vmem:[#allocation3 + $0x70] sm:$0xff]
      %v3632 = vld [vmem:[#allocation3 + $0x78] sm:$0xff]
      %v3633 = vld [vmem:[#allocation3 + $0x80] sm:$0xff]
      %v3634 = vld [vmem:[#allocation3 + $0x88] sm:$0xff]
      %v3635 = vld [vmem:[#allocation3 + $0x90] sm:$0xff]
      %v3636 = vld [vmem:[#allocation3 + $0x98] sm:$0xff]
      %v3637 = vld [vmem:[#allocation3 + $0xa0] sm:$0xff]
      %v3638 = vld [vmem:[#allocation3 + $0xa8] sm:$0xff]
      %v3639 = vld [vmem:[#allocation3 + $0xb0] sm:$0xff]
      %v3640 = vld [vmem:[#allocation3 + $0xb8] sm:$0xff]
      %v3641 = vld [vmem:[#allocation3 + $0xc0] sm:$0xff]
      %v3642 = vld [vmem:[#allocation3 + $0xc8] sm:$0xff]
      %v3643 = vld [vmem:[#allocation3 + $0xd0] sm:$0xff]
      %v3644 = vld [vmem:[#allocation3 + $0xd8] sm:$0xff]
      %v3645 = vld [vmem:[#allocation3 + $0xe0] sm:$0xff]
      %v3646 = vld [vmem:[#allocation3 + $0xe8] sm:$0xff]
      %v3647 = vld [vmem:[#allocation3 + $0xf0] sm:$0xff]
      %v3648 = vld [vmem:[#allocation3 + $0xf8] sm:$0xff]
      %3649 = vst [vmem:[%s222] sm:$0xff] %v3617
      %3650 = vst [vmem:[%s222 + $0x8] sm:$0xff] %v3618
      %3651 = vst [vmem:[%s222 + $0x10] sm:$0xff] %v3619
      %3652 = vst [vmem:[%s222 + $0x18] sm:$0xff] %v3620
      %3653 = vst [vmem:[%s222 + $0x20] sm:$0xff] %v3621
      %3654 = vst [vmem:[%s222 + $0x28] sm:$0xff] %v3622
      %3655 = vst [vmem:[%s222 + $0x30] sm:$0xff] %v3623
      %3656 = vst [vmem:[%s222 + $0x38] sm:$0xff] %v3624
      %3657 = vst [vmem:[%s222 + $0x40] sm:$0xff] %v3625
      %3658 = vst [vmem:[%s222 + $0x48] sm:$0xff] %v3626
      %3659 = vst [vmem:[%s222 + $0x50] sm:$0xff] %v3627
      %3660 = vst [vmem:[%s222 + $0x58] sm:$0xff] %v3628
      %3661 = vst [vmem:[%s222 + $0x60] sm:$0xff] %v3629
      %3662 = vst [vmem:[%s222 + $0x68] sm:$0xff] %v3630
      %3663 = vst [vmem:[%s222 + $0x70] sm:$0xff] %v3631
      %3664 = vst [vmem:[%s222 + $0x78] sm:$0xff] %v3632
      %3665 = vst [vmem:[%s222 + $0x80] sm:$0xff] %v3633
      %3666 = vst [vmem:[%s222 + $0x88] sm:$0xff] %v3634
      %3667 = vst [vmem:[%s222 + $0x90] sm:$0xff] %v3635
      %3668 = vst [vmem:[%s222 + $0x98] sm:$0xff] %v3636
      %3669 = vst [vmem:[%s222 + $0xa0] sm:$0xff] %v3637
      %3670 = vst [vmem:[%s222 + $0xa8] sm:$0xff] %v3638
      %3671 = vst [vmem:[%s222 + $0xb0] sm:$0xff] %v3639
      %3672 = vst [vmem:[%s222 + $0xb8] sm:$0xff] %v3640
      %3673 = vst [vmem:[%s222 + $0xc0] sm:$0xff] %v3641
      %3674 = vst [vmem:[%s222 + $0xc8] sm:$0xff] %v3642
      %3675 = vst [vmem:[%s222 + $0xd0] sm:$0xff] %v3643
      %3676 = vst [vmem:[%s222 + $0xd8] sm:$0xff] %v3644
      %3677 = vst [vmem:[%s222 + $0xe0] sm:$0xff] %v3645
      %3678 = vst [vmem:[%s222 + $0xe8] sm:$0xff] %v3646
      %3679 = vst [vmem:[%s222 + $0xf0] sm:$0xff] %v3647
      %3680 = vst [vmem:[%s222 + $0xf8] sm:$0xff] %v3648
      %s3681 = smul.u32 16, %s21
      %p3682 = scmp.lt.s32.totalorder %s20, 1
      %s3683 = scalar_select %p3682, %s20, 1
      %p3684 = scmp.lt.s32.totalorder %s3681, 15
      %s3685 = scalar_select %p3684, %s3681, 15
      %s3686 = smul.addr %s3685, 2
      %s3687 = smul.addr %s3683, 32
      %s3688 = sadd.s32 %s3686, %s3687
      %s3689 = smul.addr %s3688, 8
      %s3690 = scalar_lea.vmem %s4, %s3689
      // Predicated region
      $region37: #{basic_conv2d.1} parent=35 // pred_check
        %p3691 = pneg %p137
      $region38: #{basic_conv2d.1} parent=35 // pred_check_branch
        %3693 = sbr.rel (%p3691) target = $region40
      $region39: #{basic_conv2d.1} parent=35 // pred_region
        %s3694 = smul.u32 16, %s21
      $region40: #{basic_conv2d.1} parent=35 // pred_fallthru
        _
    $region36: #{basic_conv2d.1} parent=5 // pred_fallthru
      _
    %p3695 = scmp.le.s32.totalorder 2, %s11
    // Predicated region
    $region41: #{basic_conv2d.1} parent=5 // pred_check
      %p3696 = pneg %p3695
    $region42: #{basic_conv2d.1} parent=5 // pred_check_branch
      %3698 = sbr.rel (%p3696) target = $region44
    $region43: #{basic_conv2d.1} parent=5 // pred_region
      %s3699 = ssub.s32 %s11, 2
      // Predicated region
      $region45: #{basic_conv2d.1} parent=43 // pred_check
        %p3700 = pneg %p143
      $region46: #{basic_conv2d.1} parent=43 // pred_check_branch
        %3702 = sbr.rel (%p3700) target = $region48
      $region47: #{basic_conv2d.1} parent=43 // pred_region
        %s3703 = smul.u32 16, %s23
        %p3704 = scmp.lt.s32.totalorder %s22, 1
        %s3705 = scalar_select %p3704, %s22, 1
        %p3706 = scmp.lt.s32.totalorder %s3703, 15
        %s3707 = scalar_select %p3706, %s3703, 15
        %s3708 = smul.addr %s3707, 2
        %s3709 = smul.addr %s3705, 32
        %s3710 = sadd.s32 %s3708, %s3709
        %s3711 = smul.addr %s3710, 8
        %s3712 = scalar_lea.vmem %s4, %s3711
      $region48: #{basic_conv2d.1} parent=43 // pred_fallthru
        _
    $region44: #{basic_conv2d.1} parent=5 // pred_fallthru
      _
  $region6: #{basic_conv2d.1} parent=0 // loop_footer
    %s15 = sadd.s32 1, %s11
  $region7: #{basic_conv2d.1} parent=0 // loop_footer_branch
    %10 = sbr.rel target = $region3
  $region8: #{basic_conv2d.1} parent=0 // loop_exit
    _

</llo_original>
